<compile_context>
chip_gen: v5e
topology: v5e:2x2
jax: 0.10.0
libtpu: 0.0.40
codegen_flags: <defaults>
</compile_context>

<pallas_src>
import math

import jax
import jax.numpy as jnp
from jax.experimental import pallas as pl
from jax.experimental.pallas import tpu as pltpu


# Packed parameter column layout (K = 43 columns, per channel):
#   layer 0 (1->3):  w 0..2,  b 3..5,  f 6..8
#   layer 1 (3->3):  w 9..17 (j*3+k), b 18..20, f 21..23
#   layer 2 (3->3):  w 24..32,        b 33..35, f 36..38
#   layer 3 (3->1):  w 39..41,        b 42
_K = 43


def _make_kernel(half_q: float):
    inv_ln2 = 1.0 / math.log(2.0)

    def kernel(x_ref, p_ref, bits_ref):
        # Load each (C, 1) parameter column exactly once; reused by both
        # cascades (lower and upper) via Python closure.
        cols = [p_ref[:, j:j + 1] for j in range(_K)]

        def cascade(v):                                  # v: (C, T)
            # layer 0: 1 -> 3
            h = []
            for j in range(3):
                t = cols[j] * v + cols[3 + j]
                h.append(t + cols[6 + j] * jnp.tanh(t))
            # layers 1, 2: 3 -> 3
            base = 9
            for _layer in range(2):
                w0, b0, f0 = base, base + 9, base + 12
                nh = []
                for j in range(3):
                    acc = cols[w0 + 3 * j] * h[0]
                    acc = acc + cols[w0 + 3 * j + 1] * h[1]
                    acc = acc + cols[w0 + 3 * j + 2] * h[2]
                    acc = acc + cols[b0 + j]
                    nh.append(acc + cols[f0 + j] * jnp.tanh(acc))
                h = nh
                base += 15
            # layer 3: 3 -> 1
            return (cols[base] * h[0] + cols[base + 1] * h[1]
                    + cols[base + 2] * h[2] + cols[base + 3])

        x = x_ref[...]                                   # (C, T) lane-dense
        lower = cascade(x - half_q)
        upper = cascade(x + half_q)

        ssum = lower + upper
        sign = jnp.where(ssum > 0.0, -1.0, jnp.where(ssum < 0.0, 1.0, 0.0))

        def sig(z):                                      # sigmoid via tanh (EUP)
            return 0.5 * (jnp.tanh(0.5 * z) + 1.0)

        lik = jnp.abs(sig(sign * upper) - sig(sign * lower))
        lik = jnp.maximum(lik, 1e-6)                     # LowerBound(1e-6) fwd
        bits_ref[...] = -(jnp.log(lik) * inv_ln2)        # -log2(lik)

    return kernel


def pack_params(matrices, biases, factors):
    """Fold softplus/tanh of the tiny per-channel weights into one (C, 43) block."""
    C = matrices[0].shape[0]
    cols = [
        jax.nn.softplus(matrices[0])[:, :, 0],           # 0..2
        biases[0][:, :, 0],                              # 3..5
        jnp.tanh(factors[0])[:, :, 0],                   # 6..8
        jax.nn.softplus(matrices[1]).reshape(C, 9),      # 9..17  (j*3+k)
        biases[1][:, :, 0],                              # 18..20
        jnp.tanh(factors[1])[:, :, 0],                   # 21..23
        jax.nn.softplus(matrices[2]).reshape(C, 9),      # 24..32
        biases[2][:, :, 0],                              # 33..35
        jnp.tanh(factors[2])[:, :, 0],                   # 36..38
        jax.nn.softplus(matrices[3])[:, 0, :],           # 39..41
        biases[3][:, :, 0],                              # 42
    ]
    packed = jnp.concatenate(cols, axis=1).astype(jnp.float32)
    assert packed.shape == (C, _K)
    return packed


def entropy_factorized_forward(x, matrices, biases, factors, Q=1.0, *, tile_n=1024):
    """x: (N, C) float32 -> bits: (N, C) float32."""
    N, C = x.shape
    packed = pack_params(matrices, biases, factors)      # (C, 43)

    # Channel-major, lane-dense layout: N on the 128-lane axis.
    xt = x.T.astype(jnp.float32)                         # (C, N)
    n_pad128 = pl.cdiv(N, 128) * 128
    tile = max(128, (min(int(tile_n), n_pad128) // 128) * 128)
    n_pad = pl.cdiv(N, tile) * tile
    if n_pad != N:
        xt = jnp.pad(xt, ((0, 0), (0, n_pad - N)))
    grid = (n_pad // tile,)

    kernel = _make_kernel(0.5 * float(Q))
    cost = pl.CostEstimate(
        flops=110 * n_pad * C,
        transcendentals=9 * n_pad * C,
        bytes_accessed=4 * (2 * n_pad * C + C * _K),
    )

    out_t = pl.pallas_call(
        kernel,
        out_shape=jax.ShapeDtypeStruct((C, n_pad), jnp.float32),
        grid_spec=pltpu.PrefetchScalarGridSpec(
            num_scalar_prefetch=0,
            grid=grid,
            in_specs=[
                pl.BlockSpec((C, tile), lambda i: (0, i)),   # x (lane-dense tile)
                pl.BlockSpec((C, _K), lambda i: (0, 0)),     # packed params (resident)
            ],
            out_specs=pl.BlockSpec((C, tile), lambda i: (0, i)),
        ),
        compiler_params=pltpu.CompilerParams(
            dimension_semantics=("parallel",)),
        cost_estimate=cost,
    )(xt, packed)

    return out_t[:, :N].T                                # back to (N, C)


def init_params(channel=32, init_scale=10.0, filters=(3, 3, 3), key=None):
    """Module-faithful init (+ small noise so the factor/tanh paths are exercised)."""
    if key is None:
        key = jax.random.PRNGKey(42)
    fl = (1,) + tuple(filters) + (1,)
    scale = init_scale ** (1.0 / (len(filters) + 1))
    matrices, biases, factors = [], [], []
    keys = jax.random.split(key, 3 * (len(filters) + 1))
    for i in range(len(filters) + 1):
        init = math.log(math.expm1(1.0 / scale / fl[i + 1]))
        km, kb, kf = keys[3 * i], keys[3 * i + 1], keys[3 * i + 2]
        m = jnp.full((channel, fl[i + 1], fl[i]), init, jnp.float32)
        m = m + 0.05 * jax.random.normal(km, m.shape, jnp.float32)
        matrices.append(m)
        biases.append(jax.random.uniform(kb, (channel, fl[i + 1], 1),
                                         jnp.float32, -0.5, 0.5))
        if i < len(filters):
            factors.append(0.1 * jax.random.normal(kf, (channel, fl[i + 1], 1),
                                                   jnp.float32))
    return matrices, biases, factors


def _reference(x, matrices, biases, factors, Q=1.0):
    """Pure-JAX reference of the factorized entropy model forward."""
    half_q = 0.5 * float(Q)
    xt = x.T[:, None, :]                                 # (C, 1, N)

    def cascade(l):
        for i in range(len(matrices)):
            m = jax.nn.softplus(matrices[i])             # (C, f_out, f_in)
            l = jnp.matmul(m, l) + biases[i]
            if i < len(factors):
                l = l + jnp.tanh(factors[i]) * jnp.tanh(l)
        return l

    lower = cascade(xt - half_q)
    upper = cascade(xt + half_q)
    ssum = lower + upper
    sign = jnp.where(ssum > 0.0, -1.0, jnp.where(ssum < 0.0, 1.0, 0.0))
    sig = lambda z: 0.5 * (jnp.tanh(0.5 * z) + 1.0)
    lik = jnp.maximum(jnp.abs(sig(sign * upper) - sig(sign * lower)), 1e-6)
    bits = -(jnp.log(lik) / math.log(2.0))
    return bits[:, 0, :].T                               # (N, C)


if __name__ == "__main__":
    N, C = 512, 32                                       # small; module default channel=32
    key = jax.random.PRNGKey(0)
    kx, kp = jax.random.split(key)
    x = 4.0 * jax.random.normal(kx, (N, C), jnp.float32)  # latent-like values
    matrices, biases, factors = init_params(channel=C, key=kp)

    bits = entropy_factorized_forward(x, matrices, biases, factors, Q=1.0, tile_n=512)
    bits = jax.block_until_ready(bits)

    ref = _reference(x, matrices, biases, factors, Q=1.0)
    assert bits.shape == (N, C)
    err = float(jnp.max(jnp.abs(bits - ref)))
    assert jnp.allclose(bits, ref, atol=5e-4, rtol=5e-4), f"mismatch vs reference, max err {err}"
    print("KERNEL_OK")
</pallas_src>

<mosaic_0001>
module attributes {stable_mosaic.version = 11 : i64} {
  func.func @kernel(%arg0: i32, %arg1: memref<32x512xf32, #tpu.memory_space<vmem>>, %arg2: memref<32x43xf32, #tpu.memory_space<vmem>>, %arg3: memref<32x512xf32, #tpu.memory_space<vmem>>) attributes {dimension_semantics = [#tpu.dimension_semantics<parallel>], iteration_bounds = array<i64: 1>, scalar_prefetch = 0 : i64, scratch_operands = 0 : i64, tpu.core_type = #tpu.core_type<tc>, window_params = [{transform_indices = @transform_0, window_bounds = array<i64: 32, 512>}, {pipeline_mode = #tpu.pipeline_mode<synchronous>, transform_indices = @transform_1, window_bounds = array<i64: 32, 43>}, {transform_indices = @transform_2, window_bounds = array<i64: 32, 512>}]} {
    %c0 = arith.constant 0 : index
    %c0_0 = arith.constant 0 : index
    %0 = vector.load %arg2[%c0, %c0_0] : memref<32x43xf32, #tpu.memory_space<vmem>>, vector<32x1xf32>
    %c0_1 = arith.constant 0 : index
    %c1 = arith.constant 1 : index
    %1 = vector.load %arg2[%c0_1, %c1] : memref<32x43xf32, #tpu.memory_space<vmem>>, vector<32x1xf32>
    %c0_2 = arith.constant 0 : index
    %c2 = arith.constant 2 : index
    %2 = vector.load %arg2[%c0_2, %c2] : memref<32x43xf32, #tpu.memory_space<vmem>>, vector<32x1xf32>
    %c0_3 = arith.constant 0 : index
    %c3 = arith.constant 3 : index
    %3 = vector.load %arg2[%c0_3, %c3] : memref<32x43xf32, #tpu.memory_space<vmem>>, vector<32x1xf32>
    %c0_4 = arith.constant 0 : index
    %c4 = arith.constant 4 : index
    %4 = vector.load %arg2[%c0_4, %c4] : memref<32x43xf32, #tpu.memory_space<vmem>>, vector<32x1xf32>
    %c0_5 = arith.constant 0 : index
    %c5 = arith.constant 5 : index
    %5 = vector.load %arg2[%c0_5, %c5] : memref<32x43xf32, #tpu.memory_space<vmem>>, vector<32x1xf32>
    %c0_6 = arith.constant 0 : index
    %c6 = arith.constant 6 : index
    %6 = vector.load %arg2[%c0_6, %c6] : memref<32x43xf32, #tpu.memory_space<vmem>>, vector<32x1xf32>
    %c0_7 = arith.constant 0 : index
    %c7 = arith.constant 7 : index
    %7 = vector.load %arg2[%c0_7, %c7] : memref<32x43xf32, #tpu.memory_space<vmem>>, vector<32x1xf32>
    %c0_8 = arith.constant 0 : index
    %c8 = arith.constant 8 : index
    %8 = vector.load %arg2[%c0_8, %c8] : memref<32x43xf32, #tpu.memory_space<vmem>>, vector<32x1xf32>
    %c0_9 = arith.constant 0 : index
    %c9 = arith.constant 9 : index
    %9 = vector.load %arg2[%c0_9, %c9] : memref<32x43xf32, #tpu.memory_space<vmem>>, vector<32x1xf32>
    %c0_10 = arith.constant 0 : index
    %c10 = arith.constant 10 : index
    %10 = vector.load %arg2[%c0_10, %c10] : memref<32x43xf32, #tpu.memory_space<vmem>>, vector<32x1xf32>
    %c0_11 = arith.constant 0 : index
    %c11 = arith.constant 11 : index
    %11 = vector.load %arg2[%c0_11, %c11] : memref<32x43xf32, #tpu.memory_space<vmem>>, vector<32x1xf32>
    %c0_12 = arith.constant 0 : index
    %c12 = arith.constant 12 : index
    %12 = vector.load %arg2[%c0_12, %c12] : memref<32x43xf32, #tpu.memory_space<vmem>>, vector<32x1xf32>
    %c0_13 = arith.constant 0 : index
    %c13 = arith.constant 13 : index
    %13 = vector.load %arg2[%c0_13, %c13] : memref<32x43xf32, #tpu.memory_space<vmem>>, vector<32x1xf32>
    %c0_14 = arith.constant 0 : index
    %c14 = arith.constant 14 : index
    %14 = vector.load %arg2[%c0_14, %c14] : memref<32x43xf32, #tpu.memory_space<vmem>>, vector<32x1xf32>
    %c0_15 = arith.constant 0 : index
    %c15 = arith.constant 15 : index
    %15 = vector.load %arg2[%c0_15, %c15] : memref<32x43xf32, #tpu.memory_space<vmem>>, vector<32x1xf32>
    %c0_16 = arith.constant 0 : index
    %c16 = arith.constant 16 : index
    %16 = vector.load %arg2[%c0_16, %c16] : memref<32x43xf32, #tpu.memory_space<vmem>>, vector<32x1xf32>
    %c0_17 = arith.constant 0 : index
    %c17 = arith.constant 17 : index
    %17 = vector.load %arg2[%c0_17, %c17] : memref<32x43xf32, #tpu.memory_space<vmem>>, vector<32x1xf32>
    %c0_18 = arith.constant 0 : index
    %c18 = arith.constant 18 : index
    %18 = vector.load %arg2[%c0_18, %c18] : memref<32x43xf32, #tpu.memory_space<vmem>>, vector<32x1xf32>
    %c0_19 = arith.constant 0 : index
    %c19 = arith.constant 19 : index
    %19 = vector.load %arg2[%c0_19, %c19] : memref<32x43xf32, #tpu.memory_space<vmem>>, vector<32x1xf32>
    %c0_20 = arith.constant 0 : index
    %c20 = arith.constant 20 : index
    %20 = vector.load %arg2[%c0_20, %c20] : memref<32x43xf32, #tpu.memory_space<vmem>>, vector<32x1xf32>
    %c0_21 = arith.constant 0 : index
    %c21 = arith.constant 21 : index
    %21 = vector.load %arg2[%c0_21, %c21] : memref<32x43xf32, #tpu.memory_space<vmem>>, vector<32x1xf32>
    %c0_22 = arith.constant 0 : index
    %c22 = arith.constant 22 : index
    %22 = vector.load %arg2[%c0_22, %c22] : memref<32x43xf32, #tpu.memory_space<vmem>>, vector<32x1xf32>
    %c0_23 = arith.constant 0 : index
    %c23 = arith.constant 23 : index
    %23 = vector.load %arg2[%c0_23, %c23] : memref<32x43xf32, #tpu.memory_space<vmem>>, vector<32x1xf32>
    %c0_24 = arith.constant 0 : index
    %c24 = arith.constant 24 : index
    %24 = vector.load %arg2[%c0_24, %c24] : memref<32x43xf32, #tpu.memory_space<vmem>>, vector<32x1xf32>
    %c0_25 = arith.constant 0 : index
    %c25 = arith.constant 25 : index
    %25 = vector.load %arg2[%c0_25, %c25] : memref<32x43xf32, #tpu.memory_space<vmem>>, vector<32x1xf32>
    %c0_26 = arith.constant 0 : index
    %c26 = arith.constant 26 : index
    %26 = vector.load %arg2[%c0_26, %c26] : memref<32x43xf32, #tpu.memory_space<vmem>>, vector<32x1xf32>
    %c0_27 = arith.constant 0 : index
    %c27 = arith.constant 27 : index
    %27 = vector.load %arg2[%c0_27, %c27] : memref<32x43xf32, #tpu.memory_space<vmem>>, vector<32x1xf32>
    %c0_28 = arith.constant 0 : index
    %c28 = arith.constant 28 : index
    %28 = vector.load %arg2[%c0_28, %c28] : memref<32x43xf32, #tpu.memory_space<vmem>>, vector<32x1xf32>
    %c0_29 = arith.constant 0 : index
    %c29 = arith.constant 29 : index
    %29 = vector.load %arg2[%c0_29, %c29] : memref<32x43xf32, #tpu.memory_space<vmem>>, vector<32x1xf32>
    %c0_30 = arith.constant 0 : index
    %c30 = arith.constant 30 : index
    %30 = vector.load %arg2[%c0_30, %c30] : memref<32x43xf32, #tpu.memory_space<vmem>>, vector<32x1xf32>
    %c0_31 = arith.constant 0 : index
    %c31 = arith.constant 31 : index
    %31 = vector.load %arg2[%c0_31, %c31] : memref<32x43xf32, #tpu.memory_space<vmem>>, vector<32x1xf32>
    %c0_32 = arith.constant 0 : index
    %c32 = arith.constant 32 : index
    %32 = vector.load %arg2[%c0_32, %c32] : memref<32x43xf32, #tpu.memory_space<vmem>>, vector<32x1xf32>
    %c0_33 = arith.constant 0 : index
    %c33 = arith.constant 33 : index
    %33 = vector.load %arg2[%c0_33, %c33] : memref<32x43xf32, #tpu.memory_space<vmem>>, vector<32x1xf32>
    %c0_34 = arith.constant 0 : index
    %c34 = arith.constant 34 : index
    %34 = vector.load %arg2[%c0_34, %c34] : memref<32x43xf32, #tpu.memory_space<vmem>>, vector<32x1xf32>
    %c0_35 = arith.constant 0 : index
    %c35 = arith.constant 35 : index
    %35 = vector.load %arg2[%c0_35, %c35] : memref<32x43xf32, #tpu.memory_space<vmem>>, vector<32x1xf32>
    %c0_36 = arith.constant 0 : index
    %c36 = arith.constant 36 : index
    %36 = vector.load %arg2[%c0_36, %c36] : memref<32x43xf32, #tpu.memory_space<vmem>>, vector<32x1xf32>
    %c0_37 = arith.constant 0 : index
    %c37 = arith.constant 37 : index
    %37 = vector.load %arg2[%c0_37, %c37] : memref<32x43xf32, #tpu.memory_space<vmem>>, vector<32x1xf32>
    %c0_38 = arith.constant 0 : index
    %c38 = arith.constant 38 : index
    %38 = vector.load %arg2[%c0_38, %c38] : memref<32x43xf32, #tpu.memory_space<vmem>>, vector<32x1xf32>
    %c0_39 = arith.constant 0 : index
    %c39 = arith.constant 39 : index
    %39 = vector.load %arg2[%c0_39, %c39] : memref<32x43xf32, #tpu.memory_space<vmem>>, vector<32x1xf32>
    %c0_40 = arith.constant 0 : index
    %c40 = arith.constant 40 : index
    %40 = vector.load %arg2[%c0_40, %c40] : memref<32x43xf32, #tpu.memory_space<vmem>>, vector<32x1xf32>
    %c0_41 = arith.constant 0 : index
    %c41 = arith.constant 41 : index
    %41 = vector.load %arg2[%c0_41, %c41] : memref<32x43xf32, #tpu.memory_space<vmem>>, vector<32x1xf32>
    %c0_42 = arith.constant 0 : index
    %c42 = arith.constant 42 : index
    %42 = vector.load %arg2[%c0_42, %c42] : memref<32x43xf32, #tpu.memory_space<vmem>>, vector<32x1xf32>
    %c0_43 = arith.constant 0 : index
    %c0_44 = arith.constant 0 : index
    %43 = vector.load %arg1[%c0_43, %c0_44] : memref<32x512xf32, #tpu.memory_space<vmem>>, vector<32x512xf32>
    %cst = arith.constant 5.000000e-01 : f32
    %44 = vector.broadcast %cst : f32 to vector<32x512xf32>
    %45 = arith.subf %43, %44 : vector<32x512xf32>
    %46 = vector.broadcast %0 : vector<32x1xf32> to vector<32x512xf32>
    %47 = arith.mulf %46, %45 : vector<32x512xf32>
    %48 = vector.broadcast %3 : vector<32x1xf32> to vector<32x512xf32>
    %49 = arith.addf %47, %48 : vector<32x512xf32>
    %50 = math.tanh %49 : vector<32x512xf32>
    %51 = vector.broadcast %6 : vector<32x1xf32> to vector<32x512xf32>
    %52 = arith.mulf %51, %50 : vector<32x512xf32>
    %53 = arith.addf %49, %52 : vector<32x512xf32>
    %54 = vector.broadcast %1 : vector<32x1xf32> to vector<32x512xf32>
    %55 = arith.mulf %54, %45 : vector<32x512xf32>
    %56 = vector.broadcast %4 : vector<32x1xf32> to vector<32x512xf32>
    %57 = arith.addf %55, %56 : vector<32x512xf32>
    %58 = math.tanh %57 : vector<32x512xf32>
    %59 = vector.broadcast %7 : vector<32x1xf32> to vector<32x512xf32>
    %60 = arith.mulf %59, %58 : vector<32x512xf32>
    %61 = arith.addf %57, %60 : vector<32x512xf32>
    %62 = vector.broadcast %2 : vector<32x1xf32> to vector<32x512xf32>
    %63 = arith.mulf %62, %45 : vector<32x512xf32>
    %64 = vector.broadcast %5 : vector<32x1xf32> to vector<32x512xf32>
    %65 = arith.addf %63, %64 : vector<32x512xf32>
    %66 = math.tanh %65 : vector<32x512xf32>
    %67 = vector.broadcast %8 : vector<32x1xf32> to vector<32x512xf32>
    %68 = arith.mulf %67, %66 : vector<32x512xf32>
    %69 = arith.addf %65, %68 : vector<32x512xf32>
    %70 = vector.broadcast %9 : vector<32x1xf32> to vector<32x512xf32>
    %71 = arith.mulf %70, %53 : vector<32x512xf32>
    %72 = vector.broadcast %10 : vector<32x1xf32> to vector<32x512xf32>
    %73 = arith.mulf %72, %61 : vector<32x512xf32>
    %74 = arith.addf %71, %73 : vector<32x512xf32>
    %75 = vector.broadcast %11 : vector<32x1xf32> to vector<32x512xf32>
    %76 = arith.mulf %75, %69 : vector<32x512xf32>
    %77 = arith.addf %74, %76 : vector<32x512xf32>
    %78 = vector.broadcast %18 : vector<32x1xf32> to vector<32x512xf32>
    %79 = arith.addf %77, %78 : vector<32x512xf32>
    %80 = math.tanh %79 : vector<32x512xf32>
    %81 = vector.broadcast %21 : vector<32x1xf32> to vector<32x512xf32>
    %82 = arith.mulf %81, %80 : vector<32x512xf32>
    %83 = arith.addf %79, %82 : vector<32x512xf32>
    %84 = vector.broadcast %12 : vector<32x1xf32> to vector<32x512xf32>
    %85 = arith.mulf %84, %53 : vector<32x512xf32>
    %86 = vector.broadcast %13 : vector<32x1xf32> to vector<32x512xf32>
    %87 = arith.mulf %86, %61 : vector<32x512xf32>
    %88 = arith.addf %85, %87 : vector<32x512xf32>
    %89 = vector.broadcast %14 : vector<32x1xf32> to vector<32x512xf32>
    %90 = arith.mulf %89, %69 : vector<32x512xf32>
    %91 = arith.addf %88, %90 : vector<32x512xf32>
    %92 = vector.broadcast %19 : vector<32x1xf32> to vector<32x512xf32>
    %93 = arith.addf %91, %92 : vector<32x512xf32>
    %94 = math.tanh %93 : vector<32x512xf32>
    %95 = vector.broadcast %22 : vector<32x1xf32> to vector<32x512xf32>
    %96 = arith.mulf %95, %94 : vector<32x512xf32>
    %97 = arith.addf %93, %96 : vector<32x512xf32>
    %98 = vector.broadcast %15 : vector<32x1xf32> to vector<32x512xf32>
    %99 = arith.mulf %98, %53 : vector<32x512xf32>
    %100 = vector.broadcast %16 : vector<32x1xf32> to vector<32x512xf32>
    %101 = arith.mulf %100, %61 : vector<32x512xf32>
    %102 = arith.addf %99, %101 : vector<32x512xf32>
    %103 = vector.broadcast %17 : vector<32x1xf32> to vector<32x512xf32>
    %104 = arith.mulf %103, %69 : vector<32x512xf32>
    %105 = arith.addf %102, %104 : vector<32x512xf32>
    %106 = vector.broadcast %20 : vector<32x1xf32> to vector<32x512xf32>
    %107 = arith.addf %105, %106 : vector<32x512xf32>
    %108 = math.tanh %107 : vector<32x512xf32>
    %109 = vector.broadcast %23 : vector<32x1xf32> to vector<32x512xf32>
    %110 = arith.mulf %109, %108 : vector<32x512xf32>
    %111 = arith.addf %107, %110 : vector<32x512xf32>
    %112 = vector.broadcast %24 : vector<32x1xf32> to vector<32x512xf32>
    %113 = arith.mulf %112, %83 : vector<32x512xf32>
    %114 = vector.broadcast %25 : vector<32x1xf32> to vector<32x512xf32>
    %115 = arith.mulf %114, %97 : vector<32x512xf32>
    %116 = arith.addf %113, %115 : vector<32x512xf32>
    %117 = vector.broadcast %26 : vector<32x1xf32> to vector<32x512xf32>
    %118 = arith.mulf %117, %111 : vector<32x512xf32>
    %119 = arith.addf %116, %118 : vector<32x512xf32>
    %120 = vector.broadcast %33 : vector<32x1xf32> to vector<32x512xf32>
    %121 = arith.addf %119, %120 : vector<32x512xf32>
    %122 = math.tanh %121 : vector<32x512xf32>
    %123 = vector.broadcast %36 : vector<32x1xf32> to vector<32x512xf32>
    %124 = arith.mulf %123, %122 : vector<32x512xf32>
    %125 = arith.addf %121, %124 : vector<32x512xf32>
    %126 = vector.broadcast %27 : vector<32x1xf32> to vector<32x512xf32>
    %127 = arith.mulf %126, %83 : vector<32x512xf32>
    %128 = vector.broadcast %28 : vector<32x1xf32> to vector<32x512xf32>
    %129 = arith.mulf %128, %97 : vector<32x512xf32>
    %130 = arith.addf %127, %129 : vector<32x512xf32>
    %131 = vector.broadcast %29 : vector<32x1xf32> to vector<32x512xf32>
    %132 = arith.mulf %131, %111 : vector<32x512xf32>
    %133 = arith.addf %130, %132 : vector<32x512xf32>
    %134 = vector.broadcast %34 : vector<32x1xf32> to vector<32x512xf32>
    %135 = arith.addf %133, %134 : vector<32x512xf32>
    %136 = math.tanh %135 : vector<32x512xf32>
    %137 = vector.broadcast %37 : vector<32x1xf32> to vector<32x512xf32>
    %138 = arith.mulf %137, %136 : vector<32x512xf32>
    %139 = arith.addf %135, %138 : vector<32x512xf32>
    %140 = vector.broadcast %30 : vector<32x1xf32> to vector<32x512xf32>
    %141 = arith.mulf %140, %83 : vector<32x512xf32>
    %142 = vector.broadcast %31 : vector<32x1xf32> to vector<32x512xf32>
    %143 = arith.mulf %142, %97 : vector<32x512xf32>
    %144 = arith.addf %141, %143 : vector<32x512xf32>
    %145 = vector.broadcast %32 : vector<32x1xf32> to vector<32x512xf32>
    %146 = arith.mulf %145, %111 : vector<32x512xf32>
    %147 = arith.addf %144, %146 : vector<32x512xf32>
    %148 = vector.broadcast %35 : vector<32x1xf32> to vector<32x512xf32>
    %149 = arith.addf %147, %148 : vector<32x512xf32>
    %150 = math.tanh %149 : vector<32x512xf32>
    %151 = vector.broadcast %38 : vector<32x1xf32> to vector<32x512xf32>
    %152 = arith.mulf %151, %150 : vector<32x512xf32>
    %153 = arith.addf %149, %152 : vector<32x512xf32>
    %154 = vector.broadcast %39 : vector<32x1xf32> to vector<32x512xf32>
    %155 = arith.mulf %154, %125 : vector<32x512xf32>
    %156 = vector.broadcast %40 : vector<32x1xf32> to vector<32x512xf32>
    %157 = arith.mulf %156, %139 : vector<32x512xf32>
    %158 = arith.addf %155, %157 : vector<32x512xf32>
    %159 = vector.broadcast %41 : vector<32x1xf32> to vector<32x512xf32>
    %160 = arith.mulf %159, %153 : vector<32x512xf32>
    %161 = arith.addf %158, %160 : vector<32x512xf32>
    %162 = vector.broadcast %42 : vector<32x1xf32> to vector<32x512xf32>
    %163 = arith.addf %161, %162 : vector<32x512xf32>
    %cst_45 = arith.constant 5.000000e-01 : f32
    %164 = vector.broadcast %cst_45 : f32 to vector<32x512xf32>
    %165 = arith.addf %43, %164 : vector<32x512xf32>
    %166 = vector.broadcast %0 : vector<32x1xf32> to vector<32x512xf32>
    %167 = arith.mulf %166, %165 : vector<32x512xf32>
    %168 = vector.broadcast %3 : vector<32x1xf32> to vector<32x512xf32>
    %169 = arith.addf %167, %168 : vector<32x512xf32>
    %170 = math.tanh %169 : vector<32x512xf32>
    %171 = vector.broadcast %6 : vector<32x1xf32> to vector<32x512xf32>
    %172 = arith.mulf %171, %170 : vector<32x512xf32>
    %173 = arith.addf %169, %172 : vector<32x512xf32>
    %174 = vector.broadcast %1 : vector<32x1xf32> to vector<32x512xf32>
    %175 = arith.mulf %174, %165 : vector<32x512xf32>
    %176 = vector.broadcast %4 : vector<32x1xf32> to vector<32x512xf32>
    %177 = arith.addf %175, %176 : vector<32x512xf32>
    %178 = math.tanh %177 : vector<32x512xf32>
    %179 = vector.broadcast %7 : vector<32x1xf32> to vector<32x512xf32>
    %180 = arith.mulf %179, %178 : vector<32x512xf32>
    %181 = arith.addf %177, %180 : vector<32x512xf32>
    %182 = vector.broadcast %2 : vector<32x1xf32> to vector<32x512xf32>
    %183 = arith.mulf %182, %165 : vector<32x512xf32>
    %184 = vector.broadcast %5 : vector<32x1xf32> to vector<32x512xf32>
    %185 = arith.addf %183, %184 : vector<32x512xf32>
    %186 = math.tanh %185 : vector<32x512xf32>
    %187 = vector.broadcast %8 : vector<32x1xf32> to vector<32x512xf32>
    %188 = arith.mulf %187, %186 : vector<32x512xf32>
    %189 = arith.addf %185, %188 : vector<32x512xf32>
    %190 = vector.broadcast %9 : vector<32x1xf32> to vector<32x512xf32>
    %191 = arith.mulf %190, %173 : vector<32x512xf32>
    %192 = vector.broadcast %10 : vector<32x1xf32> to vector<32x512xf32>
    %193 = arith.mulf %192, %181 : vector<32x512xf32>
    %194 = arith.addf %191, %193 : vector<32x512xf32>
    %195 = vector.broadcast %11 : vector<32x1xf32> to vector<32x512xf32>
    %196 = arith.mulf %195, %189 : vector<32x512xf32>
    %197 = arith.addf %194, %196 : vector<32x512xf32>
    %198 = vector.broadcast %18 : vector<32x1xf32> to vector<32x512xf32>
    %199 = arith.addf %197, %198 : vector<32x512xf32>
    %200 = math.tanh %199 : vector<32x512xf32>
    %201 = vector.broadcast %21 : vector<32x1xf32> to vector<32x512xf32>
    %202 = arith.mulf %201, %200 : vector<32x512xf32>
    %203 = arith.addf %199, %202 : vector<32x512xf32>
    %204 = vector.broadcast %12 : vector<32x1xf32> to vector<32x512xf32>
    %205 = arith.mulf %204, %173 : vector<32x512xf32>
    %206 = vector.broadcast %13 : vector<32x1xf32> to vector<32x512xf32>
    %207 = arith.mulf %206, %181 : vector<32x512xf32>
    %208 = arith.addf %205, %207 : vector<32x512xf32>
    %209 = vector.broadcast %14 : vector<32x1xf32> to vector<32x512xf32>
    %210 = arith.mulf %209, %189 : vector<32x512xf32>
    %211 = arith.addf %208, %210 : vector<32x512xf32>
    %212 = vector.broadcast %19 : vector<32x1xf32> to vector<32x512xf32>
    %213 = arith.addf %211, %212 : vector<32x512xf32>
    %214 = math.tanh %213 : vector<32x512xf32>
    %215 = vector.broadcast %22 : vector<32x1xf32> to vector<32x512xf32>
    %216 = arith.mulf %215, %214 : vector<32x512xf32>
    %217 = arith.addf %213, %216 : vector<32x512xf32>
    %218 = vector.broadcast %15 : vector<32x1xf32> to vector<32x512xf32>
    %219 = arith.mulf %218, %173 : vector<32x512xf32>
    %220 = vector.broadcast %16 : vector<32x1xf32> to vector<32x512xf32>
    %221 = arith.mulf %220, %181 : vector<32x512xf32>
    %222 = arith.addf %219, %221 : vector<32x512xf32>
    %223 = vector.broadcast %17 : vector<32x1xf32> to vector<32x512xf32>
    %224 = arith.mulf %223, %189 : vector<32x512xf32>
    %225 = arith.addf %222, %224 : vector<32x512xf32>
    %226 = vector.broadcast %20 : vector<32x1xf32> to vector<32x512xf32>
    %227 = arith.addf %225, %226 : vector<32x512xf32>
    %228 = math.tanh %227 : vector<32x512xf32>
    %229 = vector.broadcast %23 : vector<32x1xf32> to vector<32x512xf32>
    %230 = arith.mulf %229, %228 : vector<32x512xf32>
    %231 = arith.addf %227, %230 : vector<32x512xf32>
    %232 = vector.broadcast %24 : vector<32x1xf32> to vector<32x512xf32>
    %233 = arith.mulf %232, %203 : vector<32x512xf32>
    %234 = vector.broadcast %25 : vector<32x1xf32> to vector<32x512xf32>
    %235 = arith.mulf %234, %217 : vector<32x512xf32>
    %236 = arith.addf %233, %235 : vector<32x512xf32>
    %237 = vector.broadcast %26 : vector<32x1xf32> to vector<32x512xf32>
    %238 = arith.mulf %237, %231 : vector<32x512xf32>
    %239 = arith.addf %236, %238 : vector<32x512xf32>
    %240 = vector.broadcast %33 : vector<32x1xf32> to vector<32x512xf32>
    %241 = arith.addf %239, %240 : vector<32x512xf32>
    %242 = math.tanh %241 : vector<32x512xf32>
    %243 = vector.broadcast %36 : vector<32x1xf32> to vector<32x512xf32>
    %244 = arith.mulf %243, %242 : vector<32x512xf32>
    %245 = arith.addf %241, %244 : vector<32x512xf32>
    %246 = vector.broadcast %27 : vector<32x1xf32> to vector<32x512xf32>
    %247 = arith.mulf %246, %203 : vector<32x512xf32>
    %248 = vector.broadcast %28 : vector<32x1xf32> to vector<32x512xf32>
    %249 = arith.mulf %248, %217 : vector<32x512xf32>
    %250 = arith.addf %247, %249 : vector<32x512xf32>
    %251 = vector.broadcast %29 : vector<32x1xf32> to vector<32x512xf32>
    %252 = arith.mulf %251, %231 : vector<32x512xf32>
    %253 = arith.addf %250, %252 : vector<32x512xf32>
    %254 = vector.broadcast %34 : vector<32x1xf32> to vector<32x512xf32>
    %255 = arith.addf %253, %254 : vector<32x512xf32>
    %256 = math.tanh %255 : vector<32x512xf32>
    %257 = vector.broadcast %37 : vector<32x1xf32> to vector<32x512xf32>
    %258 = arith.mulf %257, %256 : vector<32x512xf32>
    %259 = arith.addf %255, %258 : vector<32x512xf32>
    %260 = vector.broadcast %30 : vector<32x1xf32> to vector<32x512xf32>
    %261 = arith.mulf %260, %203 : vector<32x512xf32>
    %262 = vector.broadcast %31 : vector<32x1xf32> to vector<32x512xf32>
    %263 = arith.mulf %262, %217 : vector<32x512xf32>
    %264 = arith.addf %261, %263 : vector<32x512xf32>
    %265 = vector.broadcast %32 : vector<32x1xf32> to vector<32x512xf32>
    %266 = arith.mulf %265, %231 : vector<32x512xf32>
    %267 = arith.addf %264, %266 : vector<32x512xf32>
    %268 = vector.broadcast %35 : vector<32x1xf32> to vector<32x512xf32>
    %269 = arith.addf %267, %268 : vector<32x512xf32>
    %270 = math.tanh %269 : vector<32x512xf32>
    %271 = vector.broadcast %38 : vector<32x1xf32> to vector<32x512xf32>
    %272 = arith.mulf %271, %270 : vector<32x512xf32>
    %273 = arith.addf %269, %272 : vector<32x512xf32>
    %274 = vector.broadcast %39 : vector<32x1xf32> to vector<32x512xf32>
    %275 = arith.mulf %274, %245 : vector<32x512xf32>
    %276 = vector.broadcast %40 : vector<32x1xf32> to vector<32x512xf32>
    %277 = arith.mulf %276, %259 : vector<32x512xf32>
    %278 = arith.addf %275, %277 : vector<32x512xf32>
    %279 = vector.broadcast %41 : vector<32x1xf32> to vector<32x512xf32>
    %280 = arith.mulf %279, %273 : vector<32x512xf32>
    %281 = arith.addf %278, %280 : vector<32x512xf32>
    %282 = vector.broadcast %42 : vector<32x1xf32> to vector<32x512xf32>
    %283 = arith.addf %281, %282 : vector<32x512xf32>
    %284 = arith.addf %163, %283 : vector<32x512xf32>
    %cst_46 = arith.constant 0.000000e+00 : f32
    %285 = vector.broadcast %cst_46 : f32 to vector<32x512xf32>
    %286 = arith.cmpf ogt, %284, %285 : vector<32x512xf32>
    %cst_47 = arith.constant 0.000000e+00 : f32
    %287 = vector.broadcast %cst_47 : f32 to vector<32x512xf32>
    %288 = arith.cmpf olt, %284, %287 : vector<32x512xf32>
    %cst_48 = arith.constant 1.000000e+00 : f32
    %cst_49 = arith.constant 0.000000e+00 : f32
    %289 = vector.broadcast %cst_48 : f32 to vector<32x512xf32>
    %290 = vector.broadcast %cst_49 : f32 to vector<32x512xf32>
    %291 = arith.select %288, %289, %290 : vector<32x512xi1>, vector<32x512xf32>
    %cst_50 = arith.constant -1.000000e+00 : f32
    %292 = vector.broadcast %cst_50 : f32 to vector<32x512xf32>
    %293 = arith.select %286, %292, %291 : vector<32x512xi1>, vector<32x512xf32>
    %294 = arith.mulf %293, %283 : vector<32x512xf32>
    %cst_51 = arith.constant 5.000000e-01 : f32
    %295 = vector.broadcast %cst_51 : f32 to vector<32x512xf32>
    %296 = arith.mulf %295, %294 : vector<32x512xf32>
    %297 = math.tanh %296 : vector<32x512xf32>
    %cst_52 = arith.constant 1.000000e+00 : f32
    %298 = vector.broadcast %cst_52 : f32 to vector<32x512xf32>
    %299 = arith.addf %297, %298 : vector<32x512xf32>
    %cst_53 = arith.constant 5.000000e-01 : f32
    %300 = vector.broadcast %cst_53 : f32 to vector<32x512xf32>
    %301 = arith.mulf %300, %299 : vector<32x512xf32>
    %302 = arith.mulf %293, %163 : vector<32x512xf32>
    %cst_54 = arith.constant 5.000000e-01 : f32
    %303 = vector.broadcast %cst_54 : f32 to vector<32x512xf32>
    %304 = arith.mulf %303, %302 : vector<32x512xf32>
    %305 = math.tanh %304 : vector<32x512xf32>
    %cst_55 = arith.constant 1.000000e+00 : f32
    %306 = vector.broadcast %cst_55 : f32 to vector<32x512xf32>
    %307 = arith.addf %305, %306 : vector<32x512xf32>
    %cst_56 = arith.constant 5.000000e-01 : f32
    %308 = vector.broadcast %cst_56 : f32 to vector<32x512xf32>
    %309 = arith.mulf %308, %307 : vector<32x512xf32>
    %310 = arith.subf %301, %309 : vector<32x512xf32>
    %311 = math.absf %310 : vector<32x512xf32>
    %cst_57 = arith.constant 9.99999997E-7 : f32
    %312 = vector.broadcast %cst_57 : f32 to vector<32x512xf32>
    %313 = arith.maximumf %311, %312 : vector<32x512xf32>
    %314 = math.log %313 : vector<32x512xf32>
    %cst_58 = arith.constant 1.44269502 : f32
    %315 = vector.broadcast %cst_58 : f32 to vector<32x512xf32>
    %316 = arith.mulf %314, %315 : vector<32x512xf32>
    %cst_59 = arith.constant 0.000000e+00 : f32
    %317 = vector.broadcast %cst_59 : f32 to vector<32x512xf32>
    %318 = arith.subf %317, %316 : vector<32x512xf32>
    %c0_60 = arith.constant 0 : index
    %c0_61 = arith.constant 0 : index
    %319 = vector.load %arg3[%c0_60, %c0_61] : memref<32x512xf32, #tpu.memory_space<vmem>>, vector<32x512xf32>
    tpu.vector_store %arg3[%c0_60, %c0_61], %318 {strides = array<i32>} : memref<32x512xf32, #tpu.memory_space<vmem>>, vector<32x512xf32>,
    return
  }
  func.func @transform_0(%arg0: i32) -> (i32, i32) {
    %c0_i32 = arith.constant 0 : i32
    %c0_i32_0 = arith.constant 0 : i32
    return %c0_i32, %arg0 : i32, i32
  }
  func.func @transform_1(%arg0: i32) -> (i32, i32) {
    %c0_i32 = arith.constant 0 : i32
    %c0_i32_0 = arith.constant 0 : i32
    %c0_i32_1 = arith.constant 0 : i32
    return %c0_i32, %c0_i32_0 : i32, i32
  }
  func.func @transform_2(%arg0: i32) -> (i32, i32) {
    %c0_i32 = arith.constant 0 : i32
    %c0_i32_0 = arith.constant 0 : i32
    return %c0_i32, %arg0 : i32, i32
  }
}

</mosaic_0001>

<llo_original>
// kernel: tpu_custom_call.1
$region0: #{tpu_custom_call.1}
  #allocation0 [shape = 'u32[]', space=smem, size = 0x4, offset = 0x4, fixed_abs, tag = 'smem constant byte address 0x4 - core index']
  #allocation1 [shape = 'u32[72,128]{1,0:T(1,128)}', space=vmem, size = 0x9000, scoped, tag = 'internal scratch']
  %s0 = inlined_call_operand.hbm [shape: f32[32,512], index: 0, kind: input, shape index: {}]
  %s1 = inlined_call_operand.hbm [shape: f32[32,43], index: 1, kind: input, shape index: {}]
  %s2 = inlined_call_operand.hbm [shape: f32[32,512], index: 2, kind: output, shape index: {}]
  %s3 = sld [smem:[#allocation0]]
  $region26: #{tpu_custom_call.1} parent=0
    _
  %s5 = ssub.s32 1, %s3
  %s6 = scalar_select 0, %s5, %s3
  $region1: #{tpu_custom_call.1} parent=0
    #allocation2 [shape = 'u8[65536]{0}', space=vmem, size = 0x10000, scoped, tag = 'input window, operand 0, single buffered']
    #allocation3 [shape = 's32[1]{0}', space=sflag, size = 0x4, scoped, tag = 'scoped memory for tpu_custom_call.1']
    #allocation4 [shape = 's32[1]{0}', space=sflag, size = 0x4, scoped, tag = 'scoped memory for tpu_custom_call.1']
    #allocation5 [shape = 'u8[16384]{0}', space=vmem, size = 0x4000, scoped, tag = 'input window, operand 1, single buffered']
    #allocation6 [shape = 's32[1]{0}', space=sflag, size = 0x4, scoped, tag = 'scoped memory for tpu_custom_call.1']
    #allocation7 [shape = 'u8[65536]{0}', space=vmem, size = 0x10000, scoped, tag = 'output window, operand 0, single buffered']
    %7 = vsyncpa [#allocation3], 0
    %8 = vsyncpa [#allocation6], 0
    %9 = vsyncpa [#allocation4], 0
    // Predicated region
    $region2: #{tpu_custom_call.1} parent=1 // pred_check
      _
    $region3: #{tpu_custom_call.1} parent=1 // pred_check_branch
      %11 = sbr.rel (0) target = $region5
    $region4: #{tpu_custom_call.1} parent=1 // pred_region
      %13 = vsyncadd [#allocation3], 0
      %s14 = sshll.u32 %s0, 4
      %s15 = int_to_ptr.hbm [resolvable:$true] %s14
      %s16 = sshll.u32 [#allocation2], 4
      %s17 = int_to_ptr.vmem [resolvable:$true] %s16
      %22 = dma.hbm_to_vmem [thread:$0]  %s15, 2048, %s17, [#allocation3], 512, 512, 32
    $region5: #{tpu_custom_call.1} parent=1 // pred_fallthru
      _
    // Predicated region
    $region6: #{tpu_custom_call.1} parent=1 // pred_check
      _
    $region7: #{tpu_custom_call.1} parent=1 // pred_check_branch
      %24 = sbr.rel (0) target = $region9
    $region8: #{tpu_custom_call.1} parent=1 // pred_region
      %26 = vsyncadd [#allocation6], 0
      %s27 = sshll.u32 %s1, 4
      %s28 = int_to_ptr.hbm [resolvable:$true] %s27
      %s29 = sshll.u32 [#allocation5], 4
      %s30 = int_to_ptr.vmem [resolvable:$true] %s29
      %35 = dma.hbm_to_vmem [thread:$0]  %s28, 512, %s30, [#allocation6], 128, 128, 8
    $region9: #{tpu_custom_call.1} parent=1 // pred_fallthru
      _
    // Predicated region
    $region10: #{tpu_custom_call.1} parent=1 // pred_check
      _
    $region11: #{tpu_custom_call.1} parent=1 // pred_check_branch
      %37 = sbr.rel (0) target = $region13
    $region12: #{tpu_custom_call.1} parent=1 // pred_region
      %39 = dma.done [#allocation3], 2048
    $region13: #{tpu_custom_call.1} parent=1 // pred_fallthru
      _
    // Predicated region
    $region14: #{tpu_custom_call.1} parent=1 // pred_check
      _
    $region15: #{tpu_custom_call.1} parent=1 // pred_check_branch
      %41 = sbr.rel (0) target = $region17
    $region16: #{tpu_custom_call.1} parent=1 // pred_region
      %43 = dma.done [#allocation6], 512
    $region17: #{tpu_custom_call.1} parent=1 // pred_fallthru
      _
    %v44 = vld [vmem:[#allocation5] sm:$0xff]
    %v45 = vld [vmem:[#allocation5 + $0x8] sm:$0xff]
    %v46 = vld [vmem:[#allocation5 + $0x10] sm:$0xff]
    %v47 = vld [vmem:[#allocation5 + $0x18] sm:$0xff]
    %v48 = vld [vmem:[#allocation2] sm:$0xff]
    %v49 = vld [vmem:[#allocation2 + $0x8] sm:$0xff]
    %v50 = vld [vmem:[#allocation2 + $0x10] sm:$0xff]
    %v51 = vld [vmem:[#allocation2 + $0x18] sm:$0xff]
    %v52 = vld [vmem:[#allocation2 + $0x20] sm:$0xff]
    %v53 = vld [vmem:[#allocation2 + $0x28] sm:$0xff]
    %v54 = vld [vmem:[#allocation2 + $0x30] sm:$0xff]
    %v55 = vld [vmem:[#allocation2 + $0x38] sm:$0xff]
    %v56 = vld [vmem:[#allocation2 + $0x40] sm:$0xff]
    %v57 = vld [vmem:[#allocation2 + $0x48] sm:$0xff]
    %v58 = vld [vmem:[#allocation2 + $0x50] sm:$0xff]
    %v59 = vld [vmem:[#allocation2 + $0x58] sm:$0xff]
    %v60 = vld [vmem:[#allocation2 + $0x60] sm:$0xff]
    %v61 = vld [vmem:[#allocation2 + $0x68] sm:$0xff]
    %v62 = vld [vmem:[#allocation2 + $0x70] sm:$0xff]
    %v63 = vld [vmem:[#allocation2 + $0x78] sm:$0xff]
    %v64 = vsub.f32 %v48, 0.5
    %v65 = vsub.f32 %v49, 0.5
    %v66 = vsub.f32 %v50, 0.5
    %v67 = vsub.f32 %v51, 0.5
    %v68 = vsub.f32 %v52, 0.5
    %v69 = vsub.f32 %v53, 0.5
    %v70 = vsub.f32 %v54, 0.5
    %v71 = vsub.f32 %v55, 0.5
    %v72 = vsub.f32 %v56, 0.5
    %v73 = vsub.f32 %v57, 0.5
    %v74 = vsub.f32 %v58, 0.5
    %v75 = vsub.f32 %v59, 0.5
    %v76 = vsub.f32 %v60, 0.5
    %v77 = vsub.f32 %v61, 0.5
    %v78 = vsub.f32 %v62, 0.5
    %v79 = vsub.f32 %v63, 0.5
    %81 = vset.pattern.permute.xlu0 0
    %82 = vperm.xlu0 %81, %v44
    %v83 = vpop.permute.xlu0 %82
    %86 = vset.pattern.permute.xlu0 0
    %87 = vperm.xlu0 %86, %v45
    %v88 = vpop.permute.xlu0 %87
    %91 = vset.pattern.permute.xlu0 0
    %92 = vperm.xlu0 %91, %v46
    %v93 = vpop.permute.xlu0 %92
    %96 = vset.pattern.permute.xlu0 0
    %97 = vperm.xlu0 %96, %v47
    %v98 = vpop.permute.xlu0 %97
    %v100 = vmul.f32 %v83, %v64
    %v101 = vmul.f32 %v83, %v65
    %v102 = vmul.f32 %v83, %v66
    %v103 = vmul.f32 %v83, %v67
    %v104 = vmul.f32 %v88, %v68
    %v105 = vmul.f32 %v88, %v69
    %v106 = vmul.f32 %v88, %v70
    %v107 = vmul.f32 %v88, %v71
    %v108 = vmul.f32 %v93, %v72
    %v109 = vmul.f32 %v93, %v73
    %v110 = vmul.f32 %v93, %v74
    %v111 = vmul.f32 %v93, %v75
    %v112 = vmul.f32 %v98, %v76
    %v113 = vmul.f32 %v98, %v77
    %v114 = vmul.f32 %v98, %v78
    %v115 = vmul.f32 %v98, %v79
    %116 = vset.pattern.permute.xlu0 3
    %117 = vperm.xlu0 %116, %v44
    %v118 = vpop.permute.xlu0 %117
    %120 = vset.pattern.permute.xlu0 3
    %121 = vperm.xlu0 %120, %v45
    %v122 = vpop.permute.xlu0 %121
    %124 = vset.pattern.permute.xlu0 3
    %125 = vperm.xlu0 %124, %v46
    %v126 = vpop.permute.xlu0 %125
    %128 = vset.pattern.permute.xlu0 3
    %129 = vperm.xlu0 %128, %v47
    %v130 = vpop.permute.xlu0 %129
    %v132 = vadd.f32 %v100, %v118
    %v133 = vadd.f32 %v101, %v118
    %v134 = vadd.f32 %v102, %v118
    %v135 = vadd.f32 %v103, %v118
    %v136 = vadd.f32 %v104, %v122
    %v137 = vadd.f32 %v105, %v122
    %v138 = vadd.f32 %v106, %v122
    %v139 = vadd.f32 %v107, %v122
    %v140 = vadd.f32 %v108, %v126
    %v141 = vadd.f32 %v109, %v126
    %v142 = vadd.f32 %v110, %v126
    %v143 = vadd.f32 %v111, %v126
    %v144 = vadd.f32 %v112, %v130
    %v145 = vadd.f32 %v113, %v130
    %v146 = vadd.f32 %v114, %v130
    %v147 = vadd.f32 %v115, %v130
    %v148 = vtanh.pop %v132
    %v149 = vtanh.pop %v133
    %v150 = vtanh.pop %v134
    %v151 = vtanh.pop %v135
    %v152 = vtanh.pop %v136
    %v153 = vtanh.pop %v137
    %v154 = vtanh.pop %v138
    %v155 = vtanh.pop %v139
    %v156 = vtanh.pop %v140
    %v157 = vtanh.pop %v141
    %v158 = vtanh.pop %v142
    %v159 = vtanh.pop %v143
    %v160 = vtanh.pop %v144
    %v161 = vtanh.pop %v145
    %v162 = vtanh.pop %v146
    %v163 = vtanh.pop %v147
    %164 = vset.pattern.permute.xlu0 6
    %165 = vperm.xlu0 %164, %v44
    %v166 = vpop.permute.xlu0 %165
    %168 = vset.pattern.permute.xlu0 6
    %169 = vperm.xlu0 %168, %v45
    %v170 = vpop.permute.xlu0 %169
    %172 = vset.pattern.permute.xlu0 6
    %173 = vperm.xlu0 %172, %v46
    %v174 = vpop.permute.xlu0 %173
    %176 = vset.pattern.permute.xlu0 6
    %177 = vperm.xlu0 %176, %v47
    %v178 = vpop.permute.xlu0 %177
    %v180 = vmul.f32 %v166, %v148
    %v181 = vmul.f32 %v166, %v149
    %v182 = vmul.f32 %v166, %v150
    %v183 = vmul.f32 %v166, %v151
    %v184 = vmul.f32 %v170, %v152
    %v185 = vmul.f32 %v170, %v153
    %v186 = vmul.f32 %v170, %v154
    %v187 = vmul.f32 %v170, %v155
    %v188 = vmul.f32 %v174, %v156
    %v189 = vmul.f32 %v174, %v157
    %v190 = vmul.f32 %v174, %v158
    %v191 = vmul.f32 %v174, %v159
    %v192 = vmul.f32 %v178, %v160
    %v193 = vmul.f32 %v178, %v161
    %v194 = vmul.f32 %v178, %v162
    %v195 = vmul.f32 %v178, %v163
    %v196 = vadd.f32 %v132, %v180
    %v197 = vadd.f32 %v133, %v181
    %v198 = vadd.f32 %v134, %v182
    %v199 = vadd.f32 %v135, %v183
    %v200 = vadd.f32 %v136, %v184
    %v201 = vadd.f32 %v137, %v185
    %v202 = vadd.f32 %v138, %v186
    %v203 = vadd.f32 %v139, %v187
    %v204 = vadd.f32 %v140, %v188
    %v205 = vadd.f32 %v141, %v189
    %v206 = vadd.f32 %v142, %v190
    %v207 = vadd.f32 %v143, %v191
    %v208 = vadd.f32 %v144, %v192
    %v209 = vadd.f32 %v145, %v193
    %v210 = vadd.f32 %v146, %v194
    %v211 = vadd.f32 %v147, %v195
    %212 = vset.pattern.permute.xlu0 1
    %213 = vperm.xlu0 %212, %v44
    %v214 = vpop.permute.xlu0 %213
    %216 = vset.pattern.permute.xlu0 1
    %217 = vperm.xlu0 %216, %v45
    %v218 = vpop.permute.xlu0 %217
    %220 = vset.pattern.permute.xlu0 1
    %221 = vperm.xlu0 %220, %v46
    %v222 = vpop.permute.xlu0 %221
    %224 = vset.pattern.permute.xlu0 1
    %225 = vperm.xlu0 %224, %v47
    %v226 = vpop.permute.xlu0 %225
    %v228 = vmul.f32 %v214, %v64
    %v229 = vmul.f32 %v214, %v65
    %v230 = vmul.f32 %v214, %v66
    %v231 = vmul.f32 %v214, %v67
    %v232 = vmul.f32 %v218, %v68
    %v233 = vmul.f32 %v218, %v69
    %v234 = vmul.f32 %v218, %v70
    %v235 = vmul.f32 %v218, %v71
    %v236 = vmul.f32 %v222, %v72
    %v237 = vmul.f32 %v222, %v73
    %v238 = vmul.f32 %v222, %v74
    %v239 = vmul.f32 %v222, %v75
    %v240 = vmul.f32 %v226, %v76
    %v241 = vmul.f32 %v226, %v77
    %v242 = vmul.f32 %v226, %v78
    %v243 = vmul.f32 %v226, %v79
    %244 = vset.pattern.permute.xlu0 4
    %245 = vperm.xlu0 %244, %v44
    %v246 = vpop.permute.xlu0 %245
    %248 = vset.pattern.permute.xlu0 4
    %249 = vperm.xlu0 %248, %v45
    %v250 = vpop.permute.xlu0 %249
    %252 = vset.pattern.permute.xlu0 4
    %253 = vperm.xlu0 %252, %v46
    %v254 = vpop.permute.xlu0 %253
    %256 = vset.pattern.permute.xlu0 4
    %257 = vperm.xlu0 %256, %v47
    %v258 = vpop.permute.xlu0 %257
    %v260 = vadd.f32 %v228, %v246
    %v261 = vadd.f32 %v229, %v246
    %v262 = vadd.f32 %v230, %v246
    %v263 = vadd.f32 %v231, %v246
    %v264 = vadd.f32 %v232, %v250
    %v265 = vadd.f32 %v233, %v250
    %v266 = vadd.f32 %v234, %v250
    %v267 = vadd.f32 %v235, %v250
    %v268 = vadd.f32 %v236, %v254
    %v269 = vadd.f32 %v237, %v254
    %v270 = vadd.f32 %v238, %v254
    %v271 = vadd.f32 %v239, %v254
    %v272 = vadd.f32 %v240, %v258
    %v273 = vadd.f32 %v241, %v258
    %v274 = vadd.f32 %v242, %v258
    %v275 = vadd.f32 %v243, %v258
    %v276 = vtanh.pop %v260
    %v277 = vtanh.pop %v261
    %v278 = vtanh.pop %v262
    %v279 = vtanh.pop %v263
    %v280 = vtanh.pop %v264
    %v281 = vtanh.pop %v265
    %v282 = vtanh.pop %v266
    %v283 = vtanh.pop %v267
    %v284 = vtanh.pop %v268
    %v285 = vtanh.pop %v269
    %v286 = vtanh.pop %v270
    %v287 = vtanh.pop %v271
    %v288 = vtanh.pop %v272
    %v289 = vtanh.pop %v273
    %v290 = vtanh.pop %v274
    %v291 = vtanh.pop %v275
    %292 = vset.pattern.permute.xlu0 7
    %293 = vperm.xlu0 %292, %v44
    %v294 = vpop.permute.xlu0 %293
    %296 = vset.pattern.permute.xlu0 7
    %297 = vperm.xlu0 %296, %v45
    %v298 = vpop.permute.xlu0 %297
    %300 = vset.pattern.permute.xlu0 7
    %301 = vperm.xlu0 %300, %v46
    %v302 = vpop.permute.xlu0 %301
    %304 = vset.pattern.permute.xlu0 7
    %305 = vperm.xlu0 %304, %v47
    %v306 = vpop.permute.xlu0 %305
    %v308 = vmul.f32 %v294, %v276
    %v309 = vmul.f32 %v294, %v277
    %v310 = vmul.f32 %v294, %v278
    %v311 = vmul.f32 %v294, %v279
    %v312 = vmul.f32 %v298, %v280
    %v313 = vmul.f32 %v298, %v281
    %v314 = vmul.f32 %v298, %v282
    %v315 = vmul.f32 %v298, %v283
    %v316 = vmul.f32 %v302, %v284
    %v317 = vmul.f32 %v302, %v285
    %v318 = vmul.f32 %v302, %v286
    %v319 = vmul.f32 %v302, %v287
    %v320 = vmul.f32 %v306, %v288
    %v321 = vmul.f32 %v306, %v289
    %v322 = vmul.f32 %v306, %v290
    %v323 = vmul.f32 %v306, %v291
    %v324 = vadd.f32 %v260, %v308
    %v325 = vadd.f32 %v261, %v309
    %v326 = vadd.f32 %v262, %v310
    %v327 = vadd.f32 %v263, %v311
    %v328 = vadd.f32 %v264, %v312
    %v329 = vadd.f32 %v265, %v313
    %v330 = vadd.f32 %v266, %v314
    %v331 = vadd.f32 %v267, %v315
    %v332 = vadd.f32 %v268, %v316
    %v333 = vadd.f32 %v269, %v317
    %v334 = vadd.f32 %v270, %v318
    %v335 = vadd.f32 %v271, %v319
    %v336 = vadd.f32 %v272, %v320
    %v337 = vadd.f32 %v273, %v321
    %v338 = vadd.f32 %v274, %v322
    %v339 = vadd.f32 %v275, %v323
    %340 = vset.pattern.permute.xlu0 2
    %341 = vperm.xlu0 %340, %v44
    %v342 = vpop.permute.xlu0 %341
    %344 = vset.pattern.permute.xlu0 2
    %345 = vperm.xlu0 %344, %v45
    %v346 = vpop.permute.xlu0 %345
    %348 = vset.pattern.permute.xlu0 2
    %349 = vperm.xlu0 %348, %v46
    %v350 = vpop.permute.xlu0 %349
    %352 = vset.pattern.permute.xlu0 2
    %353 = vperm.xlu0 %352, %v47
    %v354 = vpop.permute.xlu0 %353
    %v356 = vmul.f32 %v342, %v64
    %v357 = vmul.f32 %v342, %v65
    %v358 = vmul.f32 %v342, %v66
    %v359 = vmul.f32 %v342, %v67
    %v360 = vmul.f32 %v346, %v68
    %v361 = vmul.f32 %v346, %v69
    %v362 = vmul.f32 %v346, %v70
    %v363 = vmul.f32 %v346, %v71
    %v364 = vmul.f32 %v350, %v72
    %v365 = vmul.f32 %v350, %v73
    %v366 = vmul.f32 %v350, %v74
    %v367 = vmul.f32 %v350, %v75
    %v368 = vmul.f32 %v354, %v76
    %v369 = vmul.f32 %v354, %v77
    %v370 = vmul.f32 %v354, %v78
    %v371 = vmul.f32 %v354, %v79
    %372 = vset.pattern.permute.xlu0 5
    %373 = vperm.xlu0 %372, %v44
    %v374 = vpop.permute.xlu0 %373
    %376 = vset.pattern.permute.xlu0 5
    %377 = vperm.xlu0 %376, %v45
    %v378 = vpop.permute.xlu0 %377
    %380 = vset.pattern.permute.xlu0 5
    %381 = vperm.xlu0 %380, %v46
    %v382 = vpop.permute.xlu0 %381
    %384 = vset.pattern.permute.xlu0 5
    %385 = vperm.xlu0 %384, %v47
    %v386 = vpop.permute.xlu0 %385
    %v388 = vadd.f32 %v356, %v374
    %v389 = vadd.f32 %v357, %v374
    %v390 = vadd.f32 %v358, %v374
    %v391 = vadd.f32 %v359, %v374
    %v392 = vadd.f32 %v360, %v378
    %v393 = vadd.f32 %v361, %v378
    %v394 = vadd.f32 %v362, %v378
    %v395 = vadd.f32 %v363, %v378
    %v396 = vadd.f32 %v364, %v382
    %v397 = vadd.f32 %v365, %v382
    %v398 = vadd.f32 %v366, %v382
    %v399 = vadd.f32 %v367, %v382
    %v400 = vadd.f32 %v368, %v386
    %v401 = vadd.f32 %v369, %v386
    %v402 = vadd.f32 %v370, %v386
    %v403 = vadd.f32 %v371, %v386
    %v404 = vtanh.pop %v388
    %v405 = vtanh.pop %v389
    %v406 = vtanh.pop %v390
    %v407 = vtanh.pop %v391
    %v408 = vtanh.pop %v392
    %v409 = vtanh.pop %v393
    %v410 = vtanh.pop %v394
    %v411 = vtanh.pop %v395
    %v412 = vtanh.pop %v396
    %v413 = vtanh.pop %v397
    %v414 = vtanh.pop %v398
    %v415 = vtanh.pop %v399
    %v416 = vtanh.pop %v400
    %v417 = vtanh.pop %v401
    %v418 = vtanh.pop %v402
    %v419 = vtanh.pop %v403
    %420 = vset.pattern.permute.xlu0 8
    %421 = vperm.xlu0 %420, %v44
    %v422 = vpop.permute.xlu0 %421
    %424 = vset.pattern.permute.xlu0 8
    %425 = vperm.xlu0 %424, %v45
    %v426 = vpop.permute.xlu0 %425
    %428 = vset.pattern.permute.xlu0 8
    %429 = vperm.xlu0 %428, %v46
    %v430 = vpop.permute.xlu0 %429
    %432 = vset.pattern.permute.xlu0 8
    %433 = vperm.xlu0 %432, %v47
    %v434 = vpop.permute.xlu0 %433
    %v436 = vmul.f32 %v422, %v404
    %v437 = vmul.f32 %v422, %v405
    %v438 = vmul.f32 %v422, %v406
    %v439 = vmul.f32 %v422, %v407
    %v440 = vmul.f32 %v426, %v408
    %v441 = vmul.f32 %v426, %v409
    %v442 = vmul.f32 %v426, %v410
    %v443 = vmul.f32 %v426, %v411
    %v444 = vmul.f32 %v430, %v412
    %v445 = vmul.f32 %v430, %v413
    %v446 = vmul.f32 %v430, %v414
    %v447 = vmul.f32 %v430, %v415
    %v448 = vmul.f32 %v434, %v416
    %v449 = vmul.f32 %v434, %v417
    %v450 = vmul.f32 %v434, %v418
    %v451 = vmul.f32 %v434, %v419
    %v452 = vadd.f32 %v388, %v436
    %v453 = vadd.f32 %v389, %v437
    %v454 = vadd.f32 %v390, %v438
    %v455 = vadd.f32 %v391, %v439
    %v456 = vadd.f32 %v392, %v440
    %v457 = vadd.f32 %v393, %v441
    %v458 = vadd.f32 %v394, %v442
    %v459 = vadd.f32 %v395, %v443
    %v460 = vadd.f32 %v396, %v444
    %v461 = vadd.f32 %v397, %v445
    %v462 = vadd.f32 %v398, %v446
    %v463 = vadd.f32 %v399, %v447
    %v464 = vadd.f32 %v400, %v448
    %v465 = vadd.f32 %v401, %v449
    %v466 = vadd.f32 %v402, %v450
    %v467 = vadd.f32 %v403, %v451
    %468 = vset.pattern.permute.xlu0 9
    %469 = vperm.xlu0 %468, %v44
    %v470 = vpop.permute.xlu0 %469
    %472 = vset.pattern.permute.xlu0 9
    %473 = vperm.xlu0 %472, %v45
    %v474 = vpop.permute.xlu0 %473
    %476 = vset.pattern.permute.xlu0 9
    %477 = vperm.xlu0 %476, %v46
    %v478 = vpop.permute.xlu0 %477
    %480 = vset.pattern.permute.xlu0 9
    %481 = vperm.xlu0 %480, %v47
    %v482 = vpop.permute.xlu0 %481
    %v484 = vmul.f32 %v470, %v196
    %v485 = vmul.f32 %v470, %v197
    %v486 = vmul.f32 %v470, %v198
    %v487 = vmul.f32 %v470, %v199
    %v488 = vmul.f32 %v474, %v200
    %v489 = vmul.f32 %v474, %v201
    %v490 = vmul.f32 %v474, %v202
    %v491 = vmul.f32 %v474, %v203
    %v492 = vmul.f32 %v478, %v204
    %v493 = vmul.f32 %v478, %v205
    %v494 = vmul.f32 %v478, %v206
    %v495 = vmul.f32 %v478, %v207
    %v496 = vmul.f32 %v482, %v208
    %v497 = vmul.f32 %v482, %v209
    %v498 = vmul.f32 %v482, %v210
    %v499 = vmul.f32 %v482, %v211
    %500 = vset.pattern.permute.xlu0 10
    %501 = vperm.xlu0 %500, %v44
    %v502 = vpop.permute.xlu0 %501
    %504 = vset.pattern.permute.xlu0 10
    %505 = vperm.xlu0 %504, %v45
    %v506 = vpop.permute.xlu0 %505
    %508 = vset.pattern.permute.xlu0 10
    %509 = vperm.xlu0 %508, %v46
    %v510 = vpop.permute.xlu0 %509
    %512 = vset.pattern.permute.xlu0 10
    %513 = vperm.xlu0 %512, %v47
    %v514 = vpop.permute.xlu0 %513
    %v516 = vmul.f32 %v502, %v324
    %v517 = vmul.f32 %v502, %v325
    %v518 = vmul.f32 %v502, %v326
    %v519 = vmul.f32 %v502, %v327
    %v520 = vmul.f32 %v506, %v328
    %v521 = vmul.f32 %v506, %v329
    %v522 = vmul.f32 %v506, %v330
    %v523 = vmul.f32 %v506, %v331
    %v524 = vmul.f32 %v510, %v332
    %v525 = vmul.f32 %v510, %v333
    %v526 = vmul.f32 %v510, %v334
    %v527 = vmul.f32 %v510, %v335
    %v528 = vmul.f32 %v514, %v336
    %v529 = vmul.f32 %v514, %v337
    %v530 = vmul.f32 %v514, %v338
    %v531 = vmul.f32 %v514, %v339
    %v532 = vadd.f32 %v484, %v516
    %v533 = vadd.f32 %v485, %v517
    %v534 = vadd.f32 %v486, %v518
    %v535 = vadd.f32 %v487, %v519
    %v536 = vadd.f32 %v488, %v520
    %v537 = vadd.f32 %v489, %v521
    %v538 = vadd.f32 %v490, %v522
    %v539 = vadd.f32 %v491, %v523
    %v540 = vadd.f32 %v492, %v524
    %v541 = vadd.f32 %v493, %v525
    %v542 = vadd.f32 %v494, %v526
    %v543 = vadd.f32 %v495, %v527
    %v544 = vadd.f32 %v496, %v528
    %v545 = vadd.f32 %v497, %v529
    %v546 = vadd.f32 %v498, %v530
    %v547 = vadd.f32 %v499, %v531
    %548 = vset.pattern.permute.xlu0 11
    %549 = vperm.xlu0 %548, %v44
    %v550 = vpop.permute.xlu0 %549
    %552 = vset.pattern.permute.xlu0 11
    %553 = vperm.xlu0 %552, %v45
    %v554 = vpop.permute.xlu0 %553
    %556 = vset.pattern.permute.xlu0 11
    %557 = vperm.xlu0 %556, %v46
    %v558 = vpop.permute.xlu0 %557
    %560 = vset.pattern.permute.xlu0 11
    %561 = vperm.xlu0 %560, %v47
    %v562 = vpop.permute.xlu0 %561
    %v564 = vmul.f32 %v550, %v452
    %v565 = vmul.f32 %v550, %v453
    %v566 = vmul.f32 %v550, %v454
    %v567 = vmul.f32 %v550, %v455
    %v568 = vmul.f32 %v554, %v456
    %v569 = vmul.f32 %v554, %v457
    %v570 = vmul.f32 %v554, %v458
    %v571 = vmul.f32 %v554, %v459
    %v572 = vmul.f32 %v558, %v460
    %v573 = vmul.f32 %v558, %v461
    %v574 = vmul.f32 %v558, %v462
    %v575 = vmul.f32 %v558, %v463
    %v576 = vmul.f32 %v562, %v464
    %v577 = vmul.f32 %v562, %v465
    %v578 = vmul.f32 %v562, %v466
    %v579 = vmul.f32 %v562, %v467
    %v580 = vadd.f32 %v532, %v564
    %v581 = vadd.f32 %v533, %v565
    %v582 = vadd.f32 %v534, %v566
    %v583 = vadd.f32 %v535, %v567
    %v584 = vadd.f32 %v536, %v568
    %v585 = vadd.f32 %v537, %v569
    %v586 = vadd.f32 %v538, %v570
    %v587 = vadd.f32 %v539, %v571
    %v588 = vadd.f32 %v540, %v572
    %v589 = vadd.f32 %v541, %v573
    %v590 = vadd.f32 %v542, %v574
    %v591 = vadd.f32 %v543, %v575
    %v592 = vadd.f32 %v544, %v576
    %v593 = vadd.f32 %v545, %v577
    %v594 = vadd.f32 %v546, %v578
    %v595 = vadd.f32 %v547, %v579
    %596 = vset.pattern.permute.xlu0 18
    %597 = vperm.xlu0 %596, %v44
    %v598 = vpop.permute.xlu0 %597
    %600 = vset.pattern.permute.xlu0 18
    %601 = vperm.xlu0 %600, %v45
    %v602 = vpop.permute.xlu0 %601
    %604 = vset.pattern.permute.xlu0 18
    %605 = vperm.xlu0 %604, %v46
    %v606 = vpop.permute.xlu0 %605
    %608 = vset.pattern.permute.xlu0 18
    %609 = vperm.xlu0 %608, %v47
    %v610 = vpop.permute.xlu0 %609
    %v612 = vadd.f32 %v580, %v598
    %v613 = vadd.f32 %v581, %v598
    %v614 = vadd.f32 %v582, %v598
    %v615 = vadd.f32 %v583, %v598
    %v616 = vadd.f32 %v584, %v602
    %v617 = vadd.f32 %v585, %v602
    %v618 = vadd.f32 %v586, %v602
    %v619 = vadd.f32 %v587, %v602
    %v620 = vadd.f32 %v588, %v606
    %v621 = vadd.f32 %v589, %v606
    %v622 = vadd.f32 %v590, %v606
    %v623 = vadd.f32 %v591, %v606
    %v624 = vadd.f32 %v592, %v610
    %v625 = vadd.f32 %v593, %v610
    %v626 = vadd.f32 %v594, %v610
    %v627 = vadd.f32 %v595, %v610
    %v628 = vtanh.pop %v612
    %v629 = vtanh.pop %v613
    %v630 = vtanh.pop %v614
    %v631 = vtanh.pop %v615
    %v632 = vtanh.pop %v616
    %v633 = vtanh.pop %v617
    %v634 = vtanh.pop %v618
    %v635 = vtanh.pop %v619
    %v636 = vtanh.pop %v620
    %v637 = vtanh.pop %v621
    %v638 = vtanh.pop %v622
    %v639 = vtanh.pop %v623
    %v640 = vtanh.pop %v624
    %v641 = vtanh.pop %v625
    %v642 = vtanh.pop %v626
    %v643 = vtanh.pop %v627
    %644 = vset.pattern.permute.xlu0 21
    %645 = vperm.xlu0 %644, %v44
    %v646 = vpop.permute.xlu0 %645
    %648 = vset.pattern.permute.xlu0 21
    %649 = vperm.xlu0 %648, %v45
    %v650 = vpop.permute.xlu0 %649
    %652 = vset.pattern.permute.xlu0 21
    %653 = vperm.xlu0 %652, %v46
    %v654 = vpop.permute.xlu0 %653
    %656 = vset.pattern.permute.xlu0 21
    %657 = vperm.xlu0 %656, %v47
    %v658 = vpop.permute.xlu0 %657
    %v660 = vmul.f32 %v646, %v628
    %v661 = vmul.f32 %v646, %v629
    %v662 = vmul.f32 %v646, %v630
    %v663 = vmul.f32 %v646, %v631
    %v664 = vmul.f32 %v650, %v632
    %v665 = vmul.f32 %v650, %v633
    %v666 = vmul.f32 %v650, %v634
    %v667 = vmul.f32 %v650, %v635
    %v668 = vmul.f32 %v654, %v636
    %v669 = vmul.f32 %v654, %v637
    %v670 = vmul.f32 %v654, %v638
    %v671 = vmul.f32 %v654, %v639
    %v672 = vmul.f32 %v658, %v640
    %v673 = vmul.f32 %v658, %v641
    %v674 = vmul.f32 %v658, %v642
    %v675 = vmul.f32 %v658, %v643
    %v676 = vadd.f32 %v612, %v660
    %v677 = vadd.f32 %v613, %v661
    %v678 = vadd.f32 %v614, %v662
    %v679 = vadd.f32 %v615, %v663
    %v680 = vadd.f32 %v616, %v664
    %v681 = vadd.f32 %v617, %v665
    %v682 = vadd.f32 %v618, %v666
    %v683 = vadd.f32 %v619, %v667
    %v684 = vadd.f32 %v620, %v668
    %v685 = vadd.f32 %v621, %v669
    %v686 = vadd.f32 %v622, %v670
    %v687 = vadd.f32 %v623, %v671
    %v688 = vadd.f32 %v624, %v672
    %v689 = vadd.f32 %v625, %v673
    %v690 = vadd.f32 %v626, %v674
    %v691 = vadd.f32 %v627, %v675
    %692 = vset.pattern.permute.xlu0 12
    %693 = vperm.xlu0 %692, %v44
    %v694 = vpop.permute.xlu0 %693
    %696 = vset.pattern.permute.xlu0 12
    %697 = vperm.xlu0 %696, %v45
    %v698 = vpop.permute.xlu0 %697
    %700 = vset.pattern.permute.xlu0 12
    %701 = vperm.xlu0 %700, %v46
    %v702 = vpop.permute.xlu0 %701
    %704 = vset.pattern.permute.xlu0 12
    %705 = vperm.xlu0 %704, %v47
    %v706 = vpop.permute.xlu0 %705
    %v708 = vmul.f32 %v694, %v196
    %v709 = vmul.f32 %v694, %v197
    %v710 = vmul.f32 %v694, %v198
    %v711 = vmul.f32 %v694, %v199
    %v712 = vmul.f32 %v698, %v200
    %v713 = vmul.f32 %v698, %v201
    %v714 = vmul.f32 %v698, %v202
    %v715 = vmul.f32 %v698, %v203
    %v716 = vmul.f32 %v702, %v204
    %v717 = vmul.f32 %v702, %v205
    %v718 = vmul.f32 %v702, %v206
    %v719 = vmul.f32 %v702, %v207
    %v720 = vmul.f32 %v706, %v208
    %v721 = vmul.f32 %v706, %v209
    %v722 = vmul.f32 %v706, %v210
    %v723 = vmul.f32 %v706, %v211
    %724 = vset.pattern.permute.xlu0 13
    %725 = vperm.xlu0 %724, %v44
    %v726 = vpop.permute.xlu0 %725
    %728 = vset.pattern.permute.xlu0 13
    %729 = vperm.xlu0 %728, %v45
    %v730 = vpop.permute.xlu0 %729
    %732 = vset.pattern.permute.xlu0 13
    %733 = vperm.xlu0 %732, %v46
    %v734 = vpop.permute.xlu0 %733
    %736 = vset.pattern.permute.xlu0 13
    %737 = vperm.xlu0 %736, %v47
    %v738 = vpop.permute.xlu0 %737
    %v740 = vmul.f32 %v726, %v324
    %v741 = vmul.f32 %v726, %v325
    %v742 = vmul.f32 %v726, %v326
    %v743 = vmul.f32 %v726, %v327
    %v744 = vmul.f32 %v730, %v328
    %v745 = vmul.f32 %v730, %v329
    %v746 = vmul.f32 %v730, %v330
    %v747 = vmul.f32 %v730, %v331
    %v748 = vmul.f32 %v734, %v332
    %v749 = vmul.f32 %v734, %v333
    %v750 = vmul.f32 %v734, %v334
    %v751 = vmul.f32 %v734, %v335
    %v752 = vmul.f32 %v738, %v336
    %v753 = vmul.f32 %v738, %v337
    %v754 = vmul.f32 %v738, %v338
    %v755 = vmul.f32 %v738, %v339
    %v756 = vadd.f32 %v708, %v740
    %v757 = vadd.f32 %v709, %v741
    %v758 = vadd.f32 %v710, %v742
    %v759 = vadd.f32 %v711, %v743
    %v760 = vadd.f32 %v712, %v744
    %v761 = vadd.f32 %v713, %v745
    %v762 = vadd.f32 %v714, %v746
    %v763 = vadd.f32 %v715, %v747
    %v764 = vadd.f32 %v716, %v748
    %v765 = vadd.f32 %v717, %v749
    %v766 = vadd.f32 %v718, %v750
    %v767 = vadd.f32 %v719, %v751
    %v768 = vadd.f32 %v720, %v752
    %v769 = vadd.f32 %v721, %v753
    %v770 = vadd.f32 %v722, %v754
    %v771 = vadd.f32 %v723, %v755
    %772 = vset.pattern.permute.xlu0 14
    %773 = vperm.xlu0 %772, %v44
    %v774 = vpop.permute.xlu0 %773
    %776 = vset.pattern.permute.xlu0 14
    %777 = vperm.xlu0 %776, %v45
    %v778 = vpop.permute.xlu0 %777
    %780 = vset.pattern.permute.xlu0 14
    %781 = vperm.xlu0 %780, %v46
    %v782 = vpop.permute.xlu0 %781
    %784 = vset.pattern.permute.xlu0 14
    %785 = vperm.xlu0 %784, %v47
    %v786 = vpop.permute.xlu0 %785
    %v788 = vmul.f32 %v774, %v452
    %v789 = vmul.f32 %v774, %v453
    %v790 = vmul.f32 %v774, %v454
    %v791 = vmul.f32 %v774, %v455
    %v792 = vmul.f32 %v778, %v456
    %v793 = vmul.f32 %v778, %v457
    %v794 = vmul.f32 %v778, %v458
    %v795 = vmul.f32 %v778, %v459
    %v796 = vmul.f32 %v782, %v460
    %v797 = vmul.f32 %v782, %v461
    %v798 = vmul.f32 %v782, %v462
    %v799 = vmul.f32 %v782, %v463
    %v800 = vmul.f32 %v786, %v464
    %v801 = vmul.f32 %v786, %v465
    %v802 = vmul.f32 %v786, %v466
    %v803 = vmul.f32 %v786, %v467
    %v804 = vadd.f32 %v756, %v788
    %v805 = vadd.f32 %v757, %v789
    %v806 = vadd.f32 %v758, %v790
    %v807 = vadd.f32 %v759, %v791
    %v808 = vadd.f32 %v760, %v792
    %v809 = vadd.f32 %v761, %v793
    %v810 = vadd.f32 %v762, %v794
    %v811 = vadd.f32 %v763, %v795
    %v812 = vadd.f32 %v764, %v796
    %v813 = vadd.f32 %v765, %v797
    %v814 = vadd.f32 %v766, %v798
    %v815 = vadd.f32 %v767, %v799
    %v816 = vadd.f32 %v768, %v800
    %v817 = vadd.f32 %v769, %v801
    %v818 = vadd.f32 %v770, %v802
    %v819 = vadd.f32 %v771, %v803
    %820 = vset.pattern.permute.xlu0 19
    %821 = vperm.xlu0 %820, %v44
    %v822 = vpop.permute.xlu0 %821
    %824 = vset.pattern.permute.xlu0 19
    %825 = vperm.xlu0 %824, %v45
    %v826 = vpop.permute.xlu0 %825
    %828 = vset.pattern.permute.xlu0 19
    %829 = vperm.xlu0 %828, %v46
    %v830 = vpop.permute.xlu0 %829
    %832 = vset.pattern.permute.xlu0 19
    %833 = vperm.xlu0 %832, %v47
    %v834 = vpop.permute.xlu0 %833
    %v836 = vadd.f32 %v804, %v822
    %v837 = vadd.f32 %v805, %v822
    %v838 = vadd.f32 %v806, %v822
    %v839 = vadd.f32 %v807, %v822
    %v840 = vadd.f32 %v808, %v826
    %v841 = vadd.f32 %v809, %v826
    %v842 = vadd.f32 %v810, %v826
    %v843 = vadd.f32 %v811, %v826
    %v844 = vadd.f32 %v812, %v830
    %v845 = vadd.f32 %v813, %v830
    %v846 = vadd.f32 %v814, %v830
    %v847 = vadd.f32 %v815, %v830
    %v848 = vadd.f32 %v816, %v834
    %v849 = vadd.f32 %v817, %v834
    %v850 = vadd.f32 %v818, %v834
    %v851 = vadd.f32 %v819, %v834
    %v852 = vtanh.pop %v836
    %v853 = vtanh.pop %v837
    %v854 = vtanh.pop %v838
    %v855 = vtanh.pop %v839
    %v856 = vtanh.pop %v840
    %v857 = vtanh.pop %v841
    %v858 = vtanh.pop %v842
    %v859 = vtanh.pop %v843
    %v860 = vtanh.pop %v844
    %v861 = vtanh.pop %v845
    %v862 = vtanh.pop %v846
    %v863 = vtanh.pop %v847
    %v864 = vtanh.pop %v848
    %v865 = vtanh.pop %v849
    %v866 = vtanh.pop %v850
    %v867 = vtanh.pop %v851
    %868 = vset.pattern.permute.xlu0 22
    %869 = vperm.xlu0 %868, %v44
    %v870 = vpop.permute.xlu0 %869
    %872 = vset.pattern.permute.xlu0 22
    %873 = vperm.xlu0 %872, %v45
    %v874 = vpop.permute.xlu0 %873
    %876 = vset.pattern.permute.xlu0 22
    %877 = vperm.xlu0 %876, %v46
    %v878 = vpop.permute.xlu0 %877
    %880 = vset.pattern.permute.xlu0 22
    %881 = vperm.xlu0 %880, %v47
    %v882 = vpop.permute.xlu0 %881
    %v884 = vmul.f32 %v870, %v852
    %v885 = vmul.f32 %v870, %v853
    %v886 = vmul.f32 %v870, %v854
    %v887 = vmul.f32 %v870, %v855
    %v888 = vmul.f32 %v874, %v856
    %v889 = vmul.f32 %v874, %v857
    %v890 = vmul.f32 %v874, %v858
    %v891 = vmul.f32 %v874, %v859
    %v892 = vmul.f32 %v878, %v860
    %v893 = vmul.f32 %v878, %v861
    %v894 = vmul.f32 %v878, %v862
    %v895 = vmul.f32 %v878, %v863
    %v896 = vmul.f32 %v882, %v864
    %v897 = vmul.f32 %v882, %v865
    %v898 = vmul.f32 %v882, %v866
    %v899 = vmul.f32 %v882, %v867
    %v900 = vadd.f32 %v836, %v884
    %v901 = vadd.f32 %v837, %v885
    %v902 = vadd.f32 %v838, %v886
    %v903 = vadd.f32 %v839, %v887
    %v904 = vadd.f32 %v840, %v888
    %v905 = vadd.f32 %v841, %v889
    %v906 = vadd.f32 %v842, %v890
    %v907 = vadd.f32 %v843, %v891
    %v908 = vadd.f32 %v844, %v892
    %v909 = vadd.f32 %v845, %v893
    %v910 = vadd.f32 %v846, %v894
    %v911 = vadd.f32 %v847, %v895
    %v912 = vadd.f32 %v848, %v896
    %v913 = vadd.f32 %v849, %v897
    %v914 = vadd.f32 %v850, %v898
    %v915 = vadd.f32 %v851, %v899
    %916 = vset.pattern.permute.xlu0 15
    %917 = vperm.xlu0 %916, %v44
    %v918 = vpop.permute.xlu0 %917
    %920 = vset.pattern.permute.xlu0 15
    %921 = vperm.xlu0 %920, %v45
    %v922 = vpop.permute.xlu0 %921
    %924 = vset.pattern.permute.xlu0 15
    %925 = vperm.xlu0 %924, %v46
    %v926 = vpop.permute.xlu0 %925
    %928 = vset.pattern.permute.xlu0 15
    %929 = vperm.xlu0 %928, %v47
    %v930 = vpop.permute.xlu0 %929
    %v932 = vmul.f32 %v918, %v196
    %v933 = vmul.f32 %v918, %v197
    %v934 = vmul.f32 %v918, %v198
    %v935 = vmul.f32 %v918, %v199
    %v936 = vmul.f32 %v922, %v200
    %v937 = vmul.f32 %v922, %v201
    %v938 = vmul.f32 %v922, %v202
    %v939 = vmul.f32 %v922, %v203
    %v940 = vmul.f32 %v926, %v204
    %v941 = vmul.f32 %v926, %v205
    %v942 = vmul.f32 %v926, %v206
    %v943 = vmul.f32 %v926, %v207
    %v944 = vmul.f32 %v930, %v208
    %v945 = vmul.f32 %v930, %v209
    %v946 = vmul.f32 %v930, %v210
    %v947 = vmul.f32 %v930, %v211
    %948 = vset.pattern.permute.xlu0 16
    %949 = vperm.xlu0 %948, %v44
    %v950 = vpop.permute.xlu0 %949
    %952 = vset.pattern.permute.xlu0 16
    %953 = vperm.xlu0 %952, %v45
    %v954 = vpop.permute.xlu0 %953
    %956 = vset.pattern.permute.xlu0 16
    %957 = vperm.xlu0 %956, %v46
    %v958 = vpop.permute.xlu0 %957
    %960 = vset.pattern.permute.xlu0 16
    %961 = vperm.xlu0 %960, %v47
    %v962 = vpop.permute.xlu0 %961
    %v964 = vmul.f32 %v950, %v324
    %v965 = vmul.f32 %v950, %v325
    %v966 = vmul.f32 %v950, %v326
    %v967 = vmul.f32 %v950, %v327
    %v968 = vmul.f32 %v954, %v328
    %v969 = vmul.f32 %v954, %v329
    %v970 = vmul.f32 %v954, %v330
    %v971 = vmul.f32 %v954, %v331
    %v972 = vmul.f32 %v958, %v332
    %v973 = vmul.f32 %v958, %v333
    %v974 = vmul.f32 %v958, %v334
    %v975 = vmul.f32 %v958, %v335
    %v976 = vmul.f32 %v962, %v336
    %v977 = vmul.f32 %v962, %v337
    %v978 = vmul.f32 %v962, %v338
    %v979 = vmul.f32 %v962, %v339
    %v980 = vadd.f32 %v932, %v964
    %v981 = vadd.f32 %v933, %v965
    %v982 = vadd.f32 %v934, %v966
    %v983 = vadd.f32 %v935, %v967
    %v984 = vadd.f32 %v936, %v968
    %v985 = vadd.f32 %v937, %v969
    %v986 = vadd.f32 %v938, %v970
    %v987 = vadd.f32 %v939, %v971
    %v988 = vadd.f32 %v940, %v972
    %v989 = vadd.f32 %v941, %v973
    %v990 = vadd.f32 %v942, %v974
    %v991 = vadd.f32 %v943, %v975
    %v992 = vadd.f32 %v944, %v976
    %v993 = vadd.f32 %v945, %v977
    %v994 = vadd.f32 %v946, %v978
    %v995 = vadd.f32 %v947, %v979
    %996 = vset.pattern.permute.xlu0 17
    %997 = vperm.xlu0 %996, %v44
    %v998 = vpop.permute.xlu0 %997
    %1000 = vset.pattern.permute.xlu0 17
    %1001 = vperm.xlu0 %1000, %v45
    %v1002 = vpop.permute.xlu0 %1001
    %1004 = vset.pattern.permute.xlu0 17
    %1005 = vperm.xlu0 %1004, %v46
    %v1006 = vpop.permute.xlu0 %1005
    %1008 = vset.pattern.permute.xlu0 17
    %1009 = vperm.xlu0 %1008, %v47
    %v1010 = vpop.permute.xlu0 %1009
    %v1012 = vmul.f32 %v998, %v452
    %v1013 = vmul.f32 %v998, %v453
    %v1014 = vmul.f32 %v998, %v454
    %v1015 = vmul.f32 %v998, %v455
    %v1016 = vmul.f32 %v1002, %v456
    %v1017 = vmul.f32 %v1002, %v457
    %v1018 = vmul.f32 %v1002, %v458
    %v1019 = vmul.f32 %v1002, %v459
    %v1020 = vmul.f32 %v1006, %v460
    %v1021 = vmul.f32 %v1006, %v461
    %v1022 = vmul.f32 %v1006, %v462
    %v1023 = vmul.f32 %v1006, %v463
    %v1024 = vmul.f32 %v1010, %v464
    %v1025 = vmul.f32 %v1010, %v465
    %v1026 = vmul.f32 %v1010, %v466
    %v1027 = vmul.f32 %v1010, %v467
    %v1028 = vadd.f32 %v980, %v1012
    %v1029 = vadd.f32 %v981, %v1013
    %v1030 = vadd.f32 %v982, %v1014
    %v1031 = vadd.f32 %v983, %v1015
    %v1032 = vadd.f32 %v984, %v1016
    %v1033 = vadd.f32 %v985, %v1017
    %v1034 = vadd.f32 %v986, %v1018
    %v1035 = vadd.f32 %v987, %v1019
    %v1036 = vadd.f32 %v988, %v1020
    %v1037 = vadd.f32 %v989, %v1021
    %v1038 = vadd.f32 %v990, %v1022
    %v1039 = vadd.f32 %v991, %v1023
    %v1040 = vadd.f32 %v992, %v1024
    %v1041 = vadd.f32 %v993, %v1025
    %v1042 = vadd.f32 %v994, %v1026
    %v1043 = vadd.f32 %v995, %v1027
    %1044 = vset.pattern.permute.xlu0 20
    %1045 = vperm.xlu0 %1044, %v44
    %v1046 = vpop.permute.xlu0 %1045
    %1048 = vset.pattern.permute.xlu0 20
    %1049 = vperm.xlu0 %1048, %v45
    %v1050 = vpop.permute.xlu0 %1049
    %1052 = vset.pattern.permute.xlu0 20
    %1053 = vperm.xlu0 %1052, %v46
    %v1054 = vpop.permute.xlu0 %1053
    %1056 = vset.pattern.permute.xlu0 20
    %1057 = vperm.xlu0 %1056, %v47
    %v1058 = vpop.permute.xlu0 %1057
    %v1060 = vadd.f32 %v1028, %v1046
    %v1061 = vadd.f32 %v1029, %v1046
    %v1062 = vadd.f32 %v1030, %v1046
    %v1063 = vadd.f32 %v1031, %v1046
    %v1064 = vadd.f32 %v1032, %v1050
    %v1065 = vadd.f32 %v1033, %v1050
    %v1066 = vadd.f32 %v1034, %v1050
    %v1067 = vadd.f32 %v1035, %v1050
    %v1068 = vadd.f32 %v1036, %v1054
    %v1069 = vadd.f32 %v1037, %v1054
    %v1070 = vadd.f32 %v1038, %v1054
    %v1071 = vadd.f32 %v1039, %v1054
    %v1072 = vadd.f32 %v1040, %v1058
    %v1073 = vadd.f32 %v1041, %v1058
    %v1074 = vadd.f32 %v1042, %v1058
    %v1075 = vadd.f32 %v1043, %v1058
    %v1076 = vtanh.pop %v1060
    %v1077 = vtanh.pop %v1061
    %v1078 = vtanh.pop %v1062
    %v1079 = vtanh.pop %v1063
    %v1080 = vtanh.pop %v1064
    %v1081 = vtanh.pop %v1065
    %v1082 = vtanh.pop %v1066
    %v1083 = vtanh.pop %v1067
    %v1084 = vtanh.pop %v1068
    %v1085 = vtanh.pop %v1069
    %v1086 = vtanh.pop %v1070
    %v1087 = vtanh.pop %v1071
    %v1088 = vtanh.pop %v1072
    %v1089 = vtanh.pop %v1073
    %v1090 = vtanh.pop %v1074
    %v1091 = vtanh.pop %v1075
    %1092 = vset.pattern.permute.xlu0 23
    %1093 = vperm.xlu0 %1092, %v44
    %v1094 = vpop.permute.xlu0 %1093
    %1096 = vset.pattern.permute.xlu0 23
    %1097 = vperm.xlu0 %1096, %v45
    %v1098 = vpop.permute.xlu0 %1097
    %1100 = vset.pattern.permute.xlu0 23
    %1101 = vperm.xlu0 %1100, %v46
    %v1102 = vpop.permute.xlu0 %1101
    %1104 = vset.pattern.permute.xlu0 23
    %1105 = vperm.xlu0 %1104, %v47
    %v1106 = vpop.permute.xlu0 %1105
    %v1108 = vmul.f32 %v1094, %v1076
    %v1109 = vmul.f32 %v1094, %v1077
    %v1110 = vmul.f32 %v1094, %v1078
    %v1111 = vmul.f32 %v1094, %v1079
    %v1112 = vmul.f32 %v1098, %v1080
    %v1113 = vmul.f32 %v1098, %v1081
    %v1114 = vmul.f32 %v1098, %v1082
    %v1115 = vmul.f32 %v1098, %v1083
    %v1116 = vmul.f32 %v1102, %v1084
    %v1117 = vmul.f32 %v1102, %v1085
    %v1118 = vmul.f32 %v1102, %v1086
    %v1119 = vmul.f32 %v1102, %v1087
    %v1120 = vmul.f32 %v1106, %v1088
    %v1121 = vmul.f32 %v1106, %v1089
    %v1122 = vmul.f32 %v1106, %v1090
    %v1123 = vmul.f32 %v1106, %v1091
    %v1124 = vadd.f32 %v1060, %v1108
    %v1125 = vadd.f32 %v1061, %v1109
    %v1126 = vadd.f32 %v1062, %v1110
    %v1127 = vadd.f32 %v1063, %v1111
    %v1128 = vadd.f32 %v1064, %v1112
    %v1129 = vadd.f32 %v1065, %v1113
    %v1130 = vadd.f32 %v1066, %v1114
    %v1131 = vadd.f32 %v1067, %v1115
    %v1132 = vadd.f32 %v1068, %v1116
    %v1133 = vadd.f32 %v1069, %v1117
    %v1134 = vadd.f32 %v1070, %v1118
    %v1135 = vadd.f32 %v1071, %v1119
    %v1136 = vadd.f32 %v1072, %v1120
    %v1137 = vadd.f32 %v1073, %v1121
    %v1138 = vadd.f32 %v1074, %v1122
    %v1139 = vadd.f32 %v1075, %v1123
    %1140 = vset.pattern.permute.xlu0 24
    %1141 = vperm.xlu0 %1140, %v44
    %v1142 = vpop.permute.xlu0 %1141
    %1144 = vset.pattern.permute.xlu0 24
    %1145 = vperm.xlu0 %1144, %v45
    %v1146 = vpop.permute.xlu0 %1145
    %1148 = vset.pattern.permute.xlu0 24
    %1149 = vperm.xlu0 %1148, %v46
    %v1150 = vpop.permute.xlu0 %1149
    %1152 = vset.pattern.permute.xlu0 24
    %1153 = vperm.xlu0 %1152, %v47
    %v1154 = vpop.permute.xlu0 %1153
    %v1156 = vmul.f32 %v1142, %v676
    %v1157 = vmul.f32 %v1142, %v677
    %v1158 = vmul.f32 %v1142, %v678
    %v1159 = vmul.f32 %v1142, %v679
    %v1160 = vmul.f32 %v1146, %v680
    %v1161 = vmul.f32 %v1146, %v681
    %v1162 = vmul.f32 %v1146, %v682
    %v1163 = vmul.f32 %v1146, %v683
    %v1164 = vmul.f32 %v1150, %v684
    %v1165 = vmul.f32 %v1150, %v685
    %v1166 = vmul.f32 %v1150, %v686
    %v1167 = vmul.f32 %v1150, %v687
    %v1168 = vmul.f32 %v1154, %v688
    %v1169 = vmul.f32 %v1154, %v689
    %v1170 = vmul.f32 %v1154, %v690
    %v1171 = vmul.f32 %v1154, %v691
    %1172 = vset.pattern.permute.xlu0 25
    %1173 = vperm.xlu0 %1172, %v44
    %v1174 = vpop.permute.xlu0 %1173
    %1176 = vset.pattern.permute.xlu0 25
    %1177 = vperm.xlu0 %1176, %v45
    %v1178 = vpop.permute.xlu0 %1177
    %1180 = vset.pattern.permute.xlu0 25
    %1181 = vperm.xlu0 %1180, %v46
    %v1182 = vpop.permute.xlu0 %1181
    %1184 = vset.pattern.permute.xlu0 25
    %1185 = vperm.xlu0 %1184, %v47
    %v1186 = vpop.permute.xlu0 %1185
    %v1188 = vmul.f32 %v1174, %v900
    %v1189 = vmul.f32 %v1174, %v901
    %v1190 = vmul.f32 %v1174, %v902
    %v1191 = vmul.f32 %v1174, %v903
    %v1192 = vmul.f32 %v1178, %v904
    %v1193 = vmul.f32 %v1178, %v905
    %v1194 = vmul.f32 %v1178, %v906
    %v1195 = vmul.f32 %v1178, %v907
    %v1196 = vmul.f32 %v1182, %v908
    %v1197 = vmul.f32 %v1182, %v909
    %v1198 = vmul.f32 %v1182, %v910
    %v1199 = vmul.f32 %v1182, %v911
    %v1200 = vmul.f32 %v1186, %v912
    %v1201 = vmul.f32 %v1186, %v913
    %v1202 = vmul.f32 %v1186, %v914
    %v1203 = vmul.f32 %v1186, %v915
    %v1204 = vadd.f32 %v1156, %v1188
    %v1205 = vadd.f32 %v1157, %v1189
    %v1206 = vadd.f32 %v1158, %v1190
    %v1207 = vadd.f32 %v1159, %v1191
    %v1208 = vadd.f32 %v1160, %v1192
    %v1209 = vadd.f32 %v1161, %v1193
    %v1210 = vadd.f32 %v1162, %v1194
    %v1211 = vadd.f32 %v1163, %v1195
    %v1212 = vadd.f32 %v1164, %v1196
    %v1213 = vadd.f32 %v1165, %v1197
    %v1214 = vadd.f32 %v1166, %v1198
    %v1215 = vadd.f32 %v1167, %v1199
    %v1216 = vadd.f32 %v1168, %v1200
    %v1217 = vadd.f32 %v1169, %v1201
    %v1218 = vadd.f32 %v1170, %v1202
    %v1219 = vadd.f32 %v1171, %v1203
    %1220 = vset.pattern.permute.xlu0 26
    %1221 = vperm.xlu0 %1220, %v44
    %v1222 = vpop.permute.xlu0 %1221
    %1224 = vset.pattern.permute.xlu0 26
    %1225 = vperm.xlu0 %1224, %v45
    %v1226 = vpop.permute.xlu0 %1225
    %1228 = vset.pattern.permute.xlu0 26
    %1229 = vperm.xlu0 %1228, %v46
    %v1230 = vpop.permute.xlu0 %1229
    %1232 = vset.pattern.permute.xlu0 26
    %1233 = vperm.xlu0 %1232, %v47
    %v1234 = vpop.permute.xlu0 %1233
    %v1236 = vmul.f32 %v1222, %v1124
    %v1237 = vmul.f32 %v1222, %v1125
    %v1238 = vmul.f32 %v1222, %v1126
    %v1239 = vmul.f32 %v1222, %v1127
    %v1240 = vmul.f32 %v1226, %v1128
    %v1241 = vmul.f32 %v1226, %v1129
    %v1242 = vmul.f32 %v1226, %v1130
    %v1243 = vmul.f32 %v1226, %v1131
    %v1244 = vmul.f32 %v1230, %v1132
    %v1245 = vmul.f32 %v1230, %v1133
    %v1246 = vmul.f32 %v1230, %v1134
    %v1247 = vmul.f32 %v1230, %v1135
    %v1248 = vmul.f32 %v1234, %v1136
    %v1249 = vmul.f32 %v1234, %v1137
    %v1250 = vmul.f32 %v1234, %v1138
    %v1251 = vmul.f32 %v1234, %v1139
    %v1252 = vadd.f32 %v1204, %v1236
    %v1253 = vadd.f32 %v1205, %v1237
    %v1254 = vadd.f32 %v1206, %v1238
    %v1255 = vadd.f32 %v1207, %v1239
    %v1256 = vadd.f32 %v1208, %v1240
    %v1257 = vadd.f32 %v1209, %v1241
    %v1258 = vadd.f32 %v1210, %v1242
    %v1259 = vadd.f32 %v1211, %v1243
    %v1260 = vadd.f32 %v1212, %v1244
    %v1261 = vadd.f32 %v1213, %v1245
    %v1262 = vadd.f32 %v1214, %v1246
    %v1263 = vadd.f32 %v1215, %v1247
    %v1264 = vadd.f32 %v1216, %v1248
    %v1265 = vadd.f32 %v1217, %v1249
    %v1266 = vadd.f32 %v1218, %v1250
    %v1267 = vadd.f32 %v1219, %v1251
    %1268 = vset.pattern.permute.xlu0 33
    %1269 = vperm.xlu0 %1268, %v44
    %v1270 = vpop.permute.xlu0 %1269
    %1272 = vset.pattern.permute.xlu0 33
    %1273 = vperm.xlu0 %1272, %v45
    %v1274 = vpop.permute.xlu0 %1273
    %1276 = vset.pattern.permute.xlu0 33
    %1277 = vperm.xlu0 %1276, %v46
    %v1278 = vpop.permute.xlu0 %1277
    %1280 = vset.pattern.permute.xlu0 33
    %1281 = vperm.xlu0 %1280, %v47
    %v1282 = vpop.permute.xlu0 %1281
    %v1284 = vadd.f32 %v1252, %v1270
    %v1285 = vadd.f32 %v1253, %v1270
    %v1286 = vadd.f32 %v1254, %v1270
    %v1287 = vadd.f32 %v1255, %v1270
    %v1288 = vadd.f32 %v1256, %v1274
    %v1289 = vadd.f32 %v1257, %v1274
    %v1290 = vadd.f32 %v1258, %v1274
    %v1291 = vadd.f32 %v1259, %v1274
    %v1292 = vadd.f32 %v1260, %v1278
    %v1293 = vadd.f32 %v1261, %v1278
    %v1294 = vadd.f32 %v1262, %v1278
    %v1295 = vadd.f32 %v1263, %v1278
    %v1296 = vadd.f32 %v1264, %v1282
    %v1297 = vadd.f32 %v1265, %v1282
    %v1298 = vadd.f32 %v1266, %v1282
    %v1299 = vadd.f32 %v1267, %v1282
    %v1300 = vtanh.pop %v1284
    %v1301 = vtanh.pop %v1285
    %v1302 = vtanh.pop %v1286
    %v1303 = vtanh.pop %v1287
    %v1304 = vtanh.pop %v1288
    %v1305 = vtanh.pop %v1289
    %v1306 = vtanh.pop %v1290
    %v1307 = vtanh.pop %v1291
    %v1308 = vtanh.pop %v1292
    %v1309 = vtanh.pop %v1293
    %v1310 = vtanh.pop %v1294
    %v1311 = vtanh.pop %v1295
    %v1312 = vtanh.pop %v1296
    %v1313 = vtanh.pop %v1297
    %v1314 = vtanh.pop %v1298
    %v1315 = vtanh.pop %v1299
    %1316 = vset.pattern.permute.xlu0 36
    %1317 = vperm.xlu0 %1316, %v44
    %v1318 = vpop.permute.xlu0 %1317
    %1320 = vset.pattern.permute.xlu0 36
    %1321 = vperm.xlu0 %1320, %v45
    %v1322 = vpop.permute.xlu0 %1321
    %1324 = vset.pattern.permute.xlu0 36
    %1325 = vperm.xlu0 %1324, %v46
    %v1326 = vpop.permute.xlu0 %1325
    %1328 = vset.pattern.permute.xlu0 36
    %1329 = vperm.xlu0 %1328, %v47
    %v1330 = vpop.permute.xlu0 %1329
    %v1332 = vmul.f32 %v1318, %v1300
    %v1333 = vmul.f32 %v1318, %v1301
    %v1334 = vmul.f32 %v1318, %v1302
    %v1335 = vmul.f32 %v1318, %v1303
    %v1336 = vmul.f32 %v1322, %v1304
    %v1337 = vmul.f32 %v1322, %v1305
    %v1338 = vmul.f32 %v1322, %v1306
    %v1339 = vmul.f32 %v1322, %v1307
    %v1340 = vmul.f32 %v1326, %v1308
    %v1341 = vmul.f32 %v1326, %v1309
    %v1342 = vmul.f32 %v1326, %v1310
    %v1343 = vmul.f32 %v1326, %v1311
    %v1344 = vmul.f32 %v1330, %v1312
    %v1345 = vmul.f32 %v1330, %v1313
    %v1346 = vmul.f32 %v1330, %v1314
    %v1347 = vmul.f32 %v1330, %v1315
    %v1348 = vadd.f32 %v1284, %v1332
    %v1349 = vadd.f32 %v1285, %v1333
    %v1350 = vadd.f32 %v1286, %v1334
    %v1351 = vadd.f32 %v1287, %v1335
    %v1352 = vadd.f32 %v1288, %v1336
    %v1353 = vadd.f32 %v1289, %v1337
    %v1354 = vadd.f32 %v1290, %v1338
    %v1355 = vadd.f32 %v1291, %v1339
    %v1356 = vadd.f32 %v1292, %v1340
    %v1357 = vadd.f32 %v1293, %v1341
    %v1358 = vadd.f32 %v1294, %v1342
    %v1359 = vadd.f32 %v1295, %v1343
    %v1360 = vadd.f32 %v1296, %v1344
    %v1361 = vadd.f32 %v1297, %v1345
    %v1362 = vadd.f32 %v1298, %v1346
    %v1363 = vadd.f32 %v1299, %v1347
    %1364 = vset.pattern.permute.xlu0 27
    %1365 = vperm.xlu0 %1364, %v44
    %v1366 = vpop.permute.xlu0 %1365
    %1368 = vset.pattern.permute.xlu0 27
    %1369 = vperm.xlu0 %1368, %v45
    %v1370 = vpop.permute.xlu0 %1369
    %1372 = vset.pattern.permute.xlu0 27
    %1373 = vperm.xlu0 %1372, %v46
    %v1374 = vpop.permute.xlu0 %1373
    %1376 = vset.pattern.permute.xlu0 27
    %1377 = vperm.xlu0 %1376, %v47
    %v1378 = vpop.permute.xlu0 %1377
    %v1380 = vmul.f32 %v1366, %v676
    %v1381 = vmul.f32 %v1366, %v677
    %v1382 = vmul.f32 %v1366, %v678
    %v1383 = vmul.f32 %v1366, %v679
    %v1384 = vmul.f32 %v1370, %v680
    %v1385 = vmul.f32 %v1370, %v681
    %v1386 = vmul.f32 %v1370, %v682
    %v1387 = vmul.f32 %v1370, %v683
    %v1388 = vmul.f32 %v1374, %v684
    %v1389 = vmul.f32 %v1374, %v685
    %v1390 = vmul.f32 %v1374, %v686
    %v1391 = vmul.f32 %v1374, %v687
    %v1392 = vmul.f32 %v1378, %v688
    %v1393 = vmul.f32 %v1378, %v689
    %v1394 = vmul.f32 %v1378, %v690
    %v1395 = vmul.f32 %v1378, %v691
    %1396 = vset.pattern.permute.xlu0 28
    %1397 = vperm.xlu0 %1396, %v44
    %v1398 = vpop.permute.xlu0 %1397
    %1400 = vset.pattern.permute.xlu0 28
    %1401 = vperm.xlu0 %1400, %v45
    %v1402 = vpop.permute.xlu0 %1401
    %1404 = vset.pattern.permute.xlu0 28
    %1405 = vperm.xlu0 %1404, %v46
    %v1406 = vpop.permute.xlu0 %1405
    %1408 = vset.pattern.permute.xlu0 28
    %1409 = vperm.xlu0 %1408, %v47
    %v1410 = vpop.permute.xlu0 %1409
    %v1412 = vmul.f32 %v1398, %v900
    %v1413 = vmul.f32 %v1398, %v901
    %v1414 = vmul.f32 %v1398, %v902
    %v1415 = vmul.f32 %v1398, %v903
    %v1416 = vmul.f32 %v1402, %v904
    %v1417 = vmul.f32 %v1402, %v905
    %v1418 = vmul.f32 %v1402, %v906
    %v1419 = vmul.f32 %v1402, %v907
    %v1420 = vmul.f32 %v1406, %v908
    %v1421 = vmul.f32 %v1406, %v909
    %v1422 = vmul.f32 %v1406, %v910
    %v1423 = vmul.f32 %v1406, %v911
    %v1424 = vmul.f32 %v1410, %v912
    %v1425 = vmul.f32 %v1410, %v913
    %v1426 = vmul.f32 %v1410, %v914
    %v1427 = vmul.f32 %v1410, %v915
    %v1428 = vadd.f32 %v1380, %v1412
    %v1429 = vadd.f32 %v1381, %v1413
    %v1430 = vadd.f32 %v1382, %v1414
    %v1431 = vadd.f32 %v1383, %v1415
    %v1432 = vadd.f32 %v1384, %v1416
    %v1433 = vadd.f32 %v1385, %v1417
    %v1434 = vadd.f32 %v1386, %v1418
    %v1435 = vadd.f32 %v1387, %v1419
    %v1436 = vadd.f32 %v1388, %v1420
    %v1437 = vadd.f32 %v1389, %v1421
    %v1438 = vadd.f32 %v1390, %v1422
    %v1439 = vadd.f32 %v1391, %v1423
    %v1440 = vadd.f32 %v1392, %v1424
    %v1441 = vadd.f32 %v1393, %v1425
    %v1442 = vadd.f32 %v1394, %v1426
    %v1443 = vadd.f32 %v1395, %v1427
    %1444 = vset.pattern.permute.xlu0 29
    %1445 = vperm.xlu0 %1444, %v44
    %v1446 = vpop.permute.xlu0 %1445
    %1448 = vset.pattern.permute.xlu0 29
    %1449 = vperm.xlu0 %1448, %v45
    %v1450 = vpop.permute.xlu0 %1449
    %1452 = vset.pattern.permute.xlu0 29
    %1453 = vperm.xlu0 %1452, %v46
    %v1454 = vpop.permute.xlu0 %1453
    %1456 = vset.pattern.permute.xlu0 29
    %1457 = vperm.xlu0 %1456, %v47
    %v1458 = vpop.permute.xlu0 %1457
    %v1460 = vmul.f32 %v1446, %v1124
    %v1461 = vmul.f32 %v1446, %v1125
    %v1462 = vmul.f32 %v1446, %v1126
    %v1463 = vmul.f32 %v1446, %v1127
    %v1464 = vmul.f32 %v1450, %v1128
    %v1465 = vmul.f32 %v1450, %v1129
    %v1466 = vmul.f32 %v1450, %v1130
    %v1467 = vmul.f32 %v1450, %v1131
    %v1468 = vmul.f32 %v1454, %v1132
    %v1469 = vmul.f32 %v1454, %v1133
    %v1470 = vmul.f32 %v1454, %v1134
    %v1471 = vmul.f32 %v1454, %v1135
    %v1472 = vmul.f32 %v1458, %v1136
    %v1473 = vmul.f32 %v1458, %v1137
    %v1474 = vmul.f32 %v1458, %v1138
    %v1475 = vmul.f32 %v1458, %v1139
    %v1476 = vadd.f32 %v1428, %v1460
    %v1477 = vadd.f32 %v1429, %v1461
    %v1478 = vadd.f32 %v1430, %v1462
    %v1479 = vadd.f32 %v1431, %v1463
    %v1480 = vadd.f32 %v1432, %v1464
    %v1481 = vadd.f32 %v1433, %v1465
    %v1482 = vadd.f32 %v1434, %v1466
    %v1483 = vadd.f32 %v1435, %v1467
    %v1484 = vadd.f32 %v1436, %v1468
    %v1485 = vadd.f32 %v1437, %v1469
    %v1486 = vadd.f32 %v1438, %v1470
    %v1487 = vadd.f32 %v1439, %v1471
    %v1488 = vadd.f32 %v1440, %v1472
    %v1489 = vadd.f32 %v1441, %v1473
    %v1490 = vadd.f32 %v1442, %v1474
    %v1491 = vadd.f32 %v1443, %v1475
    %1492 = vset.pattern.permute.xlu0 34
    %1493 = vperm.xlu0 %1492, %v44
    %v1494 = vpop.permute.xlu0 %1493
    %1496 = vset.pattern.permute.xlu0 34
    %1497 = vperm.xlu0 %1496, %v45
    %v1498 = vpop.permute.xlu0 %1497
    %1500 = vset.pattern.permute.xlu0 34
    %1501 = vperm.xlu0 %1500, %v46
    %v1502 = vpop.permute.xlu0 %1501
    %1504 = vset.pattern.permute.xlu0 34
    %1505 = vperm.xlu0 %1504, %v47
    %v1506 = vpop.permute.xlu0 %1505
    %v1508 = vadd.f32 %v1476, %v1494
    %v1509 = vadd.f32 %v1477, %v1494
    %v1510 = vadd.f32 %v1478, %v1494
    %v1511 = vadd.f32 %v1479, %v1494
    %v1512 = vadd.f32 %v1480, %v1498
    %v1513 = vadd.f32 %v1481, %v1498
    %v1514 = vadd.f32 %v1482, %v1498
    %v1515 = vadd.f32 %v1483, %v1498
    %v1516 = vadd.f32 %v1484, %v1502
    %v1517 = vadd.f32 %v1485, %v1502
    %v1518 = vadd.f32 %v1486, %v1502
    %v1519 = vadd.f32 %v1487, %v1502
    %v1520 = vadd.f32 %v1488, %v1506
    %v1521 = vadd.f32 %v1489, %v1506
    %v1522 = vadd.f32 %v1490, %v1506
    %v1523 = vadd.f32 %v1491, %v1506
    %v1524 = vtanh.pop %v1508
    %v1525 = vtanh.pop %v1509
    %v1526 = vtanh.pop %v1510
    %v1527 = vtanh.pop %v1511
    %v1528 = vtanh.pop %v1512
    %v1529 = vtanh.pop %v1513
    %v1530 = vtanh.pop %v1514
    %v1531 = vtanh.pop %v1515
    %v1532 = vtanh.pop %v1516
    %v1533 = vtanh.pop %v1517
    %v1534 = vtanh.pop %v1518
    %v1535 = vtanh.pop %v1519
    %v1536 = vtanh.pop %v1520
    %v1537 = vtanh.pop %v1521
    %v1538 = vtanh.pop %v1522
    %v1539 = vtanh.pop %v1523
    %1540 = vset.pattern.permute.xlu0 37
    %1541 = vperm.xlu0 %1540, %v44
    %v1542 = vpop.permute.xlu0 %1541
    %1544 = vset.pattern.permute.xlu0 37
    %1545 = vperm.xlu0 %1544, %v45
    %v1546 = vpop.permute.xlu0 %1545
    %1548 = vset.pattern.permute.xlu0 37
    %1549 = vperm.xlu0 %1548, %v46
    %v1550 = vpop.permute.xlu0 %1549
    %1552 = vset.pattern.permute.xlu0 37
    %1553 = vperm.xlu0 %1552, %v47
    %v1554 = vpop.permute.xlu0 %1553
    %v1556 = vmul.f32 %v1542, %v1524
    %v1557 = vmul.f32 %v1542, %v1525
    %v1558 = vmul.f32 %v1542, %v1526
    %v1559 = vmul.f32 %v1542, %v1527
    %v1560 = vmul.f32 %v1546, %v1528
    %v1561 = vmul.f32 %v1546, %v1529
    %v1562 = vmul.f32 %v1546, %v1530
    %v1563 = vmul.f32 %v1546, %v1531
    %v1564 = vmul.f32 %v1550, %v1532
    %v1565 = vmul.f32 %v1550, %v1533
    %v1566 = vmul.f32 %v1550, %v1534
    %v1567 = vmul.f32 %v1550, %v1535
    %v1568 = vmul.f32 %v1554, %v1536
    %v1569 = vmul.f32 %v1554, %v1537
    %v1570 = vmul.f32 %v1554, %v1538
    %v1571 = vmul.f32 %v1554, %v1539
    %v1572 = vadd.f32 %v1508, %v1556
    %v1573 = vadd.f32 %v1509, %v1557
    %v1574 = vadd.f32 %v1510, %v1558
    %v1575 = vadd.f32 %v1511, %v1559
    %v1576 = vadd.f32 %v1512, %v1560
    %v1577 = vadd.f32 %v1513, %v1561
    %v1578 = vadd.f32 %v1514, %v1562
    %v1579 = vadd.f32 %v1515, %v1563
    %v1580 = vadd.f32 %v1516, %v1564
    %v1581 = vadd.f32 %v1517, %v1565
    %v1582 = vadd.f32 %v1518, %v1566
    %v1583 = vadd.f32 %v1519, %v1567
    %v1584 = vadd.f32 %v1520, %v1568
    %v1585 = vadd.f32 %v1521, %v1569
    %v1586 = vadd.f32 %v1522, %v1570
    %v1587 = vadd.f32 %v1523, %v1571
    %1588 = vset.pattern.permute.xlu0 30
    %1589 = vperm.xlu0 %1588, %v44
    %v1590 = vpop.permute.xlu0 %1589
    %1592 = vset.pattern.permute.xlu0 30
    %1593 = vperm.xlu0 %1592, %v45
    %v1594 = vpop.permute.xlu0 %1593
    %1596 = vset.pattern.permute.xlu0 30
    %1597 = vperm.xlu0 %1596, %v46
    %v1598 = vpop.permute.xlu0 %1597
    %1600 = vset.pattern.permute.xlu0 30
    %1601 = vperm.xlu0 %1600, %v47
    %v1602 = vpop.permute.xlu0 %1601
    %v1604 = vmul.f32 %v1590, %v676
    %v1605 = vmul.f32 %v1590, %v677
    %v1606 = vmul.f32 %v1590, %v678
    %v1607 = vmul.f32 %v1590, %v679
    %v1608 = vmul.f32 %v1594, %v680
    %v1609 = vmul.f32 %v1594, %v681
    %v1610 = vmul.f32 %v1594, %v682
    %v1611 = vmul.f32 %v1594, %v683
    %v1612 = vmul.f32 %v1598, %v684
    %v1613 = vmul.f32 %v1598, %v685
    %v1614 = vmul.f32 %v1598, %v686
    %v1615 = vmul.f32 %v1598, %v687
    %v1616 = vmul.f32 %v1602, %v688
    %v1617 = vmul.f32 %v1602, %v689
    %v1618 = vmul.f32 %v1602, %v690
    %v1619 = vmul.f32 %v1602, %v691
    %1620 = vset.pattern.permute.xlu0 31
    %1621 = vperm.xlu0 %1620, %v44
    %v1622 = vpop.permute.xlu0 %1621
    %1624 = vset.pattern.permute.xlu0 31
    %1625 = vperm.xlu0 %1624, %v45
    %v1626 = vpop.permute.xlu0 %1625
    %1628 = vset.pattern.permute.xlu0 31
    %1629 = vperm.xlu0 %1628, %v46
    %v1630 = vpop.permute.xlu0 %1629
    %1632 = vset.pattern.permute.xlu0 31
    %1633 = vperm.xlu0 %1632, %v47
    %v1634 = vpop.permute.xlu0 %1633
    %v1636 = vmul.f32 %v1622, %v900
    %v1637 = vmul.f32 %v1622, %v901
    %v1638 = vmul.f32 %v1622, %v902
    %v1639 = vmul.f32 %v1622, %v903
    %v1640 = vmul.f32 %v1626, %v904
    %v1641 = vmul.f32 %v1626, %v905
    %v1642 = vmul.f32 %v1626, %v906
    %v1643 = vmul.f32 %v1626, %v907
    %v1644 = vmul.f32 %v1630, %v908
    %v1645 = vmul.f32 %v1630, %v909
    %v1646 = vmul.f32 %v1630, %v910
    %v1647 = vmul.f32 %v1630, %v911
    %v1648 = vmul.f32 %v1634, %v912
    %v1649 = vmul.f32 %v1634, %v913
    %v1650 = vmul.f32 %v1634, %v914
    %v1651 = vmul.f32 %v1634, %v915
    %v1652 = vadd.f32 %v1604, %v1636
    %v1653 = vadd.f32 %v1605, %v1637
    %v1654 = vadd.f32 %v1606, %v1638
    %v1655 = vadd.f32 %v1607, %v1639
    %v1656 = vadd.f32 %v1608, %v1640
    %v1657 = vadd.f32 %v1609, %v1641
    %v1658 = vadd.f32 %v1610, %v1642
    %v1659 = vadd.f32 %v1611, %v1643
    %v1660 = vadd.f32 %v1612, %v1644
    %v1661 = vadd.f32 %v1613, %v1645
    %v1662 = vadd.f32 %v1614, %v1646
    %v1663 = vadd.f32 %v1615, %v1647
    %v1664 = vadd.f32 %v1616, %v1648
    %v1665 = vadd.f32 %v1617, %v1649
    %v1666 = vadd.f32 %v1618, %v1650
    %v1667 = vadd.f32 %v1619, %v1651
    %1668 = vset.pattern.permute.xlu0 32
    %1669 = vperm.xlu0 %1668, %v44
    %v1670 = vpop.permute.xlu0 %1669
    %1672 = vset.pattern.permute.xlu0 32
    %1673 = vperm.xlu0 %1672, %v45
    %v1674 = vpop.permute.xlu0 %1673
    %1676 = vset.pattern.permute.xlu0 32
    %1677 = vperm.xlu0 %1676, %v46
    %v1678 = vpop.permute.xlu0 %1677
    %1680 = vset.pattern.permute.xlu0 32
    %1681 = vperm.xlu0 %1680, %v47
    %v1682 = vpop.permute.xlu0 %1681
    %v1684 = vmul.f32 %v1670, %v1124
    %v1685 = vmul.f32 %v1670, %v1125
    %v1686 = vmul.f32 %v1670, %v1126
    %v1687 = vmul.f32 %v1670, %v1127
    %v1688 = vmul.f32 %v1674, %v1128
    %v1689 = vmul.f32 %v1674, %v1129
    %v1690 = vmul.f32 %v1674, %v1130
    %v1691 = vmul.f32 %v1674, %v1131
    %v1692 = vmul.f32 %v1678, %v1132
    %v1693 = vmul.f32 %v1678, %v1133
    %v1694 = vmul.f32 %v1678, %v1134
    %v1695 = vmul.f32 %v1678, %v1135
    %v1696 = vmul.f32 %v1682, %v1136
    %v1697 = vmul.f32 %v1682, %v1137
    %v1698 = vmul.f32 %v1682, %v1138
    %v1699 = vmul.f32 %v1682, %v1139
    %v1700 = vadd.f32 %v1652, %v1684
    %v1701 = vadd.f32 %v1653, %v1685
    %v1702 = vadd.f32 %v1654, %v1686
    %v1703 = vadd.f32 %v1655, %v1687
    %v1704 = vadd.f32 %v1656, %v1688
    %v1705 = vadd.f32 %v1657, %v1689
    %v1706 = vadd.f32 %v1658, %v1690
    %v1707 = vadd.f32 %v1659, %v1691
    %v1708 = vadd.f32 %v1660, %v1692
    %v1709 = vadd.f32 %v1661, %v1693
    %v1710 = vadd.f32 %v1662, %v1694
    %v1711 = vadd.f32 %v1663, %v1695
    %v1712 = vadd.f32 %v1664, %v1696
    %v1713 = vadd.f32 %v1665, %v1697
    %v1714 = vadd.f32 %v1666, %v1698
    %v1715 = vadd.f32 %v1667, %v1699
    %1716 = vset.pattern.permute.xlu0 35
    %1717 = vperm.xlu0 %1716, %v44
    %v1718 = vpop.permute.xlu0 %1717
    %1720 = vset.pattern.permute.xlu0 35
    %1721 = vperm.xlu0 %1720, %v45
    %v1722 = vpop.permute.xlu0 %1721
    %1724 = vset.pattern.permute.xlu0 35
    %1725 = vperm.xlu0 %1724, %v46
    %v1726 = vpop.permute.xlu0 %1725
    %1728 = vset.pattern.permute.xlu0 35
    %1729 = vperm.xlu0 %1728, %v47
    %v1730 = vpop.permute.xlu0 %1729
    %v1732 = vadd.f32 %v1700, %v1718
    %v1733 = vadd.f32 %v1701, %v1718
    %v1734 = vadd.f32 %v1702, %v1718
    %v1735 = vadd.f32 %v1703, %v1718
    %v1736 = vadd.f32 %v1704, %v1722
    %v1737 = vadd.f32 %v1705, %v1722
    %v1738 = vadd.f32 %v1706, %v1722
    %v1739 = vadd.f32 %v1707, %v1722
    %v1740 = vadd.f32 %v1708, %v1726
    %v1741 = vadd.f32 %v1709, %v1726
    %v1742 = vadd.f32 %v1710, %v1726
    %v1743 = vadd.f32 %v1711, %v1726
    %v1744 = vadd.f32 %v1712, %v1730
    %v1745 = vadd.f32 %v1713, %v1730
    %v1746 = vadd.f32 %v1714, %v1730
    %v1747 = vadd.f32 %v1715, %v1730
    %v1748 = vtanh.pop %v1732
    %v1749 = vtanh.pop %v1733
    %v1750 = vtanh.pop %v1734
    %v1751 = vtanh.pop %v1735
    %v1752 = vtanh.pop %v1736
    %v1753 = vtanh.pop %v1737
    %v1754 = vtanh.pop %v1738
    %v1755 = vtanh.pop %v1739
    %v1756 = vtanh.pop %v1740
    %v1757 = vtanh.pop %v1741
    %v1758 = vtanh.pop %v1742
    %v1759 = vtanh.pop %v1743
    %v1760 = vtanh.pop %v1744
    %v1761 = vtanh.pop %v1745
    %v1762 = vtanh.pop %v1746
    %v1763 = vtanh.pop %v1747
    %1764 = vset.pattern.permute.xlu0 38
    %1765 = vperm.xlu0 %1764, %v44
    %v1766 = vpop.permute.xlu0 %1765
    %1768 = vset.pattern.permute.xlu0 38
    %1769 = vperm.xlu0 %1768, %v45
    %v1770 = vpop.permute.xlu0 %1769
    %1772 = vset.pattern.permute.xlu0 38
    %1773 = vperm.xlu0 %1772, %v46
    %v1774 = vpop.permute.xlu0 %1773
    %1776 = vset.pattern.permute.xlu0 38
    %1777 = vperm.xlu0 %1776, %v47
    %v1778 = vpop.permute.xlu0 %1777
    %v1780 = vmul.f32 %v1766, %v1748
    %v1781 = vmul.f32 %v1766, %v1749
    %v1782 = vmul.f32 %v1766, %v1750
    %v1783 = vmul.f32 %v1766, %v1751
    %v1784 = vmul.f32 %v1770, %v1752
    %v1785 = vmul.f32 %v1770, %v1753
    %v1786 = vmul.f32 %v1770, %v1754
    %v1787 = vmul.f32 %v1770, %v1755
    %v1788 = vmul.f32 %v1774, %v1756
    %v1789 = vmul.f32 %v1774, %v1757
    %v1790 = vmul.f32 %v1774, %v1758
    %v1791 = vmul.f32 %v1774, %v1759
    %v1792 = vmul.f32 %v1778, %v1760
    %v1793 = vmul.f32 %v1778, %v1761
    %v1794 = vmul.f32 %v1778, %v1762
    %v1795 = vmul.f32 %v1778, %v1763
    %v1796 = vadd.f32 %v1732, %v1780
    %v1797 = vadd.f32 %v1733, %v1781
    %v1798 = vadd.f32 %v1734, %v1782
    %v1799 = vadd.f32 %v1735, %v1783
    %v1800 = vadd.f32 %v1736, %v1784
    %v1801 = vadd.f32 %v1737, %v1785
    %v1802 = vadd.f32 %v1738, %v1786
    %v1803 = vadd.f32 %v1739, %v1787
    %v1804 = vadd.f32 %v1740, %v1788
    %v1805 = vadd.f32 %v1741, %v1789
    %v1806 = vadd.f32 %v1742, %v1790
    %v1807 = vadd.f32 %v1743, %v1791
    %v1808 = vadd.f32 %v1744, %v1792
    %v1809 = vadd.f32 %v1745, %v1793
    %v1810 = vadd.f32 %v1746, %v1794
    %v1811 = vadd.f32 %v1747, %v1795
    %1812 = vset.pattern.permute.xlu0 39
    %1813 = vperm.xlu0 %1812, %v44
    %v1814 = vpop.permute.xlu0 %1813
    %1816 = vset.pattern.permute.xlu0 39
    %1817 = vperm.xlu0 %1816, %v45
    %v1818 = vpop.permute.xlu0 %1817
    %1820 = vset.pattern.permute.xlu0 39
    %1821 = vperm.xlu0 %1820, %v46
    %v1822 = vpop.permute.xlu0 %1821
    %1824 = vset.pattern.permute.xlu0 39
    %1825 = vperm.xlu0 %1824, %v47
    %v1826 = vpop.permute.xlu0 %1825
    %v1828 = vmul.f32 %v1814, %v1348
    %v1829 = vmul.f32 %v1814, %v1349
    %v1830 = vmul.f32 %v1814, %v1350
    %v1831 = vmul.f32 %v1814, %v1351
    %v1832 = vmul.f32 %v1818, %v1352
    %v1833 = vmul.f32 %v1818, %v1353
    %v1834 = vmul.f32 %v1818, %v1354
    %v1835 = vmul.f32 %v1818, %v1355
    %v1836 = vmul.f32 %v1822, %v1356
    %v1837 = vmul.f32 %v1822, %v1357
    %v1838 = vmul.f32 %v1822, %v1358
    %v1839 = vmul.f32 %v1822, %v1359
    %v1840 = vmul.f32 %v1826, %v1360
    %v1841 = vmul.f32 %v1826, %v1361
    %v1842 = vmul.f32 %v1826, %v1362
    %v1843 = vmul.f32 %v1826, %v1363
    %1844 = vset.pattern.permute.xlu0 40
    %1845 = vperm.xlu0 %1844, %v44
    %v1846 = vpop.permute.xlu0 %1845
    %1848 = vset.pattern.permute.xlu0 40
    %1849 = vperm.xlu0 %1848, %v45
    %v1850 = vpop.permute.xlu0 %1849
    %1852 = vset.pattern.permute.xlu0 40
    %1853 = vperm.xlu0 %1852, %v46
    %v1854 = vpop.permute.xlu0 %1853
    %1856 = vset.pattern.permute.xlu0 40
    %1857 = vperm.xlu0 %1856, %v47
    %v1858 = vpop.permute.xlu0 %1857
    %v1860 = vmul.f32 %v1846, %v1572
    %v1861 = vmul.f32 %v1846, %v1573
    %v1862 = vmul.f32 %v1846, %v1574
    %v1863 = vmul.f32 %v1846, %v1575
    %v1864 = vmul.f32 %v1850, %v1576
    %v1865 = vmul.f32 %v1850, %v1577
    %v1866 = vmul.f32 %v1850, %v1578
    %v1867 = vmul.f32 %v1850, %v1579
    %v1868 = vmul.f32 %v1854, %v1580
    %v1869 = vmul.f32 %v1854, %v1581
    %v1870 = vmul.f32 %v1854, %v1582
    %v1871 = vmul.f32 %v1854, %v1583
    %v1872 = vmul.f32 %v1858, %v1584
    %v1873 = vmul.f32 %v1858, %v1585
    %v1874 = vmul.f32 %v1858, %v1586
    %v1875 = vmul.f32 %v1858, %v1587
    %v1876 = vadd.f32 %v1828, %v1860
    %v1877 = vadd.f32 %v1829, %v1861
    %v1878 = vadd.f32 %v1830, %v1862
    %v1879 = vadd.f32 %v1831, %v1863
    %v1880 = vadd.f32 %v1832, %v1864
    %v1881 = vadd.f32 %v1833, %v1865
    %v1882 = vadd.f32 %v1834, %v1866
    %v1883 = vadd.f32 %v1835, %v1867
    %v1884 = vadd.f32 %v1836, %v1868
    %v1885 = vadd.f32 %v1837, %v1869
    %v1886 = vadd.f32 %v1838, %v1870
    %v1887 = vadd.f32 %v1839, %v1871
    %v1888 = vadd.f32 %v1840, %v1872
    %v1889 = vadd.f32 %v1841, %v1873
    %v1890 = vadd.f32 %v1842, %v1874
    %v1891 = vadd.f32 %v1843, %v1875
    %1892 = vset.pattern.permute.xlu0 41
    %1893 = vperm.xlu0 %1892, %v44
    %v1894 = vpop.permute.xlu0 %1893
    %1896 = vset.pattern.permute.xlu0 41
    %1897 = vperm.xlu0 %1896, %v45
    %v1898 = vpop.permute.xlu0 %1897
    %1900 = vset.pattern.permute.xlu0 41
    %1901 = vperm.xlu0 %1900, %v46
    %v1902 = vpop.permute.xlu0 %1901
    %1904 = vset.pattern.permute.xlu0 41
    %1905 = vperm.xlu0 %1904, %v47
    %v1906 = vpop.permute.xlu0 %1905
    %v1908 = vmul.f32 %v1894, %v1796
    %v1909 = vmul.f32 %v1894, %v1797
    %v1910 = vmul.f32 %v1894, %v1798
    %v1911 = vmul.f32 %v1894, %v1799
    %v1912 = vmul.f32 %v1898, %v1800
    %v1913 = vmul.f32 %v1898, %v1801
    %v1914 = vmul.f32 %v1898, %v1802
    %v1915 = vmul.f32 %v1898, %v1803
    %v1916 = vmul.f32 %v1902, %v1804
    %v1917 = vmul.f32 %v1902, %v1805
    %v1918 = vmul.f32 %v1902, %v1806
    %v1919 = vmul.f32 %v1902, %v1807
    %v1920 = vmul.f32 %v1906, %v1808
    %v1921 = vmul.f32 %v1906, %v1809
    %v1922 = vmul.f32 %v1906, %v1810
    %v1923 = vmul.f32 %v1906, %v1811
    %v1924 = vadd.f32 %v1876, %v1908
    %v1925 = vadd.f32 %v1877, %v1909
    %v1926 = vadd.f32 %v1878, %v1910
    %v1927 = vadd.f32 %v1879, %v1911
    %v1928 = vadd.f32 %v1880, %v1912
    %v1929 = vadd.f32 %v1881, %v1913
    %v1930 = vadd.f32 %v1882, %v1914
    %v1931 = vadd.f32 %v1883, %v1915
    %v1932 = vadd.f32 %v1884, %v1916
    %v1933 = vadd.f32 %v1885, %v1917
    %v1934 = vadd.f32 %v1886, %v1918
    %v1935 = vadd.f32 %v1887, %v1919
    %v1936 = vadd.f32 %v1888, %v1920
    %v1937 = vadd.f32 %v1889, %v1921
    %v1938 = vadd.f32 %v1890, %v1922
    %v1939 = vadd.f32 %v1891, %v1923
    %1940 = vset.pattern.permute.xlu0 42
    %1941 = vperm.xlu0 %1940, %v44
    %v1942 = vpop.permute.xlu0 %1941
    %1944 = vset.pattern.permute.xlu0 42
    %1945 = vperm.xlu0 %1944, %v45
    %v1946 = vpop.permute.xlu0 %1945
    %1948 = vset.pattern.permute.xlu0 42
    %1949 = vperm.xlu0 %1948, %v46
    %v1950 = vpop.permute.xlu0 %1949
    %1952 = vset.pattern.permute.xlu0 42
    %1953 = vperm.xlu0 %1952, %v47
    %v1954 = vpop.permute.xlu0 %1953
    %v1956 = vadd.f32 %v1924, %v1942
    %v1957 = vadd.f32 %v1925, %v1942
    %v1958 = vadd.f32 %v1926, %v1942
    %v1959 = vadd.f32 %v1927, %v1942
    %v1960 = vadd.f32 %v1928, %v1946
    %v1961 = vadd.f32 %v1929, %v1946
    %v1962 = vadd.f32 %v1930, %v1946
    %v1963 = vadd.f32 %v1931, %v1946
    %v1964 = vadd.f32 %v1932, %v1950
    %v1965 = vadd.f32 %v1933, %v1950
    %v1966 = vadd.f32 %v1934, %v1950
    %v1967 = vadd.f32 %v1935, %v1950
    %v1968 = vadd.f32 %v1936, %v1954
    %v1969 = vadd.f32 %v1937, %v1954
    %v1970 = vadd.f32 %v1938, %v1954
    %v1971 = vadd.f32 %v1939, %v1954
    %v1972 = vadd.f32 %v48, 0.5
    %v1973 = vadd.f32 %v49, 0.5
    %v1974 = vadd.f32 %v50, 0.5
    %v1975 = vadd.f32 %v51, 0.5
    %v1976 = vadd.f32 %v52, 0.5
    %v1977 = vadd.f32 %v53, 0.5
    %v1978 = vadd.f32 %v54, 0.5
    %v1979 = vadd.f32 %v55, 0.5
    %v1980 = vadd.f32 %v56, 0.5
    %v1981 = vadd.f32 %v57, 0.5
    %v1982 = vadd.f32 %v58, 0.5
    %v1983 = vadd.f32 %v59, 0.5
    %v1984 = vadd.f32 %v60, 0.5
    %v1985 = vadd.f32 %v61, 0.5
    %v1986 = vadd.f32 %v62, 0.5
    %v1987 = vadd.f32 %v63, 0.5
    %v1988 = vmul.f32 %v83, %v1972
    %v1989 = vmul.f32 %v83, %v1973
    %v1990 = vmul.f32 %v83, %v1974
    %v1991 = vmul.f32 %v83, %v1975
    %v1992 = vmul.f32 %v88, %v1976
    %v1993 = vmul.f32 %v88, %v1977
    %v1994 = vmul.f32 %v88, %v1978
    %v1995 = vmul.f32 %v88, %v1979
    %v1996 = vmul.f32 %v93, %v1980
    %v1997 = vmul.f32 %v93, %v1981
    %v1998 = vmul.f32 %v93, %v1982
    %v1999 = vmul.f32 %v93, %v1983
    %v2000 = vmul.f32 %v98, %v1984
    %v2001 = vmul.f32 %v98, %v1985
    %v2002 = vmul.f32 %v98, %v1986
    %v2003 = vmul.f32 %v98, %v1987
    %v2004 = vadd.f32 %v1988, %v118
    %v2005 = vadd.f32 %v1989, %v118
    %v2006 = vadd.f32 %v1990, %v118
    %v2007 = vadd.f32 %v1991, %v118
    %v2008 = vadd.f32 %v1992, %v122
    %v2009 = vadd.f32 %v1993, %v122
    %v2010 = vadd.f32 %v1994, %v122
    %v2011 = vadd.f32 %v1995, %v122
    %v2012 = vadd.f32 %v1996, %v126
    %v2013 = vadd.f32 %v1997, %v126
    %v2014 = vadd.f32 %v1998, %v126
    %v2015 = vadd.f32 %v1999, %v126
    %v2016 = vadd.f32 %v2000, %v130
    %v2017 = vadd.f32 %v2001, %v130
    %v2018 = vadd.f32 %v2002, %v130
    %v2019 = vadd.f32 %v2003, %v130
    %v2020 = vtanh.pop %v2004
    %v2021 = vtanh.pop %v2005
    %v2022 = vtanh.pop %v2006
    %v2023 = vtanh.pop %v2007
    %v2024 = vtanh.pop %v2008
    %v2025 = vtanh.pop %v2009
    %v2026 = vtanh.pop %v2010
    %v2027 = vtanh.pop %v2011
    %v2028 = vtanh.pop %v2012
    %v2029 = vtanh.pop %v2013
    %v2030 = vtanh.pop %v2014
    %v2031 = vtanh.pop %v2015
    %v2032 = vtanh.pop %v2016
    %v2033 = vtanh.pop %v2017
    %v2034 = vtanh.pop %v2018
    %v2035 = vtanh.pop %v2019
    %v2036 = vmul.f32 %v166, %v2020
    %v2037 = vmul.f32 %v166, %v2021
    %v2038 = vmul.f32 %v166, %v2022
    %v2039 = vmul.f32 %v166, %v2023
    %v2040 = vmul.f32 %v170, %v2024
    %v2041 = vmul.f32 %v170, %v2025
    %v2042 = vmul.f32 %v170, %v2026
    %v2043 = vmul.f32 %v170, %v2027
    %v2044 = vmul.f32 %v174, %v2028
    %v2045 = vmul.f32 %v174, %v2029
    %v2046 = vmul.f32 %v174, %v2030
    %v2047 = vmul.f32 %v174, %v2031
    %v2048 = vmul.f32 %v178, %v2032
    %v2049 = vmul.f32 %v178, %v2033
    %v2050 = vmul.f32 %v178, %v2034
    %v2051 = vmul.f32 %v178, %v2035
    %v2052 = vadd.f32 %v2004, %v2036
    %v2053 = vadd.f32 %v2005, %v2037
    %v2054 = vadd.f32 %v2006, %v2038
    %v2055 = vadd.f32 %v2007, %v2039
    %v2056 = vadd.f32 %v2008, %v2040
    %v2057 = vadd.f32 %v2009, %v2041
    %v2058 = vadd.f32 %v2010, %v2042
    %v2059 = vadd.f32 %v2011, %v2043
    %v2060 = vadd.f32 %v2012, %v2044
    %v2061 = vadd.f32 %v2013, %v2045
    %v2062 = vadd.f32 %v2014, %v2046
    %v2063 = vadd.f32 %v2015, %v2047
    %v2064 = vadd.f32 %v2016, %v2048
    %v2065 = vadd.f32 %v2017, %v2049
    %v2066 = vadd.f32 %v2018, %v2050
    %v2067 = vadd.f32 %v2019, %v2051
    %v2068 = vmul.f32 %v214, %v1972
    %v2069 = vmul.f32 %v214, %v1973
    %v2070 = vmul.f32 %v214, %v1974
    %v2071 = vmul.f32 %v214, %v1975
    %v2072 = vmul.f32 %v218, %v1976
    %v2073 = vmul.f32 %v218, %v1977
    %v2074 = vmul.f32 %v218, %v1978
    %v2075 = vmul.f32 %v218, %v1979
    %v2076 = vmul.f32 %v222, %v1980
    %v2077 = vmul.f32 %v222, %v1981
    %v2078 = vmul.f32 %v222, %v1982
    %v2079 = vmul.f32 %v222, %v1983
    %v2080 = vmul.f32 %v226, %v1984
    %v2081 = vmul.f32 %v226, %v1985
    %v2082 = vmul.f32 %v226, %v1986
    %v2083 = vmul.f32 %v226, %v1987
    %v2084 = vadd.f32 %v2068, %v246
    %v2085 = vadd.f32 %v2069, %v246
    %v2086 = vadd.f32 %v2070, %v246
    %v2087 = vadd.f32 %v2071, %v246
    %v2088 = vadd.f32 %v2072, %v250
    %v2089 = vadd.f32 %v2073, %v250
    %v2090 = vadd.f32 %v2074, %v250
    %v2091 = vadd.f32 %v2075, %v250
    %v2092 = vadd.f32 %v2076, %v254
    %v2093 = vadd.f32 %v2077, %v254
    %v2094 = vadd.f32 %v2078, %v254
    %v2095 = vadd.f32 %v2079, %v254
    %v2096 = vadd.f32 %v2080, %v258
    %v2097 = vadd.f32 %v2081, %v258
    %v2098 = vadd.f32 %v2082, %v258
    %v2099 = vadd.f32 %v2083, %v258
    %v2100 = vtanh.pop %v2084
    %v2101 = vtanh.pop %v2085
    %v2102 = vtanh.pop %v2086
    %v2103 = vtanh.pop %v2087
    %v2104 = vtanh.pop %v2088
    %v2105 = vtanh.pop %v2089
    %v2106 = vtanh.pop %v2090
    %v2107 = vtanh.pop %v2091
    %v2108 = vtanh.pop %v2092
    %v2109 = vtanh.pop %v2093
    %v2110 = vtanh.pop %v2094
    %v2111 = vtanh.pop %v2095
    %v2112 = vtanh.pop %v2096
    %v2113 = vtanh.pop %v2097
    %v2114 = vtanh.pop %v2098
    %v2115 = vtanh.pop %v2099
    %v2116 = vmul.f32 %v294, %v2100
    %v2117 = vmul.f32 %v294, %v2101
    %v2118 = vmul.f32 %v294, %v2102
    %v2119 = vmul.f32 %v294, %v2103
    %v2120 = vmul.f32 %v298, %v2104
    %v2121 = vmul.f32 %v298, %v2105
    %v2122 = vmul.f32 %v298, %v2106
    %v2123 = vmul.f32 %v298, %v2107
    %v2124 = vmul.f32 %v302, %v2108
    %v2125 = vmul.f32 %v302, %v2109
    %v2126 = vmul.f32 %v302, %v2110
    %v2127 = vmul.f32 %v302, %v2111
    %v2128 = vmul.f32 %v306, %v2112
    %v2129 = vmul.f32 %v306, %v2113
    %v2130 = vmul.f32 %v306, %v2114
    %v2131 = vmul.f32 %v306, %v2115
    %v2132 = vadd.f32 %v2084, %v2116
    %v2133 = vadd.f32 %v2085, %v2117
    %v2134 = vadd.f32 %v2086, %v2118
    %v2135 = vadd.f32 %v2087, %v2119
    %v2136 = vadd.f32 %v2088, %v2120
    %v2137 = vadd.f32 %v2089, %v2121
    %v2138 = vadd.f32 %v2090, %v2122
    %v2139 = vadd.f32 %v2091, %v2123
    %v2140 = vadd.f32 %v2092, %v2124
    %v2141 = vadd.f32 %v2093, %v2125
    %v2142 = vadd.f32 %v2094, %v2126
    %v2143 = vadd.f32 %v2095, %v2127
    %v2144 = vadd.f32 %v2096, %v2128
    %v2145 = vadd.f32 %v2097, %v2129
    %v2146 = vadd.f32 %v2098, %v2130
    %v2147 = vadd.f32 %v2099, %v2131
    %v2148 = vmul.f32 %v342, %v1972
    %v2149 = vmul.f32 %v342, %v1973
    %v2150 = vmul.f32 %v342, %v1974
    %v2151 = vmul.f32 %v342, %v1975
    %v2152 = vmul.f32 %v346, %v1976
    %v2153 = vmul.f32 %v346, %v1977
    %v2154 = vmul.f32 %v346, %v1978
    %v2155 = vmul.f32 %v346, %v1979
    %v2156 = vmul.f32 %v350, %v1980
    %v2157 = vmul.f32 %v350, %v1981
    %v2158 = vmul.f32 %v350, %v1982
    %v2159 = vmul.f32 %v350, %v1983
    %v2160 = vmul.f32 %v354, %v1984
    %v2161 = vmul.f32 %v354, %v1985
    %v2162 = vmul.f32 %v354, %v1986
    %v2163 = vmul.f32 %v354, %v1987
    %v2164 = vadd.f32 %v2148, %v374
    %v2165 = vadd.f32 %v2149, %v374
    %v2166 = vadd.f32 %v2150, %v374
    %v2167 = vadd.f32 %v2151, %v374
    %v2168 = vadd.f32 %v2152, %v378
    %v2169 = vadd.f32 %v2153, %v378
    %v2170 = vadd.f32 %v2154, %v378
    %v2171 = vadd.f32 %v2155, %v378
    %v2172 = vadd.f32 %v2156, %v382
    %v2173 = vadd.f32 %v2157, %v382
    %v2174 = vadd.f32 %v2158, %v382
    %v2175 = vadd.f32 %v2159, %v382
    %v2176 = vadd.f32 %v2160, %v386
    %v2177 = vadd.f32 %v2161, %v386
    %v2178 = vadd.f32 %v2162, %v386
    %v2179 = vadd.f32 %v2163, %v386
    %v2180 = vtanh.pop %v2164
    %v2181 = vtanh.pop %v2165
    %v2182 = vtanh.pop %v2166
    %v2183 = vtanh.pop %v2167
    %v2184 = vtanh.pop %v2168
    %v2185 = vtanh.pop %v2169
    %v2186 = vtanh.pop %v2170
    %v2187 = vtanh.pop %v2171
    %v2188 = vtanh.pop %v2172
    %v2189 = vtanh.pop %v2173
    %v2190 = vtanh.pop %v2174
    %v2191 = vtanh.pop %v2175
    %v2192 = vtanh.pop %v2176
    %v2193 = vtanh.pop %v2177
    %v2194 = vtanh.pop %v2178
    %v2195 = vtanh.pop %v2179
    %v2196 = vmul.f32 %v422, %v2180
    %v2197 = vmul.f32 %v422, %v2181
    %v2198 = vmul.f32 %v422, %v2182
    %v2199 = vmul.f32 %v422, %v2183
    %v2200 = vmul.f32 %v426, %v2184
    %v2201 = vmul.f32 %v426, %v2185
    %v2202 = vmul.f32 %v426, %v2186
    %v2203 = vmul.f32 %v426, %v2187
    %v2204 = vmul.f32 %v430, %v2188
    %v2205 = vmul.f32 %v430, %v2189
    %v2206 = vmul.f32 %v430, %v2190
    %v2207 = vmul.f32 %v430, %v2191
    %v2208 = vmul.f32 %v434, %v2192
    %v2209 = vmul.f32 %v434, %v2193
    %v2210 = vmul.f32 %v434, %v2194
    %v2211 = vmul.f32 %v434, %v2195
    %v2212 = vadd.f32 %v2164, %v2196
    %v2213 = vadd.f32 %v2165, %v2197
    %v2214 = vadd.f32 %v2166, %v2198
    %v2215 = vadd.f32 %v2167, %v2199
    %v2216 = vadd.f32 %v2168, %v2200
    %v2217 = vadd.f32 %v2169, %v2201
    %v2218 = vadd.f32 %v2170, %v2202
    %v2219 = vadd.f32 %v2171, %v2203
    %v2220 = vadd.f32 %v2172, %v2204
    %v2221 = vadd.f32 %v2173, %v2205
    %v2222 = vadd.f32 %v2174, %v2206
    %v2223 = vadd.f32 %v2175, %v2207
    %v2224 = vadd.f32 %v2176, %v2208
    %v2225 = vadd.f32 %v2177, %v2209
    %v2226 = vadd.f32 %v2178, %v2210
    %v2227 = vadd.f32 %v2179, %v2211
    %v2228 = vmul.f32 %v470, %v2052
    %v2229 = vmul.f32 %v470, %v2053
    %v2230 = vmul.f32 %v470, %v2054
    %v2231 = vmul.f32 %v470, %v2055
    %v2232 = vmul.f32 %v474, %v2056
    %v2233 = vmul.f32 %v474, %v2057
    %v2234 = vmul.f32 %v474, %v2058
    %v2235 = vmul.f32 %v474, %v2059
    %v2236 = vmul.f32 %v478, %v2060
    %v2237 = vmul.f32 %v478, %v2061
    %v2238 = vmul.f32 %v478, %v2062
    %v2239 = vmul.f32 %v478, %v2063
    %v2240 = vmul.f32 %v482, %v2064
    %v2241 = vmul.f32 %v482, %v2065
    %v2242 = vmul.f32 %v482, %v2066
    %v2243 = vmul.f32 %v482, %v2067
    %v2244 = vmul.f32 %v502, %v2132
    %v2245 = vmul.f32 %v502, %v2133
    %v2246 = vmul.f32 %v502, %v2134
    %v2247 = vmul.f32 %v502, %v2135
    %v2248 = vmul.f32 %v506, %v2136
    %v2249 = vmul.f32 %v506, %v2137
    %v2250 = vmul.f32 %v506, %v2138
    %v2251 = vmul.f32 %v506, %v2139
    %v2252 = vmul.f32 %v510, %v2140
    %v2253 = vmul.f32 %v510, %v2141
    %v2254 = vmul.f32 %v510, %v2142
    %v2255 = vmul.f32 %v510, %v2143
    %v2256 = vmul.f32 %v514, %v2144
    %v2257 = vmul.f32 %v514, %v2145
    %v2258 = vmul.f32 %v514, %v2146
    %v2259 = vmul.f32 %v514, %v2147
    %v2260 = vadd.f32 %v2228, %v2244
    %v2261 = vadd.f32 %v2229, %v2245
    %v2262 = vadd.f32 %v2230, %v2246
    %v2263 = vadd.f32 %v2231, %v2247
    %v2264 = vadd.f32 %v2232, %v2248
    %v2265 = vadd.f32 %v2233, %v2249
    %v2266 = vadd.f32 %v2234, %v2250
    %v2267 = vadd.f32 %v2235, %v2251
    %v2268 = vadd.f32 %v2236, %v2252
    %v2269 = vadd.f32 %v2237, %v2253
    %v2270 = vadd.f32 %v2238, %v2254
    %v2271 = vadd.f32 %v2239, %v2255
    %v2272 = vadd.f32 %v2240, %v2256
    %v2273 = vadd.f32 %v2241, %v2257
    %v2274 = vadd.f32 %v2242, %v2258
    %v2275 = vadd.f32 %v2243, %v2259
    %v2276 = vmul.f32 %v550, %v2212
    %v2277 = vmul.f32 %v550, %v2213
    %v2278 = vmul.f32 %v550, %v2214
    %v2279 = vmul.f32 %v550, %v2215
    %v2280 = vmul.f32 %v554, %v2216
    %v2281 = vmul.f32 %v554, %v2217
    %v2282 = vmul.f32 %v554, %v2218
    %v2283 = vmul.f32 %v554, %v2219
    %v2284 = vmul.f32 %v558, %v2220
    %v2285 = vmul.f32 %v558, %v2221
    %v2286 = vmul.f32 %v558, %v2222
    %v2287 = vmul.f32 %v558, %v2223
    %v2288 = vmul.f32 %v562, %v2224
    %v2289 = vmul.f32 %v562, %v2225
    %v2290 = vmul.f32 %v562, %v2226
    %v2291 = vmul.f32 %v562, %v2227
    %v2292 = vadd.f32 %v2260, %v2276
    %v2293 = vadd.f32 %v2261, %v2277
    %v2294 = vadd.f32 %v2262, %v2278
    %v2295 = vadd.f32 %v2263, %v2279
    %v2296 = vadd.f32 %v2264, %v2280
    %v2297 = vadd.f32 %v2265, %v2281
    %v2298 = vadd.f32 %v2266, %v2282
    %v2299 = vadd.f32 %v2267, %v2283
    %v2300 = vadd.f32 %v2268, %v2284
    %v2301 = vadd.f32 %v2269, %v2285
    %v2302 = vadd.f32 %v2270, %v2286
    %v2303 = vadd.f32 %v2271, %v2287
    %v2304 = vadd.f32 %v2272, %v2288
    %v2305 = vadd.f32 %v2273, %v2289
    %v2306 = vadd.f32 %v2274, %v2290
    %v2307 = vadd.f32 %v2275, %v2291
    %v2308 = vadd.f32 %v2292, %v598
    %v2309 = vadd.f32 %v2293, %v598
    %v2310 = vadd.f32 %v2294, %v598
    %v2311 = vadd.f32 %v2295, %v598
    %v2312 = vadd.f32 %v2296, %v602
    %v2313 = vadd.f32 %v2297, %v602
    %v2314 = vadd.f32 %v2298, %v602
    %v2315 = vadd.f32 %v2299, %v602
    %v2316 = vadd.f32 %v2300, %v606
    %v2317 = vadd.f32 %v2301, %v606
    %v2318 = vadd.f32 %v2302, %v606
    %v2319 = vadd.f32 %v2303, %v606
    %v2320 = vadd.f32 %v2304, %v610
    %v2321 = vadd.f32 %v2305, %v610
    %v2322 = vadd.f32 %v2306, %v610
    %v2323 = vadd.f32 %v2307, %v610
    %v2324 = vtanh.pop %v2308
    %v2325 = vtanh.pop %v2309
    %v2326 = vtanh.pop %v2310
    %v2327 = vtanh.pop %v2311
    %v2328 = vtanh.pop %v2312
    %v2329 = vtanh.pop %v2313
    %v2330 = vtanh.pop %v2314
    %v2331 = vtanh.pop %v2315
    %v2332 = vtanh.pop %v2316
    %v2333 = vtanh.pop %v2317
    %v2334 = vtanh.pop %v2318
    %v2335 = vtanh.pop %v2319
    %v2336 = vtanh.pop %v2320
    %v2337 = vtanh.pop %v2321
    %v2338 = vtanh.pop %v2322
    %v2339 = vtanh.pop %v2323
    %v2340 = vmul.f32 %v646, %v2324
    %v2341 = vmul.f32 %v646, %v2325
    %v2342 = vmul.f32 %v646, %v2326
    %v2343 = vmul.f32 %v646, %v2327
    %v2344 = vmul.f32 %v650, %v2328
    %v2345 = vmul.f32 %v650, %v2329
    %v2346 = vmul.f32 %v650, %v2330
    %v2347 = vmul.f32 %v650, %v2331
    %v2348 = vmul.f32 %v654, %v2332
    %v2349 = vmul.f32 %v654, %v2333
    %v2350 = vmul.f32 %v654, %v2334
    %v2351 = vmul.f32 %v654, %v2335
    %v2352 = vmul.f32 %v658, %v2336
    %v2353 = vmul.f32 %v658, %v2337
    %v2354 = vmul.f32 %v658, %v2338
    %v2355 = vmul.f32 %v658, %v2339
    %v2356 = vadd.f32 %v2308, %v2340
    %v2357 = vadd.f32 %v2309, %v2341
    %v2358 = vadd.f32 %v2310, %v2342
    %v2359 = vadd.f32 %v2311, %v2343
    %v2360 = vadd.f32 %v2312, %v2344
    %v2361 = vadd.f32 %v2313, %v2345
    %v2362 = vadd.f32 %v2314, %v2346
    %v2363 = vadd.f32 %v2315, %v2347
    %v2364 = vadd.f32 %v2316, %v2348
    %v2365 = vadd.f32 %v2317, %v2349
    %v2366 = vadd.f32 %v2318, %v2350
    %v2367 = vadd.f32 %v2319, %v2351
    %v2368 = vadd.f32 %v2320, %v2352
    %v2369 = vadd.f32 %v2321, %v2353
    %v2370 = vadd.f32 %v2322, %v2354
    %v2371 = vadd.f32 %v2323, %v2355
    %v2372 = vmul.f32 %v694, %v2052
    %v2373 = vmul.f32 %v694, %v2053
    %v2374 = vmul.f32 %v694, %v2054
    %v2375 = vmul.f32 %v694, %v2055
    %v2376 = vmul.f32 %v698, %v2056
    %v2377 = vmul.f32 %v698, %v2057
    %v2378 = vmul.f32 %v698, %v2058
    %v2379 = vmul.f32 %v698, %v2059
    %v2380 = vmul.f32 %v702, %v2060
    %v2381 = vmul.f32 %v702, %v2061
    %v2382 = vmul.f32 %v702, %v2062
    %v2383 = vmul.f32 %v702, %v2063
    %v2384 = vmul.f32 %v706, %v2064
    %v2385 = vmul.f32 %v706, %v2065
    %v2386 = vmul.f32 %v706, %v2066
    %v2387 = vmul.f32 %v706, %v2067
    %v2388 = vmul.f32 %v726, %v2132
    %v2389 = vmul.f32 %v726, %v2133
    %v2390 = vmul.f32 %v726, %v2134
    %v2391 = vmul.f32 %v726, %v2135
    %v2392 = vmul.f32 %v730, %v2136
    %v2393 = vmul.f32 %v730, %v2137
    %v2394 = vmul.f32 %v730, %v2138
    %v2395 = vmul.f32 %v730, %v2139
    %v2396 = vmul.f32 %v734, %v2140
    %v2397 = vmul.f32 %v734, %v2141
    %v2398 = vmul.f32 %v734, %v2142
    %v2399 = vmul.f32 %v734, %v2143
    %v2400 = vmul.f32 %v738, %v2144
    %v2401 = vmul.f32 %v738, %v2145
    %v2402 = vmul.f32 %v738, %v2146
    %v2403 = vmul.f32 %v738, %v2147
    %v2404 = vadd.f32 %v2372, %v2388
    %v2405 = vadd.f32 %v2373, %v2389
    %v2406 = vadd.f32 %v2374, %v2390
    %v2407 = vadd.f32 %v2375, %v2391
    %v2408 = vadd.f32 %v2376, %v2392
    %v2409 = vadd.f32 %v2377, %v2393
    %v2410 = vadd.f32 %v2378, %v2394
    %v2411 = vadd.f32 %v2379, %v2395
    %v2412 = vadd.f32 %v2380, %v2396
    %v2413 = vadd.f32 %v2381, %v2397
    %v2414 = vadd.f32 %v2382, %v2398
    %v2415 = vadd.f32 %v2383, %v2399
    %v2416 = vadd.f32 %v2384, %v2400
    %v2417 = vadd.f32 %v2385, %v2401
    %v2418 = vadd.f32 %v2386, %v2402
    %v2419 = vadd.f32 %v2387, %v2403
    %v2420 = vmul.f32 %v774, %v2212
    %v2421 = vmul.f32 %v774, %v2213
    %v2422 = vmul.f32 %v774, %v2214
    %v2423 = vmul.f32 %v774, %v2215
    %v2424 = vmul.f32 %v778, %v2216
    %v2425 = vmul.f32 %v778, %v2217
    %v2426 = vmul.f32 %v778, %v2218
    %v2427 = vmul.f32 %v778, %v2219
    %v2428 = vmul.f32 %v782, %v2220
    %v2429 = vmul.f32 %v782, %v2221
    %v2430 = vmul.f32 %v782, %v2222
    %v2431 = vmul.f32 %v782, %v2223
    %v2432 = vmul.f32 %v786, %v2224
    %v2433 = vmul.f32 %v786, %v2225
    %v2434 = vmul.f32 %v786, %v2226
    %v2435 = vmul.f32 %v786, %v2227
    %v2436 = vadd.f32 %v2404, %v2420
    %v2437 = vadd.f32 %v2405, %v2421
    %v2438 = vadd.f32 %v2406, %v2422
    %v2439 = vadd.f32 %v2407, %v2423
    %v2440 = vadd.f32 %v2408, %v2424
    %v2441 = vadd.f32 %v2409, %v2425
    %v2442 = vadd.f32 %v2410, %v2426
    %v2443 = vadd.f32 %v2411, %v2427
    %v2444 = vadd.f32 %v2412, %v2428
    %v2445 = vadd.f32 %v2413, %v2429
    %v2446 = vadd.f32 %v2414, %v2430
    %v2447 = vadd.f32 %v2415, %v2431
    %v2448 = vadd.f32 %v2416, %v2432
    %v2449 = vadd.f32 %v2417, %v2433
    %v2450 = vadd.f32 %v2418, %v2434
    %v2451 = vadd.f32 %v2419, %v2435
    %v2452 = vadd.f32 %v2436, %v822
    %v2453 = vadd.f32 %v2437, %v822
    %v2454 = vadd.f32 %v2438, %v822
    %v2455 = vadd.f32 %v2439, %v822
    %v2456 = vadd.f32 %v2440, %v826
    %v2457 = vadd.f32 %v2441, %v826
    %v2458 = vadd.f32 %v2442, %v826
    %v2459 = vadd.f32 %v2443, %v826
    %v2460 = vadd.f32 %v2444, %v830
    %v2461 = vadd.f32 %v2445, %v830
    %v2462 = vadd.f32 %v2446, %v830
    %v2463 = vadd.f32 %v2447, %v830
    %v2464 = vadd.f32 %v2448, %v834
    %v2465 = vadd.f32 %v2449, %v834
    %v2466 = vadd.f32 %v2450, %v834
    %v2467 = vadd.f32 %v2451, %v834
    %v2468 = vtanh.pop %v2452
    %v2469 = vtanh.pop %v2453
    %v2470 = vtanh.pop %v2454
    %v2471 = vtanh.pop %v2455
    %v2472 = vtanh.pop %v2456
    %v2473 = vtanh.pop %v2457
    %v2474 = vtanh.pop %v2458
    %v2475 = vtanh.pop %v2459
    %v2476 = vtanh.pop %v2460
    %v2477 = vtanh.pop %v2461
    %v2478 = vtanh.pop %v2462
    %v2479 = vtanh.pop %v2463
    %v2480 = vtanh.pop %v2464
    %v2481 = vtanh.pop %v2465
    %v2482 = vtanh.pop %v2466
    %v2483 = vtanh.pop %v2467
    %v2484 = vmul.f32 %v870, %v2468
    %v2485 = vmul.f32 %v870, %v2469
    %v2486 = vmul.f32 %v870, %v2470
    %v2487 = vmul.f32 %v870, %v2471
    %v2488 = vmul.f32 %v874, %v2472
    %v2489 = vmul.f32 %v874, %v2473
    %v2490 = vmul.f32 %v874, %v2474
    %v2491 = vmul.f32 %v874, %v2475
    %v2492 = vmul.f32 %v878, %v2476
    %v2493 = vmul.f32 %v878, %v2477
    %v2494 = vmul.f32 %v878, %v2478
    %v2495 = vmul.f32 %v878, %v2479
    %v2496 = vmul.f32 %v882, %v2480
    %v2497 = vmul.f32 %v882, %v2481
    %v2498 = vmul.f32 %v882, %v2482
    %v2499 = vmul.f32 %v882, %v2483
    %v2500 = vadd.f32 %v2452, %v2484
    %v2501 = vadd.f32 %v2453, %v2485
    %v2502 = vadd.f32 %v2454, %v2486
    %v2503 = vadd.f32 %v2455, %v2487
    %v2504 = vadd.f32 %v2456, %v2488
    %v2505 = vadd.f32 %v2457, %v2489
    %v2506 = vadd.f32 %v2458, %v2490
    %v2507 = vadd.f32 %v2459, %v2491
    %v2508 = vadd.f32 %v2460, %v2492
    %v2509 = vadd.f32 %v2461, %v2493
    %v2510 = vadd.f32 %v2462, %v2494
    %v2511 = vadd.f32 %v2463, %v2495
    %v2512 = vadd.f32 %v2464, %v2496
    %v2513 = vadd.f32 %v2465, %v2497
    %v2514 = vadd.f32 %v2466, %v2498
    %v2515 = vadd.f32 %v2467, %v2499
    %v2516 = vmul.f32 %v918, %v2052
    %v2517 = vmul.f32 %v918, %v2053
    %v2518 = vmul.f32 %v918, %v2054
    %v2519 = vmul.f32 %v918, %v2055
    %v2520 = vmul.f32 %v922, %v2056
    %v2521 = vmul.f32 %v922, %v2057
    %v2522 = vmul.f32 %v922, %v2058
    %v2523 = vmul.f32 %v922, %v2059
    %v2524 = vmul.f32 %v926, %v2060
    %v2525 = vmul.f32 %v926, %v2061
    %v2526 = vmul.f32 %v926, %v2062
    %v2527 = vmul.f32 %v926, %v2063
    %v2528 = vmul.f32 %v930, %v2064
    %v2529 = vmul.f32 %v930, %v2065
    %v2530 = vmul.f32 %v930, %v2066
    %v2531 = vmul.f32 %v930, %v2067
    %v2532 = vmul.f32 %v950, %v2132
    %v2533 = vmul.f32 %v950, %v2133
    %v2534 = vmul.f32 %v950, %v2134
    %v2535 = vmul.f32 %v950, %v2135
    %v2536 = vmul.f32 %v954, %v2136
    %v2537 = vmul.f32 %v954, %v2137
    %v2538 = vmul.f32 %v954, %v2138
    %v2539 = vmul.f32 %v954, %v2139
    %v2540 = vmul.f32 %v958, %v2140
    %v2541 = vmul.f32 %v958, %v2141
    %v2542 = vmul.f32 %v958, %v2142
    %v2543 = vmul.f32 %v958, %v2143
    %v2544 = vmul.f32 %v962, %v2144
    %v2545 = vmul.f32 %v962, %v2145
    %v2546 = vmul.f32 %v962, %v2146
    %v2547 = vmul.f32 %v962, %v2147
    %v2548 = vadd.f32 %v2516, %v2532
    %v2549 = vadd.f32 %v2517, %v2533
    %v2550 = vadd.f32 %v2518, %v2534
    %v2551 = vadd.f32 %v2519, %v2535
    %v2552 = vadd.f32 %v2520, %v2536
    %v2553 = vadd.f32 %v2521, %v2537
    %v2554 = vadd.f32 %v2522, %v2538
    %v2555 = vadd.f32 %v2523, %v2539
    %v2556 = vadd.f32 %v2524, %v2540
    %v2557 = vadd.f32 %v2525, %v2541
    %v2558 = vadd.f32 %v2526, %v2542
    %v2559 = vadd.f32 %v2527, %v2543
    %v2560 = vadd.f32 %v2528, %v2544
    %v2561 = vadd.f32 %v2529, %v2545
    %v2562 = vadd.f32 %v2530, %v2546
    %v2563 = vadd.f32 %v2531, %v2547
    %v2564 = vmul.f32 %v998, %v2212
    %v2565 = vmul.f32 %v998, %v2213
    %v2566 = vmul.f32 %v998, %v2214
    %v2567 = vmul.f32 %v998, %v2215
    %v2568 = vmul.f32 %v1002, %v2216
    %v2569 = vmul.f32 %v1002, %v2217
    %v2570 = vmul.f32 %v1002, %v2218
    %v2571 = vmul.f32 %v1002, %v2219
    %v2572 = vmul.f32 %v1006, %v2220
    %v2573 = vmul.f32 %v1006, %v2221
    %v2574 = vmul.f32 %v1006, %v2222
    %v2575 = vmul.f32 %v1006, %v2223
    %v2576 = vmul.f32 %v1010, %v2224
    %v2577 = vmul.f32 %v1010, %v2225
    %v2578 = vmul.f32 %v1010, %v2226
    %v2579 = vmul.f32 %v1010, %v2227
    %v2580 = vadd.f32 %v2548, %v2564
    %v2581 = vadd.f32 %v2549, %v2565
    %v2582 = vadd.f32 %v2550, %v2566
    %v2583 = vadd.f32 %v2551, %v2567
    %v2584 = vadd.f32 %v2552, %v2568
    %v2585 = vadd.f32 %v2553, %v2569
    %v2586 = vadd.f32 %v2554, %v2570
    %v2587 = vadd.f32 %v2555, %v2571
    %v2588 = vadd.f32 %v2556, %v2572
    %v2589 = vadd.f32 %v2557, %v2573
    %v2590 = vadd.f32 %v2558, %v2574
    %v2591 = vadd.f32 %v2559, %v2575
    %v2592 = vadd.f32 %v2560, %v2576
    %v2593 = vadd.f32 %v2561, %v2577
    %v2594 = vadd.f32 %v2562, %v2578
    %v2595 = vadd.f32 %v2563, %v2579
    %v2596 = vadd.f32 %v2580, %v1046
    %v2597 = vadd.f32 %v2581, %v1046
    %v2598 = vadd.f32 %v2582, %v1046
    %v2599 = vadd.f32 %v2583, %v1046
    %v2600 = vadd.f32 %v2584, %v1050
    %v2601 = vadd.f32 %v2585, %v1050
    %v2602 = vadd.f32 %v2586, %v1050
    %v2603 = vadd.f32 %v2587, %v1050
    %v2604 = vadd.f32 %v2588, %v1054
    %v2605 = vadd.f32 %v2589, %v1054
    %v2606 = vadd.f32 %v2590, %v1054
    %v2607 = vadd.f32 %v2591, %v1054
    %v2608 = vadd.f32 %v2592, %v1058
    %v2609 = vadd.f32 %v2593, %v1058
    %v2610 = vadd.f32 %v2594, %v1058
    %v2611 = vadd.f32 %v2595, %v1058
    %v2612 = vtanh.pop %v2596
    %v2613 = vtanh.pop %v2597
    %v2614 = vtanh.pop %v2598
    %v2615 = vtanh.pop %v2599
    %v2616 = vtanh.pop %v2600
    %v2617 = vtanh.pop %v2601
    %v2618 = vtanh.pop %v2602
    %v2619 = vtanh.pop %v2603
    %v2620 = vtanh.pop %v2604
    %v2621 = vtanh.pop %v2605
    %v2622 = vtanh.pop %v2606
    %v2623 = vtanh.pop %v2607
    %v2624 = vtanh.pop %v2608
    %v2625 = vtanh.pop %v2609
    %v2626 = vtanh.pop %v2610
    %v2627 = vtanh.pop %v2611
    %v2628 = vmul.f32 %v1094, %v2612
    %v2629 = vmul.f32 %v1094, %v2613
    %v2630 = vmul.f32 %v1094, %v2614
    %v2631 = vmul.f32 %v1094, %v2615
    %v2632 = vmul.f32 %v1098, %v2616
    %v2633 = vmul.f32 %v1098, %v2617
    %v2634 = vmul.f32 %v1098, %v2618
    %v2635 = vmul.f32 %v1098, %v2619
    %v2636 = vmul.f32 %v1102, %v2620
    %v2637 = vmul.f32 %v1102, %v2621
    %v2638 = vmul.f32 %v1102, %v2622
    %v2639 = vmul.f32 %v1102, %v2623
    %v2640 = vmul.f32 %v1106, %v2624
    %v2641 = vmul.f32 %v1106, %v2625
    %v2642 = vmul.f32 %v1106, %v2626
    %v2643 = vmul.f32 %v1106, %v2627
    %v2644 = vadd.f32 %v2596, %v2628
    %v2645 = vadd.f32 %v2597, %v2629
    %v2646 = vadd.f32 %v2598, %v2630
    %v2647 = vadd.f32 %v2599, %v2631
    %v2648 = vadd.f32 %v2600, %v2632
    %v2649 = vadd.f32 %v2601, %v2633
    %v2650 = vadd.f32 %v2602, %v2634
    %v2651 = vadd.f32 %v2603, %v2635
    %v2652 = vadd.f32 %v2604, %v2636
    %v2653 = vadd.f32 %v2605, %v2637
    %v2654 = vadd.f32 %v2606, %v2638
    %v2655 = vadd.f32 %v2607, %v2639
    %v2656 = vadd.f32 %v2608, %v2640
    %v2657 = vadd.f32 %v2609, %v2641
    %v2658 = vadd.f32 %v2610, %v2642
    %v2659 = vadd.f32 %v2611, %v2643
    %v2660 = vmul.f32 %v1142, %v2356
    %v2661 = vmul.f32 %v1142, %v2357
    %v2662 = vmul.f32 %v1142, %v2358
    %v2663 = vmul.f32 %v1142, %v2359
    %v2664 = vmul.f32 %v1146, %v2360
    %v2665 = vmul.f32 %v1146, %v2361
    %v2666 = vmul.f32 %v1146, %v2362
    %v2667 = vmul.f32 %v1146, %v2363
    %v2668 = vmul.f32 %v1150, %v2364
    %v2669 = vmul.f32 %v1150, %v2365
    %v2670 = vmul.f32 %v1150, %v2366
    %v2671 = vmul.f32 %v1150, %v2367
    %v2672 = vmul.f32 %v1154, %v2368
    %v2673 = vmul.f32 %v1154, %v2369
    %v2674 = vmul.f32 %v1154, %v2370
    %v2675 = vmul.f32 %v1154, %v2371
    %v2676 = vmul.f32 %v1174, %v2500
    %v2677 = vmul.f32 %v1174, %v2501
    %v2678 = vmul.f32 %v1174, %v2502
    %v2679 = vmul.f32 %v1174, %v2503
    %v2680 = vmul.f32 %v1178, %v2504
    %v2681 = vmul.f32 %v1178, %v2505
    %v2682 = vmul.f32 %v1178, %v2506
    %v2683 = vmul.f32 %v1178, %v2507
    %v2684 = vmul.f32 %v1182, %v2508
    %v2685 = vmul.f32 %v1182, %v2509
    %v2686 = vmul.f32 %v1182, %v2510
    %v2687 = vmul.f32 %v1182, %v2511
    %v2688 = vmul.f32 %v1186, %v2512
    %v2689 = vmul.f32 %v1186, %v2513
    %v2690 = vmul.f32 %v1186, %v2514
    %v2691 = vmul.f32 %v1186, %v2515
    %v2692 = vadd.f32 %v2660, %v2676
    %v2693 = vadd.f32 %v2661, %v2677
    %v2694 = vadd.f32 %v2662, %v2678
    %v2695 = vadd.f32 %v2663, %v2679
    %v2696 = vadd.f32 %v2664, %v2680
    %v2697 = vadd.f32 %v2665, %v2681
    %v2698 = vadd.f32 %v2666, %v2682
    %v2699 = vadd.f32 %v2667, %v2683
    %v2700 = vadd.f32 %v2668, %v2684
    %v2701 = vadd.f32 %v2669, %v2685
    %v2702 = vadd.f32 %v2670, %v2686
    %v2703 = vadd.f32 %v2671, %v2687
    %v2704 = vadd.f32 %v2672, %v2688
    %v2705 = vadd.f32 %v2673, %v2689
    %v2706 = vadd.f32 %v2674, %v2690
    %v2707 = vadd.f32 %v2675, %v2691
    %v2708 = vmul.f32 %v1222, %v2644
    %v2709 = vmul.f32 %v1222, %v2645
    %v2710 = vmul.f32 %v1222, %v2646
    %v2711 = vmul.f32 %v1222, %v2647
    %v2712 = vmul.f32 %v1226, %v2648
    %v2713 = vmul.f32 %v1226, %v2649
    %v2714 = vmul.f32 %v1226, %v2650
    %v2715 = vmul.f32 %v1226, %v2651
    %v2716 = vmul.f32 %v1230, %v2652
    %v2717 = vmul.f32 %v1230, %v2653
    %v2718 = vmul.f32 %v1230, %v2654
    %v2719 = vmul.f32 %v1230, %v2655
    %v2720 = vmul.f32 %v1234, %v2656
    %v2721 = vmul.f32 %v1234, %v2657
    %v2722 = vmul.f32 %v1234, %v2658
    %v2723 = vmul.f32 %v1234, %v2659
    %v2724 = vadd.f32 %v2692, %v2708
    %v2725 = vadd.f32 %v2693, %v2709
    %v2726 = vadd.f32 %v2694, %v2710
    %v2727 = vadd.f32 %v2695, %v2711
    %v2728 = vadd.f32 %v2696, %v2712
    %v2729 = vadd.f32 %v2697, %v2713
    %v2730 = vadd.f32 %v2698, %v2714
    %v2731 = vadd.f32 %v2699, %v2715
    %v2732 = vadd.f32 %v2700, %v2716
    %v2733 = vadd.f32 %v2701, %v2717
    %v2734 = vadd.f32 %v2702, %v2718
    %v2735 = vadd.f32 %v2703, %v2719
    %v2736 = vadd.f32 %v2704, %v2720
    %v2737 = vadd.f32 %v2705, %v2721
    %v2738 = vadd.f32 %v2706, %v2722
    %v2739 = vadd.f32 %v2707, %v2723
    %v2740 = vadd.f32 %v2724, %v1270
    %v2741 = vadd.f32 %v2725, %v1270
    %v2742 = vadd.f32 %v2726, %v1270
    %v2743 = vadd.f32 %v2727, %v1270
    %v2744 = vadd.f32 %v2728, %v1274
    %v2745 = vadd.f32 %v2729, %v1274
    %v2746 = vadd.f32 %v2730, %v1274
    %v2747 = vadd.f32 %v2731, %v1274
    %v2748 = vadd.f32 %v2732, %v1278
    %v2749 = vadd.f32 %v2733, %v1278
    %v2750 = vadd.f32 %v2734, %v1278
    %v2751 = vadd.f32 %v2735, %v1278
    %v2752 = vadd.f32 %v2736, %v1282
    %v2753 = vadd.f32 %v2737, %v1282
    %v2754 = vadd.f32 %v2738, %v1282
    %v2755 = vadd.f32 %v2739, %v1282
    %v2756 = vtanh.pop %v2740
    %v2757 = vtanh.pop %v2741
    %v2758 = vtanh.pop %v2742
    %v2759 = vtanh.pop %v2743
    %v2760 = vtanh.pop %v2744
    %v2761 = vtanh.pop %v2745
    %v2762 = vtanh.pop %v2746
    %v2763 = vtanh.pop %v2747
    %v2764 = vtanh.pop %v2748
    %v2765 = vtanh.pop %v2749
    %v2766 = vtanh.pop %v2750
    %v2767 = vtanh.pop %v2751
    %v2768 = vtanh.pop %v2752
    %v2769 = vtanh.pop %v2753
    %v2770 = vtanh.pop %v2754
    %v2771 = vtanh.pop %v2755
    %v2772 = vmul.f32 %v1318, %v2756
    %v2773 = vmul.f32 %v1318, %v2757
    %v2774 = vmul.f32 %v1318, %v2758
    %v2775 = vmul.f32 %v1318, %v2759
    %v2776 = vmul.f32 %v1322, %v2760
    %v2777 = vmul.f32 %v1322, %v2761
    %v2778 = vmul.f32 %v1322, %v2762
    %v2779 = vmul.f32 %v1322, %v2763
    %v2780 = vmul.f32 %v1326, %v2764
    %v2781 = vmul.f32 %v1326, %v2765
    %v2782 = vmul.f32 %v1326, %v2766
    %v2783 = vmul.f32 %v1326, %v2767
    %v2784 = vmul.f32 %v1330, %v2768
    %v2785 = vmul.f32 %v1330, %v2769
    %v2786 = vmul.f32 %v1330, %v2770
    %v2787 = vmul.f32 %v1330, %v2771
    %v2788 = vadd.f32 %v2740, %v2772
    %v2789 = vadd.f32 %v2741, %v2773
    %v2790 = vadd.f32 %v2742, %v2774
    %v2791 = vadd.f32 %v2743, %v2775
    %v2792 = vadd.f32 %v2744, %v2776
    %v2793 = vadd.f32 %v2745, %v2777
    %v2794 = vadd.f32 %v2746, %v2778
    %v2795 = vadd.f32 %v2747, %v2779
    %v2796 = vadd.f32 %v2748, %v2780
    %v2797 = vadd.f32 %v2749, %v2781
    %v2798 = vadd.f32 %v2750, %v2782
    %v2799 = vadd.f32 %v2751, %v2783
    %v2800 = vadd.f32 %v2752, %v2784
    %v2801 = vadd.f32 %v2753, %v2785
    %v2802 = vadd.f32 %v2754, %v2786
    %v2803 = vadd.f32 %v2755, %v2787
    %v2804 = vmul.f32 %v1366, %v2356
    %v2805 = vmul.f32 %v1366, %v2357
    %v2806 = vmul.f32 %v1366, %v2358
    %v2807 = vmul.f32 %v1366, %v2359
    %v2808 = vmul.f32 %v1370, %v2360
    %v2809 = vmul.f32 %v1370, %v2361
    %v2810 = vmul.f32 %v1370, %v2362
    %v2811 = vmul.f32 %v1370, %v2363
    %v2812 = vmul.f32 %v1374, %v2364
    %v2813 = vmul.f32 %v1374, %v2365
    %v2814 = vmul.f32 %v1374, %v2366
    %v2815 = vmul.f32 %v1374, %v2367
    %v2816 = vmul.f32 %v1378, %v2368
    %v2817 = vmul.f32 %v1378, %v2369
    %v2818 = vmul.f32 %v1378, %v2370
    %v2819 = vmul.f32 %v1378, %v2371
    %v2820 = vmul.f32 %v1398, %v2500
    %v2821 = vmul.f32 %v1398, %v2501
    %v2822 = vmul.f32 %v1398, %v2502
    %v2823 = vmul.f32 %v1398, %v2503
    %v2824 = vmul.f32 %v1402, %v2504
    %v2825 = vmul.f32 %v1402, %v2505
    %v2826 = vmul.f32 %v1402, %v2506
    %v2827 = vmul.f32 %v1402, %v2507
    %v2828 = vmul.f32 %v1406, %v2508
    %v2829 = vmul.f32 %v1406, %v2509
    %v2830 = vmul.f32 %v1406, %v2510
    %v2831 = vmul.f32 %v1406, %v2511
    %v2832 = vmul.f32 %v1410, %v2512
    %v2833 = vmul.f32 %v1410, %v2513
    %v2834 = vmul.f32 %v1410, %v2514
    %v2835 = vmul.f32 %v1410, %v2515
    %v2836 = vadd.f32 %v2804, %v2820
    %v2837 = vadd.f32 %v2805, %v2821
    %v2838 = vadd.f32 %v2806, %v2822
    %v2839 = vadd.f32 %v2807, %v2823
    %v2840 = vadd.f32 %v2808, %v2824
    %v2841 = vadd.f32 %v2809, %v2825
    %v2842 = vadd.f32 %v2810, %v2826
    %v2843 = vadd.f32 %v2811, %v2827
    %v2844 = vadd.f32 %v2812, %v2828
    %v2845 = vadd.f32 %v2813, %v2829
    %v2846 = vadd.f32 %v2814, %v2830
    %v2847 = vadd.f32 %v2815, %v2831
    %v2848 = vadd.f32 %v2816, %v2832
    %v2849 = vadd.f32 %v2817, %v2833
    %v2850 = vadd.f32 %v2818, %v2834
    %v2851 = vadd.f32 %v2819, %v2835
    %v2852 = vmul.f32 %v1446, %v2644
    %v2853 = vmul.f32 %v1446, %v2645
    %v2854 = vmul.f32 %v1446, %v2646
    %v2855 = vmul.f32 %v1446, %v2647
    %v2856 = vmul.f32 %v1450, %v2648
    %v2857 = vmul.f32 %v1450, %v2649
    %v2858 = vmul.f32 %v1450, %v2650
    %v2859 = vmul.f32 %v1450, %v2651
    %v2860 = vmul.f32 %v1454, %v2652
    %v2861 = vmul.f32 %v1454, %v2653
    %v2862 = vmul.f32 %v1454, %v2654
    %v2863 = vmul.f32 %v1454, %v2655
    %v2864 = vmul.f32 %v1458, %v2656
    %v2865 = vmul.f32 %v1458, %v2657
    %v2866 = vmul.f32 %v1458, %v2658
    %v2867 = vmul.f32 %v1458, %v2659
    %v2868 = vadd.f32 %v2836, %v2852
    %v2869 = vadd.f32 %v2837, %v2853
    %v2870 = vadd.f32 %v2838, %v2854
    %v2871 = vadd.f32 %v2839, %v2855
    %v2872 = vadd.f32 %v2840, %v2856
    %v2873 = vadd.f32 %v2841, %v2857
    %v2874 = vadd.f32 %v2842, %v2858
    %v2875 = vadd.f32 %v2843, %v2859
    %v2876 = vadd.f32 %v2844, %v2860
    %v2877 = vadd.f32 %v2845, %v2861
    %v2878 = vadd.f32 %v2846, %v2862
    %v2879 = vadd.f32 %v2847, %v2863
    %v2880 = vadd.f32 %v2848, %v2864
    %v2881 = vadd.f32 %v2849, %v2865
    %v2882 = vadd.f32 %v2850, %v2866
    %v2883 = vadd.f32 %v2851, %v2867
    %v2884 = vadd.f32 %v2868, %v1494
    %v2885 = vadd.f32 %v2869, %v1494
    %v2886 = vadd.f32 %v2870, %v1494
    %v2887 = vadd.f32 %v2871, %v1494
    %v2888 = vadd.f32 %v2872, %v1498
    %v2889 = vadd.f32 %v2873, %v1498
    %v2890 = vadd.f32 %v2874, %v1498
    %v2891 = vadd.f32 %v2875, %v1498
    %v2892 = vadd.f32 %v2876, %v1502
    %v2893 = vadd.f32 %v2877, %v1502
    %v2894 = vadd.f32 %v2878, %v1502
    %v2895 = vadd.f32 %v2879, %v1502
    %v2896 = vadd.f32 %v2880, %v1506
    %v2897 = vadd.f32 %v2881, %v1506
    %v2898 = vadd.f32 %v2882, %v1506
    %v2899 = vadd.f32 %v2883, %v1506
    %v2900 = vtanh.pop %v2884
    %v2901 = vtanh.pop %v2885
    %v2902 = vtanh.pop %v2886
    %v2903 = vtanh.pop %v2887
    %v2904 = vtanh.pop %v2888
    %v2905 = vtanh.pop %v2889
    %v2906 = vtanh.pop %v2890
    %v2907 = vtanh.pop %v2891
    %v2908 = vtanh.pop %v2892
    %v2909 = vtanh.pop %v2893
    %v2910 = vtanh.pop %v2894
    %v2911 = vtanh.pop %v2895
    %v2912 = vtanh.pop %v2896
    %v2913 = vtanh.pop %v2897
    %v2914 = vtanh.pop %v2898
    %v2915 = vtanh.pop %v2899
    %v2916 = vmul.f32 %v1542, %v2900
    %v2917 = vmul.f32 %v1542, %v2901
    %v2918 = vmul.f32 %v1542, %v2902
    %v2919 = vmul.f32 %v1542, %v2903
    %v2920 = vmul.f32 %v1546, %v2904
    %v2921 = vmul.f32 %v1546, %v2905
    %v2922 = vmul.f32 %v1546, %v2906
    %v2923 = vmul.f32 %v1546, %v2907
    %v2924 = vmul.f32 %v1550, %v2908
    %v2925 = vmul.f32 %v1550, %v2909
    %v2926 = vmul.f32 %v1550, %v2910
    %v2927 = vmul.f32 %v1550, %v2911
    %v2928 = vmul.f32 %v1554, %v2912
    %v2929 = vmul.f32 %v1554, %v2913
    %v2930 = vmul.f32 %v1554, %v2914
    %v2931 = vmul.f32 %v1554, %v2915
    %v2932 = vadd.f32 %v2884, %v2916
    %v2933 = vadd.f32 %v2885, %v2917
    %v2934 = vadd.f32 %v2886, %v2918
    %v2935 = vadd.f32 %v2887, %v2919
    %v2936 = vadd.f32 %v2888, %v2920
    %v2937 = vadd.f32 %v2889, %v2921
    %v2938 = vadd.f32 %v2890, %v2922
    %v2939 = vadd.f32 %v2891, %v2923
    %v2940 = vadd.f32 %v2892, %v2924
    %v2941 = vadd.f32 %v2893, %v2925
    %v2942 = vadd.f32 %v2894, %v2926
    %v2943 = vadd.f32 %v2895, %v2927
    %v2944 = vadd.f32 %v2896, %v2928
    %v2945 = vadd.f32 %v2897, %v2929
    %v2946 = vadd.f32 %v2898, %v2930
    %v2947 = vadd.f32 %v2899, %v2931
    %v2948 = vmul.f32 %v1590, %v2356
    %v2949 = vmul.f32 %v1590, %v2357
    %v2950 = vmul.f32 %v1590, %v2358
    %v2951 = vmul.f32 %v1590, %v2359
    %v2952 = vmul.f32 %v1594, %v2360
    %v2953 = vmul.f32 %v1594, %v2361
    %v2954 = vmul.f32 %v1594, %v2362
    %v2955 = vmul.f32 %v1594, %v2363
    %v2956 = vmul.f32 %v1598, %v2364
    %v2957 = vmul.f32 %v1598, %v2365
    %v2958 = vmul.f32 %v1598, %v2366
    %v2959 = vmul.f32 %v1598, %v2367
    %v2960 = vmul.f32 %v1602, %v2368
    %v2961 = vmul.f32 %v1602, %v2369
    %v2962 = vmul.f32 %v1602, %v2370
    %v2963 = vmul.f32 %v1602, %v2371
    %v2964 = vmul.f32 %v1622, %v2500
    %v2965 = vmul.f32 %v1622, %v2501
    %v2966 = vmul.f32 %v1622, %v2502
    %v2967 = vmul.f32 %v1622, %v2503
    %v2968 = vmul.f32 %v1626, %v2504
    %v2969 = vmul.f32 %v1626, %v2505
    %v2970 = vmul.f32 %v1626, %v2506
    %v2971 = vmul.f32 %v1626, %v2507
    %v2972 = vmul.f32 %v1630, %v2508
    %v2973 = vmul.f32 %v1630, %v2509
    %v2974 = vmul.f32 %v1630, %v2510
    %v2975 = vmul.f32 %v1630, %v2511
    %v2976 = vmul.f32 %v1634, %v2512
    %v2977 = vmul.f32 %v1634, %v2513
    %v2978 = vmul.f32 %v1634, %v2514
    %v2979 = vmul.f32 %v1634, %v2515
    %v2980 = vadd.f32 %v2948, %v2964
    %v2981 = vadd.f32 %v2949, %v2965
    %v2982 = vadd.f32 %v2950, %v2966
    %v2983 = vadd.f32 %v2951, %v2967
    %v2984 = vadd.f32 %v2952, %v2968
    %v2985 = vadd.f32 %v2953, %v2969
    %v2986 = vadd.f32 %v2954, %v2970
    %v2987 = vadd.f32 %v2955, %v2971
    %v2988 = vadd.f32 %v2956, %v2972
    %v2989 = vadd.f32 %v2957, %v2973
    %v2990 = vadd.f32 %v2958, %v2974
    %v2991 = vadd.f32 %v2959, %v2975
    %v2992 = vadd.f32 %v2960, %v2976
    %v2993 = vadd.f32 %v2961, %v2977
    %v2994 = vadd.f32 %v2962, %v2978
    %v2995 = vadd.f32 %v2963, %v2979
    %v2996 = vmul.f32 %v1670, %v2644
    %v2997 = vmul.f32 %v1670, %v2645
    %v2998 = vmul.f32 %v1670, %v2646
    %v2999 = vmul.f32 %v1670, %v2647
    %v3000 = vmul.f32 %v1674, %v2648
    %v3001 = vmul.f32 %v1674, %v2649
    %v3002 = vmul.f32 %v1674, %v2650
    %v3003 = vmul.f32 %v1674, %v2651
    %v3004 = vmul.f32 %v1678, %v2652
    %v3005 = vmul.f32 %v1678, %v2653
    %v3006 = vmul.f32 %v1678, %v2654
    %v3007 = vmul.f32 %v1678, %v2655
    %v3008 = vmul.f32 %v1682, %v2656
    %v3009 = vmul.f32 %v1682, %v2657
    %v3010 = vmul.f32 %v1682, %v2658
    %v3011 = vmul.f32 %v1682, %v2659
    %v3012 = vadd.f32 %v2980, %v2996
    %v3013 = vadd.f32 %v2981, %v2997
    %v3014 = vadd.f32 %v2982, %v2998
    %v3015 = vadd.f32 %v2983, %v2999
    %v3016 = vadd.f32 %v2984, %v3000
    %v3017 = vadd.f32 %v2985, %v3001
    %v3018 = vadd.f32 %v2986, %v3002
    %v3019 = vadd.f32 %v2987, %v3003
    %v3020 = vadd.f32 %v2988, %v3004
    %v3021 = vadd.f32 %v2989, %v3005
    %v3022 = vadd.f32 %v2990, %v3006
    %v3023 = vadd.f32 %v2991, %v3007
    %v3024 = vadd.f32 %v2992, %v3008
    %v3025 = vadd.f32 %v2993, %v3009
    %v3026 = vadd.f32 %v2994, %v3010
    %v3027 = vadd.f32 %v2995, %v3011
    %v3028 = vadd.f32 %v3012, %v1718
    %v3029 = vadd.f32 %v3013, %v1718
    %v3030 = vadd.f32 %v3014, %v1718
    %v3031 = vadd.f32 %v3015, %v1718
    %v3032 = vadd.f32 %v3016, %v1722
    %v3033 = vadd.f32 %v3017, %v1722
    %v3034 = vadd.f32 %v3018, %v1722
    %v3035 = vadd.f32 %v3019, %v1722
    %v3036 = vadd.f32 %v3020, %v1726
    %v3037 = vadd.f32 %v3021, %v1726
    %v3038 = vadd.f32 %v3022, %v1726
    %v3039 = vadd.f32 %v3023, %v1726
    %v3040 = vadd.f32 %v3024, %v1730
    %v3041 = vadd.f32 %v3025, %v1730
    %v3042 = vadd.f32 %v3026, %v1730
    %v3043 = vadd.f32 %v3027, %v1730
    %v3044 = vtanh.pop %v3028
    %v3045 = vtanh.pop %v3029
    %v3046 = vtanh.pop %v3030
    %v3047 = vtanh.pop %v3031
    %v3048 = vtanh.pop %v3032
    %v3049 = vtanh.pop %v3033
    %v3050 = vtanh.pop %v3034
    %v3051 = vtanh.pop %v3035
    %v3052 = vtanh.pop %v3036
    %v3053 = vtanh.pop %v3037
    %v3054 = vtanh.pop %v3038
    %v3055 = vtanh.pop %v3039
    %v3056 = vtanh.pop %v3040
    %v3057 = vtanh.pop %v3041
    %v3058 = vtanh.pop %v3042
    %v3059 = vtanh.pop %v3043
    %v3060 = vmul.f32 %v1766, %v3044
    %v3061 = vmul.f32 %v1766, %v3045
    %v3062 = vmul.f32 %v1766, %v3046
    %v3063 = vmul.f32 %v1766, %v3047
    %v3064 = vmul.f32 %v1770, %v3048
    %v3065 = vmul.f32 %v1770, %v3049
    %v3066 = vmul.f32 %v1770, %v3050
    %v3067 = vmul.f32 %v1770, %v3051
    %v3068 = vmul.f32 %v1774, %v3052
    %v3069 = vmul.f32 %v1774, %v3053
    %v3070 = vmul.f32 %v1774, %v3054
    %v3071 = vmul.f32 %v1774, %v3055
    %v3072 = vmul.f32 %v1778, %v3056
    %v3073 = vmul.f32 %v1778, %v3057
    %v3074 = vmul.f32 %v1778, %v3058
    %v3075 = vmul.f32 %v1778, %v3059
    %v3076 = vadd.f32 %v3028, %v3060
    %v3077 = vadd.f32 %v3029, %v3061
    %v3078 = vadd.f32 %v3030, %v3062
    %v3079 = vadd.f32 %v3031, %v3063
    %v3080 = vadd.f32 %v3032, %v3064
    %v3081 = vadd.f32 %v3033, %v3065
    %v3082 = vadd.f32 %v3034, %v3066
    %v3083 = vadd.f32 %v3035, %v3067
    %v3084 = vadd.f32 %v3036, %v3068
    %v3085 = vadd.f32 %v3037, %v3069
    %v3086 = vadd.f32 %v3038, %v3070
    %v3087 = vadd.f32 %v3039, %v3071
    %v3088 = vadd.f32 %v3040, %v3072
    %v3089 = vadd.f32 %v3041, %v3073
    %v3090 = vadd.f32 %v3042, %v3074
    %v3091 = vadd.f32 %v3043, %v3075
    %v3092 = vmul.f32 %v1814, %v2788
    %v3093 = vmul.f32 %v1814, %v2789
    %v3094 = vmul.f32 %v1814, %v2790
    %v3095 = vmul.f32 %v1814, %v2791
    %v3096 = vmul.f32 %v1818, %v2792
    %v3097 = vmul.f32 %v1818, %v2793
    %v3098 = vmul.f32 %v1818, %v2794
    %v3099 = vmul.f32 %v1818, %v2795
    %v3100 = vmul.f32 %v1822, %v2796
    %v3101 = vmul.f32 %v1822, %v2797
    %v3102 = vmul.f32 %v1822, %v2798
    %v3103 = vmul.f32 %v1822, %v2799
    %v3104 = vmul.f32 %v1826, %v2800
    %v3105 = vmul.f32 %v1826, %v2801
    %v3106 = vmul.f32 %v1826, %v2802
    %v3107 = vmul.f32 %v1826, %v2803
    %v3108 = vmul.f32 %v1846, %v2932
    %v3109 = vmul.f32 %v1846, %v2933
    %v3110 = vmul.f32 %v1846, %v2934
    %v3111 = vmul.f32 %v1846, %v2935
    %v3112 = vmul.f32 %v1850, %v2936
    %v3113 = vmul.f32 %v1850, %v2937
    %v3114 = vmul.f32 %v1850, %v2938
    %v3115 = vmul.f32 %v1850, %v2939
    %v3116 = vmul.f32 %v1854, %v2940
    %v3117 = vmul.f32 %v1854, %v2941
    %v3118 = vmul.f32 %v1854, %v2942
    %v3119 = vmul.f32 %v1854, %v2943
    %v3120 = vmul.f32 %v1858, %v2944
    %v3121 = vmul.f32 %v1858, %v2945
    %v3122 = vmul.f32 %v1858, %v2946
    %v3123 = vmul.f32 %v1858, %v2947
    %v3124 = vadd.f32 %v3092, %v3108
    %v3125 = vadd.f32 %v3093, %v3109
    %v3126 = vadd.f32 %v3094, %v3110
    %v3127 = vadd.f32 %v3095, %v3111
    %v3128 = vadd.f32 %v3096, %v3112
    %v3129 = vadd.f32 %v3097, %v3113
    %v3130 = vadd.f32 %v3098, %v3114
    %v3131 = vadd.f32 %v3099, %v3115
    %v3132 = vadd.f32 %v3100, %v3116
    %v3133 = vadd.f32 %v3101, %v3117
    %v3134 = vadd.f32 %v3102, %v3118
    %v3135 = vadd.f32 %v3103, %v3119
    %v3136 = vadd.f32 %v3104, %v3120
    %v3137 = vadd.f32 %v3105, %v3121
    %v3138 = vadd.f32 %v3106, %v3122
    %v3139 = vadd.f32 %v3107, %v3123
    %v3140 = vmul.f32 %v1894, %v3076
    %v3141 = vmul.f32 %v1894, %v3077
    %v3142 = vmul.f32 %v1894, %v3078
    %v3143 = vmul.f32 %v1894, %v3079
    %v3144 = vmul.f32 %v1898, %v3080
    %v3145 = vmul.f32 %v1898, %v3081
    %v3146 = vmul.f32 %v1898, %v3082
    %v3147 = vmul.f32 %v1898, %v3083
    %v3148 = vmul.f32 %v1902, %v3084
    %v3149 = vmul.f32 %v1902, %v3085
    %v3150 = vmul.f32 %v1902, %v3086
    %v3151 = vmul.f32 %v1902, %v3087
    %v3152 = vmul.f32 %v1906, %v3088
    %v3153 = vmul.f32 %v1906, %v3089
    %v3154 = vmul.f32 %v1906, %v3090
    %v3155 = vmul.f32 %v1906, %v3091
    %v3156 = vadd.f32 %v3124, %v3140
    %v3157 = vadd.f32 %v3125, %v3141
    %v3158 = vadd.f32 %v3126, %v3142
    %v3159 = vadd.f32 %v3127, %v3143
    %v3160 = vadd.f32 %v3128, %v3144
    %v3161 = vadd.f32 %v3129, %v3145
    %v3162 = vadd.f32 %v3130, %v3146
    %v3163 = vadd.f32 %v3131, %v3147
    %v3164 = vadd.f32 %v3132, %v3148
    %v3165 = vadd.f32 %v3133, %v3149
    %v3166 = vadd.f32 %v3134, %v3150
    %v3167 = vadd.f32 %v3135, %v3151
    %v3168 = vadd.f32 %v3136, %v3152
    %v3169 = vadd.f32 %v3137, %v3153
    %v3170 = vadd.f32 %v3138, %v3154
    %v3171 = vadd.f32 %v3139, %v3155
    %v3172 = vadd.f32 %v3156, %v1942
    %v3173 = vadd.f32 %v3157, %v1942
    %v3174 = vadd.f32 %v3158, %v1942
    %v3175 = vadd.f32 %v3159, %v1942
    %v3176 = vadd.f32 %v3160, %v1946
    %v3177 = vadd.f32 %v3161, %v1946
    %v3178 = vadd.f32 %v3162, %v1946
    %v3179 = vadd.f32 %v3163, %v1946
    %v3180 = vadd.f32 %v3164, %v1950
    %v3181 = vadd.f32 %v3165, %v1950
    %v3182 = vadd.f32 %v3166, %v1950
    %v3183 = vadd.f32 %v3167, %v1950
    %v3184 = vadd.f32 %v3168, %v1954
    %v3185 = vadd.f32 %v3169, %v1954
    %v3186 = vadd.f32 %v3170, %v1954
    %v3187 = vadd.f32 %v3171, %v1954
    %v3188 = vadd.f32 %v1956, %v3172
    %v3189 = vadd.f32 %v1957, %v3173
    %v3190 = vadd.f32 %v1958, %v3174
    %v3191 = vadd.f32 %v1959, %v3175
    %v3192 = vadd.f32 %v1960, %v3176
    %v3193 = vadd.f32 %v1961, %v3177
    %v3194 = vadd.f32 %v1962, %v3178
    %v3195 = vadd.f32 %v1963, %v3179
    %v3196 = vadd.f32 %v1964, %v3180
    %v3197 = vadd.f32 %v1965, %v3181
    %v3198 = vadd.f32 %v1966, %v3182
    %v3199 = vadd.f32 %v1967, %v3183
    %v3200 = vadd.f32 %v1968, %v3184
    %v3201 = vadd.f32 %v1969, %v3185
    %v3202 = vadd.f32 %v1970, %v3186
    %v3203 = vadd.f32 %v1971, %v3187
    %vm3204 = vcmp.gt.f32.partialorder %v3188, 0.0
    %vm3205 = vcmp.gt.f32.partialorder %v3189, 0.0
    %vm3206 = vcmp.gt.f32.partialorder %v3190, 0.0
    %vm3207 = vcmp.gt.f32.partialorder %v3191, 0.0
    %vm3208 = vcmp.gt.f32.partialorder %v3192, 0.0
    %vm3209 = vcmp.gt.f32.partialorder %v3193, 0.0
    %vm3210 = vcmp.gt.f32.partialorder %v3194, 0.0
    %vm3211 = vcmp.gt.f32.partialorder %v3195, 0.0
    %vm3212 = vcmp.gt.f32.partialorder %v3196, 0.0
    %vm3213 = vcmp.gt.f32.partialorder %v3197, 0.0
    %vm3214 = vcmp.gt.f32.partialorder %v3198, 0.0
    %vm3215 = vcmp.gt.f32.partialorder %v3199, 0.0
    %vm3216 = vcmp.gt.f32.partialorder %v3200, 0.0
    %vm3217 = vcmp.gt.f32.partialorder %v3201, 0.0
    %vm3218 = vcmp.gt.f32.partialorder %v3202, 0.0
    %vm3219 = vcmp.gt.f32.partialorder %v3203, 0.0
    %vm3220 = vcmp.lt.f32.partialorder %v3188, 0.0
    %vm3221 = vcmp.lt.f32.partialorder %v3189, 0.0
    %vm3222 = vcmp.lt.f32.partialorder %v3190, 0.0
    %vm3223 = vcmp.lt.f32.partialorder %v3191, 0.0
    %vm3224 = vcmp.lt.f32.partialorder %v3192, 0.0
    %vm3225 = vcmp.lt.f32.partialorder %v3193, 0.0
    %vm3226 = vcmp.lt.f32.partialorder %v3194, 0.0
    %vm3227 = vcmp.lt.f32.partialorder %v3195, 0.0
    %vm3228 = vcmp.lt.f32.partialorder %v3196, 0.0
    %vm3229 = vcmp.lt.f32.partialorder %v3197, 0.0
    %vm3230 = vcmp.lt.f32.partialorder %v3198, 0.0
    %vm3231 = vcmp.lt.f32.partialorder %v3199, 0.0
    %vm3232 = vcmp.lt.f32.partialorder %v3200, 0.0
    %vm3233 = vcmp.lt.f32.partialorder %v3201, 0.0
    %vm3234 = vcmp.lt.f32.partialorder %v3202, 0.0
    %vm3235 = vcmp.lt.f32.partialorder %v3203, 0.0
    %v3236 = vsel %vm3220, 1.0, 0.0
    %v3237 = vsel %vm3221, 1.0, 0.0
    %v3238 = vsel %vm3222, 1.0, 0.0
    %v3239 = vsel %vm3223, 1.0, 0.0
    %v3240 = vsel %vm3224, 1.0, 0.0
    %v3241 = vsel %vm3225, 1.0, 0.0
    %v3242 = vsel %vm3226, 1.0, 0.0
    %v3243 = vsel %vm3227, 1.0, 0.0
    %v3244 = vsel %vm3228, 1.0, 0.0
    %v3245 = vsel %vm3229, 1.0, 0.0
    %v3246 = vsel %vm3230, 1.0, 0.0
    %v3247 = vsel %vm3231, 1.0, 0.0
    %v3248 = vsel %vm3232, 1.0, 0.0
    %v3249 = vsel %vm3233, 1.0, 0.0
    %v3250 = vsel %vm3234, 1.0, 0.0
    %v3251 = vsel %vm3235, 1.0, 0.0
    %v3252 = vsel %vm3204, -1.0, %v3236
    %v3253 = vsel %vm3205, -1.0, %v3237
    %v3254 = vsel %vm3206, -1.0, %v3238
    %v3255 = vsel %vm3207, -1.0, %v3239
    %v3256 = vsel %vm3208, -1.0, %v3240
    %v3257 = vsel %vm3209, -1.0, %v3241
    %v3258 = vsel %vm3210, -1.0, %v3242
    %v3259 = vsel %vm3211, -1.0, %v3243
    %v3260 = vsel %vm3212, -1.0, %v3244
    %v3261 = vsel %vm3213, -1.0, %v3245
    %v3262 = vsel %vm3214, -1.0, %v3246
    %v3263 = vsel %vm3215, -1.0, %v3247
    %v3264 = vsel %vm3216, -1.0, %v3248
    %v3265 = vsel %vm3217, -1.0, %v3249
    %v3266 = vsel %vm3218, -1.0, %v3250
    %v3267 = vsel %vm3219, -1.0, %v3251
    %v3268 = vmul.f32 %v3252, %v3172
    %v3269 = vmul.f32 %v3253, %v3173
    %v3270 = vmul.f32 %v3254, %v3174
    %v3271 = vmul.f32 %v3255, %v3175
    %v3272 = vmul.f32 %v3256, %v3176
    %v3273 = vmul.f32 %v3257, %v3177
    %v3274 = vmul.f32 %v3258, %v3178
    %v3275 = vmul.f32 %v3259, %v3179
    %v3276 = vmul.f32 %v3260, %v3180
    %v3277 = vmul.f32 %v3261, %v3181
    %v3278 = vmul.f32 %v3262, %v3182
    %v3279 = vmul.f32 %v3263, %v3183
    %v3280 = vmul.f32 %v3264, %v3184
    %v3281 = vmul.f32 %v3265, %v3185
    %v3282 = vmul.f32 %v3266, %v3186
    %v3283 = vmul.f32 %v3267, %v3187
    %v3284 = vmul.f32 %v3268, 0.5
    %v3285 = vmul.f32 %v3269, 0.5
    %v3286 = vmul.f32 %v3270, 0.5
    %v3287 = vmul.f32 %v3271, 0.5
    %v3288 = vmul.f32 %v3272, 0.5
    %v3289 = vmul.f32 %v3273, 0.5
    %v3290 = vmul.f32 %v3274, 0.5
    %v3291 = vmul.f32 %v3275, 0.5
    %v3292 = vmul.f32 %v3276, 0.5
    %v3293 = vmul.f32 %v3277, 0.5
    %v3294 = vmul.f32 %v3278, 0.5
    %v3295 = vmul.f32 %v3279, 0.5
    %v3296 = vmul.f32 %v3280, 0.5
    %v3297 = vmul.f32 %v3281, 0.5
    %v3298 = vmul.f32 %v3282, 0.5
    %v3299 = vmul.f32 %v3283, 0.5
    %v3300 = vtanh.pop %v3284
    %v3301 = vtanh.pop %v3285
    %v3302 = vtanh.pop %v3286
    %v3303 = vtanh.pop %v3287
    %v3304 = vtanh.pop %v3288
    %v3305 = vtanh.pop %v3289
    %v3306 = vtanh.pop %v3290
    %v3307 = vtanh.pop %v3291
    %v3308 = vtanh.pop %v3292
    %v3309 = vtanh.pop %v3293
    %v3310 = vtanh.pop %v3294
    %v3311 = vtanh.pop %v3295
    %v3312 = vtanh.pop %v3296
    %v3313 = vtanh.pop %v3297
    %v3314 = vtanh.pop %v3298
    %v3315 = vtanh.pop %v3299
    %v3316 = vadd.f32 %v3300, 1.0
    %v3317 = vadd.f32 %v3301, 1.0
    %v3318 = vadd.f32 %v3302, 1.0
    %v3319 = vadd.f32 %v3303, 1.0
    %v3320 = vadd.f32 %v3304, 1.0
    %v3321 = vadd.f32 %v3305, 1.0
    %v3322 = vadd.f32 %v3306, 1.0
    %v3323 = vadd.f32 %v3307, 1.0
    %v3324 = vadd.f32 %v3308, 1.0
    %v3325 = vadd.f32 %v3309, 1.0
    %v3326 = vadd.f32 %v3310, 1.0
    %v3327 = vadd.f32 %v3311, 1.0
    %v3328 = vadd.f32 %v3312, 1.0
    %v3329 = vadd.f32 %v3313, 1.0
    %v3330 = vadd.f32 %v3314, 1.0
    %v3331 = vadd.f32 %v3315, 1.0
    %v3332 = vmul.f32 %v3316, 0.5
    %v3333 = vmul.f32 %v3317, 0.5
    %v3334 = vmul.f32 %v3318, 0.5
    %v3335 = vmul.f32 %v3319, 0.5
    %v3336 = vmul.f32 %v3320, 0.5
    %v3337 = vmul.f32 %v3321, 0.5
    %v3338 = vmul.f32 %v3322, 0.5
    %v3339 = vmul.f32 %v3323, 0.5
    %v3340 = vmul.f32 %v3324, 0.5
    %v3341 = vmul.f32 %v3325, 0.5
    %v3342 = vmul.f32 %v3326, 0.5
    %v3343 = vmul.f32 %v3327, 0.5
    %v3344 = vmul.f32 %v3328, 0.5
    %v3345 = vmul.f32 %v3329, 0.5
    %v3346 = vmul.f32 %v3330, 0.5
    %v3347 = vmul.f32 %v3331, 0.5
    %v3348 = vmul.f32 %v3252, %v1956
    %v3349 = vmul.f32 %v3253, %v1957
    %v3350 = vmul.f32 %v3254, %v1958
    %v3351 = vmul.f32 %v3255, %v1959
    %v3352 = vmul.f32 %v3256, %v1960
    %v3353 = vmul.f32 %v3257, %v1961
    %v3354 = vmul.f32 %v3258, %v1962
    %v3355 = vmul.f32 %v3259, %v1963
    %v3356 = vmul.f32 %v3260, %v1964
    %v3357 = vmul.f32 %v3261, %v1965
    %v3358 = vmul.f32 %v3262, %v1966
    %v3359 = vmul.f32 %v3263, %v1967
    %v3360 = vmul.f32 %v3264, %v1968
    %v3361 = vmul.f32 %v3265, %v1969
    %v3362 = vmul.f32 %v3266, %v1970
    %v3363 = vmul.f32 %v3267, %v1971
    %v3364 = vmul.f32 %v3348, 0.5
    %v3365 = vmul.f32 %v3349, 0.5
    %v3366 = vmul.f32 %v3350, 0.5
    %v3367 = vmul.f32 %v3351, 0.5
    %v3368 = vmul.f32 %v3352, 0.5
    %v3369 = vmul.f32 %v3353, 0.5
    %v3370 = vmul.f32 %v3354, 0.5
    %v3371 = vmul.f32 %v3355, 0.5
    %v3372 = vmul.f32 %v3356, 0.5
    %v3373 = vmul.f32 %v3357, 0.5
    %v3374 = vmul.f32 %v3358, 0.5
    %v3375 = vmul.f32 %v3359, 0.5
    %v3376 = vmul.f32 %v3360, 0.5
    %v3377 = vmul.f32 %v3361, 0.5
    %v3378 = vmul.f32 %v3362, 0.5
    %v3379 = vmul.f32 %v3363, 0.5
    %v3380 = vtanh.pop %v3364
    %v3381 = vtanh.pop %v3365
    %v3382 = vtanh.pop %v3366
    %v3383 = vtanh.pop %v3367
    %v3384 = vtanh.pop %v3368
    %v3385 = vtanh.pop %v3369
    %v3386 = vtanh.pop %v3370
    %v3387 = vtanh.pop %v3371
    %v3388 = vtanh.pop %v3372
    %v3389 = vtanh.pop %v3373
    %v3390 = vtanh.pop %v3374
    %v3391 = vtanh.pop %v3375
    %v3392 = vtanh.pop %v3376
    %v3393 = vtanh.pop %v3377
    %v3394 = vtanh.pop %v3378
    %v3395 = vtanh.pop %v3379
    %v3396 = vadd.f32 %v3380, 1.0
    %v3397 = vadd.f32 %v3381, 1.0
    %v3398 = vadd.f32 %v3382, 1.0
    %v3399 = vadd.f32 %v3383, 1.0
    %v3400 = vadd.f32 %v3384, 1.0
    %v3401 = vadd.f32 %v3385, 1.0
    %v3402 = vadd.f32 %v3386, 1.0
    %v3403 = vadd.f32 %v3387, 1.0
    %v3404 = vadd.f32 %v3388, 1.0
    %v3405 = vadd.f32 %v3389, 1.0
    %v3406 = vadd.f32 %v3390, 1.0
    %v3407 = vadd.f32 %v3391, 1.0
    %v3408 = vadd.f32 %v3392, 1.0
    %v3409 = vadd.f32 %v3393, 1.0
    %v3410 = vadd.f32 %v3394, 1.0
    %v3411 = vadd.f32 %v3395, 1.0
    %v3412 = vmul.f32 %v3396, 0.5
    %v3413 = vmul.f32 %v3397, 0.5
    %v3414 = vmul.f32 %v3398, 0.5
    %v3415 = vmul.f32 %v3399, 0.5
    %v3416 = vmul.f32 %v3400, 0.5
    %v3417 = vmul.f32 %v3401, 0.5
    %v3418 = vmul.f32 %v3402, 0.5
    %v3419 = vmul.f32 %v3403, 0.5
    %v3420 = vmul.f32 %v3404, 0.5
    %v3421 = vmul.f32 %v3405, 0.5
    %v3422 = vmul.f32 %v3406, 0.5
    %v3423 = vmul.f32 %v3407, 0.5
    %v3424 = vmul.f32 %v3408, 0.5
    %v3425 = vmul.f32 %v3409, 0.5
    %v3426 = vmul.f32 %v3410, 0.5
    %v3427 = vmul.f32 %v3411, 0.5
    %v3428 = vsub.f32 %v3332, %v3412
    %v3429 = vsub.f32 %v3333, %v3413
    %v3430 = vsub.f32 %v3334, %v3414
    %v3431 = vsub.f32 %v3335, %v3415
    %v3432 = vsub.f32 %v3336, %v3416
    %v3433 = vsub.f32 %v3337, %v3417
    %v3434 = vsub.f32 %v3338, %v3418
    %v3435 = vsub.f32 %v3339, %v3419
    %v3436 = vsub.f32 %v3340, %v3420
    %v3437 = vsub.f32 %v3341, %v3421
    %v3438 = vsub.f32 %v3342, %v3422
    %v3439 = vsub.f32 %v3343, %v3423
    %v3440 = vsub.f32 %v3344, %v3424
    %v3441 = vsub.f32 %v3345, %v3425
    %v3442 = vsub.f32 %v3346, %v3426
    %v3443 = vsub.f32 %v3347, %v3427
    %v3444 = vand.u32 2147483647, %v3428
    %v3445 = vand.u32 2147483647, %v3429
    %v3446 = vand.u32 2147483647, %v3430
    %v3447 = vand.u32 2147483647, %v3431
    %v3448 = vand.u32 2147483647, %v3432
    %v3449 = vand.u32 2147483647, %v3433
    %v3450 = vand.u32 2147483647, %v3434
    %v3451 = vand.u32 2147483647, %v3435
    %v3452 = vand.u32 2147483647, %v3436
    %v3453 = vand.u32 2147483647, %v3437
    %v3454 = vand.u32 2147483647, %v3438
    %v3455 = vand.u32 2147483647, %v3439
    %v3456 = vand.u32 2147483647, %v3440
    %v3457 = vand.u32 2147483647, %v3441
    %v3458 = vand.u32 2147483647, %v3442
    %v3459 = vand.u32 2147483647, %v3443
    %v3460 = vmax.f32 %v3444, 1e-06
    %v3461 = vmax.f32 %v3445, 1e-06
    %v3462 = vmax.f32 %v3446, 1e-06
    %v3463 = vmax.f32 %v3447, 1e-06
    %v3464 = vmax.f32 %v3448, 1e-06
    %v3465 = vmax.f32 %v3449, 1e-06
    %v3466 = vmax.f32 %v3450, 1e-06
    %v3467 = vmax.f32 %v3451, 1e-06
    %v3468 = vmax.f32 %v3452, 1e-06
    %v3469 = vmax.f32 %v3453, 1e-06
    %v3470 = vmax.f32 %v3454, 1e-06
    %v3471 = vmax.f32 %v3455, 1e-06
    %v3472 = vmax.f32 %v3456, 1e-06
    %v3473 = vmax.f32 %v3457, 1e-06
    %v3474 = vmax.f32 %v3458, 1e-06
    %v3475 = vmax.f32 %v3459, 1e-06
    %v3476 = vlog2.pop %v3460
    %v3477 = vmul.f32 %v3476, 0.6931472
    %v3478 = vlog2.pop %v3461
    %v3479 = vmul.f32 %v3478, 0.6931472
    %v3480 = vlog2.pop %v3462
    %v3481 = vmul.f32 %v3480, 0.6931472
    %v3482 = vlog2.pop %v3463
    %v3483 = vmul.f32 %v3482, 0.6931472
    %v3484 = vlog2.pop %v3464
    %v3485 = vmul.f32 %v3484, 0.6931472
    %v3486 = vlog2.pop %v3465
    %v3487 = vmul.f32 %v3486, 0.6931472
    %v3488 = vlog2.pop %v3466
    %v3489 = vmul.f32 %v3488, 0.6931472
    %v3490 = vlog2.pop %v3467
    %v3491 = vmul.f32 %v3490, 0.6931472
    %v3492 = vlog2.pop %v3468
    %v3493 = vmul.f32 %v3492, 0.6931472
    %v3494 = vlog2.pop %v3469
    %v3495 = vmul.f32 %v3494, 0.6931472
    %v3496 = vlog2.pop %v3470
    %v3497 = vmul.f32 %v3496, 0.6931472
    %v3498 = vlog2.pop %v3471
    %v3499 = vmul.f32 %v3498, 0.6931472
    %v3500 = vlog2.pop %v3472
    %v3501 = vmul.f32 %v3500, 0.6931472
    %v3502 = vlog2.pop %v3473
    %v3503 = vmul.f32 %v3502, 0.6931472
    %v3504 = vlog2.pop %v3474
    %v3505 = vmul.f32 %v3504, 0.6931472
    %v3506 = vlog2.pop %v3475
    %v3507 = vmul.f32 %v3506, 0.6931472
    %v3508 = vmul.f32 %v3477, 1.442695
    %v3509 = vmul.f32 %v3479, 1.442695
    %v3510 = vmul.f32 %v3481, 1.442695
    %v3511 = vmul.f32 %v3483, 1.442695
    %v3512 = vmul.f32 %v3485, 1.442695
    %v3513 = vmul.f32 %v3487, 1.442695
    %v3514 = vmul.f32 %v3489, 1.442695
    %v3515 = vmul.f32 %v3491, 1.442695
    %v3516 = vmul.f32 %v3493, 1.442695
    %v3517 = vmul.f32 %v3495, 1.442695
    %v3518 = vmul.f32 %v3497, 1.442695
    %v3519 = vmul.f32 %v3499, 1.442695
    %v3520 = vmul.f32 %v3501, 1.442695
    %v3521 = vmul.f32 %v3503, 1.442695
    %v3522 = vmul.f32 %v3505, 1.442695
    %v3523 = vmul.f32 %v3507, 1.442695
    %v3524 = vsub.f32 0.0, %v3508
    %v3525 = vsub.f32 0.0, %v3509
    %v3526 = vsub.f32 0.0, %v3510
    %v3527 = vsub.f32 0.0, %v3511
    %v3528 = vsub.f32 0.0, %v3512
    %v3529 = vsub.f32 0.0, %v3513
    %v3530 = vsub.f32 0.0, %v3514
    %v3531 = vsub.f32 0.0, %v3515
    %v3532 = vsub.f32 0.0, %v3516
    %v3533 = vsub.f32 0.0, %v3517
    %v3534 = vsub.f32 0.0, %v3518
    %v3535 = vsub.f32 0.0, %v3519
    %v3536 = vsub.f32 0.0, %v3520
    %v3537 = vsub.f32 0.0, %v3521
    %v3538 = vsub.f32 0.0, %v3522
    %v3539 = vsub.f32 0.0, %v3523
    %3540 = vst [vmem:[#allocation7] sm:$0xff] %v3524
    %3541 = vst [vmem:[#allocation7 + $0x8] sm:$0xff] %v3525
    %3542 = vst [vmem:[#allocation7 + $0x10] sm:$0xff] %v3526
    %3543 = vst [vmem:[#allocation7 + $0x18] sm:$0xff] %v3527
    %3544 = vst [vmem:[#allocation7 + $0x20] sm:$0xff] %v3528
    %3545 = vst [vmem:[#allocation7 + $0x28] sm:$0xff] %v3529
    %3546 = vst [vmem:[#allocation7 + $0x30] sm:$0xff] %v3530
    %3547 = vst [vmem:[#allocation7 + $0x38] sm:$0xff] %v3531
    %3548 = vst [vmem:[#allocation7 + $0x40] sm:$0xff] %v3532
    %3549 = vst [vmem:[#allocation7 + $0x48] sm:$0xff] %v3533
    %3550 = vst [vmem:[#allocation7 + $0x50] sm:$0xff] %v3534
    %3551 = vst [vmem:[#allocation7 + $0x58] sm:$0xff] %v3535
    %3552 = vst [vmem:[#allocation7 + $0x60] sm:$0xff] %v3536
    %3553 = vst [vmem:[#allocation7 + $0x68] sm:$0xff] %v3537
    %3554 = vst [vmem:[#allocation7 + $0x70] sm:$0xff] %v3538
    %3555 = vst [vmem:[#allocation7 + $0x78] sm:$0xff] %v3539
    // Predicated region
    $region18: #{tpu_custom_call.1} parent=1 // pred_check
      _
    $region19: #{tpu_custom_call.1} parent=1 // pred_check_branch
      %3557 = sbr.rel (0) target = $region21
    $region20: #{tpu_custom_call.1} parent=1 // pred_region
      %3559 = vsyncadd [#allocation4], 0
      %s3560 = sshll.u32 [#allocation7], 4
      %s3561 = int_to_ptr.vmem [resolvable:$true] %s3560
      %s3562 = sshll.u32 %s2, 4
      %s3563 = int_to_ptr.hbm [resolvable:$true] %s3562
      %3568 = dma.vmem_to_hbm [thread:$0]  %s3561, 2048, %s3563, [#allocation4], 512, 512, 32
    $region21: #{tpu_custom_call.1} parent=1 // pred_fallthru
      _
    // Predicated region
    $region22: #{tpu_custom_call.1} parent=1 // pred_check
      _
    $region23: #{tpu_custom_call.1} parent=1 // pred_check_branch
      %3570 = sbr.rel (0) target = $region25
    $region24: #{tpu_custom_call.1} parent=1 // pred_region
      %3572 = dma.done [#allocation4], 2048
    $region25: #{tpu_custom_call.1} parent=1 // pred_fallthru
      _
    %3573 = vsyncpa [#allocation3], 1
    %3574 = vsyncpa [#allocation6], 1
    %3575 = vsyncpa [#allocation4], 1

</llo_original>
